<compile_context>
chip_gen: v7x
topology: tpu7x:2x2x1
jax: 0.10.0
libtpu: 0.0.40
codegen_flags: <defaults>
</compile_context>

<pallas_src>
import math

import jax
import jax.numpy as jnp
import numpy as np
from jax.experimental import pallas as pl
from jax.experimental.pallas import tpu as pltpu


# ----------------------------------------------------------------------------
# Wrapper-side packing helpers
# ----------------------------------------------------------------------------
def _pack_slab(parts):
    """Pack per-flow weight pieces (each (n_flow, r_j, lane), same lane width)
    into one (n_flow, R, lane) slab; every piece starts on an 8-aligned
    sublane row so in-kernel static slices stay tile-aligned."""
    padded, offsets, off = [], [], 0
    for p in parts:
        r = p.shape[1]
        r_pad = -(-r // 8) * 8
        if r_pad != r:
            p = jnp.pad(p, ((0, 0), (0, r_pad - r), (0, 0)))
        padded.append(p)
        offsets.append(off)
        off += r_pad
    return jnp.concatenate(padded, axis=1), offsets


def _vmem_padded_bytes(shape, itemsize=4):
    """Rough VMEM footprint of an f32 array after (8, 128) tile padding."""
    shape = tuple(shape)
    if len(shape) == 1:
        shape = (1,) + shape
    *lead, r, c = shape
    rp = -(-r // 8) * 8
    cp = -(-c // 128) * 128
    n = 1
    for d in lead:
        n *= d
    return n * rp * cp * itemsize


# ----------------------------------------------------------------------------
# Pallas kernel + wrapper: whole Block in one invocation, flows unrolled.
# ----------------------------------------------------------------------------
def block_forward(x, params, n_flow):
    B, C = x.shape
    assert B >= 2, "ActNorm init uses unbiased std over the batch; needs B >= 2"
    half = C // 2
    F = params['w0'].shape[-1]

    xa = x[:, :half]
    xb = x[:, half:]
    xh = jnp.stack([xa, xb], axis=0)                        # (2, B, half)

    # ---- pack per-flow weights into two lane-coherent slabs ----------------
    W = params['W']                                         # (n_flow, C, C), (in,out)
    Waa, Wab = W[:, :half, :half], W[:, :half, half:]
    Wba, Wbb = W[:, half:, :half], W[:, half:, half:]
    w2, b2 = params['w2'], params['b2']
    w2s, w2t = w2[:, :, :half], w2[:, :, half:]
    b2s, b2t = b2[:, :, :half], b2[:, :, half:]

    slab_f, offs_f = _pack_slab(
        [params['w0'], params['b0'], params['w1'], params['b1']])   # lane = F
    slab_h, offs_h = _pack_slab(
        [Waa, Wab, Wba, Wbb, w2s, w2t, b2s, b2t])                    # lane = half
    o_w0, o_b0, o_w1, o_b1 = offs_f
    o_waa, o_wab, o_wba, o_wbb, o_w2s, o_w2t, o_b2s, o_b2t = offs_h

    # ---- ZeroNN prior on zeros: zeros @ pw == 0, mean/log_sd batch-invariant
    p = params['pb'] * jnp.exp(params['pscale'] * 3.0)      # (1, 2C)
    mean1, log_sd1 = p[:, :C], p[:, C:]
    prior = jnp.concatenate(
        [mean1[:, :half], mean1[:, half:], log_sd1[:, :half], log_sd1[:, half:]],
        axis=0)                                             # (4, half)

    const_lp = -0.5 * math.log(2.0 * math.pi)
    inv_b = 1.0 / B
    inv_bm1 = 1.0 / (B - 1)                                 # unbiased std (torch default)

    def kernel(xh_ref, sf_ref, sh_ref, prior_ref, out_ref, stats_ref):
        xa_v = xh_ref[0]                                    # (B, half)
        xb_v = xh_ref[1]
        vec_ld = jnp.zeros((B, 1), jnp.float32)             # per-sample coupling logdet
        scalar_ld = jnp.float32(0.0)                        # ActNorm logdet (scalar)

        def actnorm(xv):
            # Two-pass mean/var + exact divide (numerically robust, cheap here).
            mu = jnp.sum(xv, axis=0, keepdims=True) * inv_b
            d = xv - mu
            var = jnp.sum(d * d, axis=0, keepdims=True) * inv_bm1
            denom = jnp.sqrt(var) + 1e-6
            # sum(log|scale|) == -sum(log(std + 1e-6))
            return d / denom, -jnp.sum(jnp.log(denom))

        def dot(a, b):
            return jnp.dot(a, b, preferred_element_type=jnp.float32)

        # Static unroll over flows: parity handled at trace time (no blends),
        # slab indices are static, weights stay resident in VMEM.
        for i in range(n_flow):
            xa_v, lda = actnorm(xa_v)
            xb_v, ldb = actnorm(xb_v)
            scalar_ld = scalar_ld + lda + ldb

            sf = sf_ref[i]                                  # (R_F, F)
            sh = sh_ref[i]                                  # (R_H, half)
            w0 = sf[o_w0:o_w0 + half, :]
            b0 = sf[o_b0:o_b0 + 1, :]
            w1 = sf[o_w1:o_w1 + F, :]
            b1 = sf[o_b1:o_b1 + 1, :]
            waa = sh[o_waa:o_waa + half, :]
            wab = sh[o_wab:o_wab + half, :]
            wba = sh[o_wba:o_wba + half, :]
            wbb = sh[o_wbb:o_wbb + half, :]
            w2s_ = sh[o_w2s:o_w2s + F, :]
            w2t_ = sh[o_w2t:o_w2t + F, :]
            b2s_ = sh[o_b2s:o_b2s + 1, :]
            b2t_ = sh[o_b2t:o_b2t + 1, :]

            # Invertible 1x1 "conv": dense CxC matmul in 2x2 block form.
            # (Kept as 4 small matmuls to avoid a lane-dim concat; matmul
            #  micro-opts are irrelevant at B=2, C=4 per the review.)
            ya = dot(xa_v, waa) + dot(xb_v, wba)
            yb = dot(xa_v, wab) + dot(xb_v, wbb)

            # Affine coupling; parity swap resolved statically.
            if i % 2 == 1:
                in_a, in_b = yb, ya
            else:
                in_a, in_b = ya, yb

            h = dot(in_a, w0) + b0
            h = jnp.where(h > 0, h, 0.01 * h)               # LeakyReLU(0.01)
            h = dot(h, w1) + b1
            h = jnp.where(h > 0, h, 0.01 * h)
            log_s = dot(h, w2s_) + b2s_
            t = dot(h, w2t_) + b2t_

            # log(sigmoid(z)) computed stably; s = exp(ls).
            z = log_s + 2.0
            ls = jnp.minimum(z, 0.0) - jnp.log(1.0 + jnp.exp(-jnp.abs(z)))
            s = jnp.exp(ls)
            out_b = (in_b + t) * s
            vec_ld = vec_ld + jnp.sum(ls, axis=1, keepdims=True)

            if i % 2 == 1:
                xa_v, xb_v = out_b, in_a
            else:
                xa_v, xb_v = in_a, out_b

        # Prior log_p (ZeroNN mean/log_sd are batch-invariant, computed in
        # the wrapper; zeros @ pw matmul removed).
        mean_a = prior_ref[0:1, :]
        mean_b = prior_ref[1:2, :]
        lsd_a = prior_ref[2:3, :]
        lsd_b = prior_ref[3:4, :]
        lp_a = const_lp - lsd_a - 0.5 * (xa_v - mean_a) ** 2 * jnp.exp(-2.0 * lsd_a)
        lp_b = const_lp - lsd_b - 0.5 * (xb_v - mean_b) ** 2 * jnp.exp(-2.0 * lsd_b)
        log_p = (jnp.sum(lp_a, axis=1, keepdims=True)
                 + jnp.sum(lp_b, axis=1, keepdims=True))    # (B, 1)

        out_ref[0] = xa_v
        out_ref[1] = xb_v
        stats_ref[...] = jnp.concatenate([vec_ld + scalar_ld, log_p], axis=1)

    # ---- explicit VMEM budget (lane-padded) ---------------------------------
    resident = (xh.shape, slab_f.shape, slab_h.shape, prior.shape,
                (2, B, half), (B, 2))
    total = sum(_vmem_padded_bytes(s) for s in resident)
    vmem_limit = int(min(64 << 20, max(8 << 20, 4 * total)))

    out_halves, stats = pl.pallas_call(
        kernel,
        out_shape=(jax.ShapeDtypeStruct((2, B, half), jnp.float32),
                   jax.ShapeDtypeStruct((B, 2), jnp.float32)),
        compiler_params=pltpu.CompilerParams(vmem_limit_bytes=vmem_limit),
    )(xh, slab_f, slab_h, prior)

    out = jnp.concatenate([out_halves[0], out_halves[1]], axis=1)
    # invconv logdet is a data-independent constant per flow -> add once here.
    logdet = stats[:, 0] + jnp.sum(params['inv_logdet'])
    log_p = stats[:, 1]
    mean = jnp.broadcast_to(mean1, (B, C))
    log_sd = jnp.broadcast_to(log_sd1, (B, C))
    return out, logdet, log_p, mean, log_sd


# ----------------------------------------------------------------------------
# Deterministic parameter setup (plain-JAX glue; mirrors the torch __init__).
# ----------------------------------------------------------------------------
def init_params(key, in_channel, n_flow, mlp_dim):
    C, F = in_channel, mlp_dim
    W_l, invdet_l, w0_l, b0_l, w1_l, b1_l, w2_l, b2_l = ([] for _ in range(8))
    k = key
    for _ in range(n_flow):
        k, k_q, k_w0, k_w1, k_w2, k_b2 = jax.random.split(k, 6)
        # Invertible1x1Conv: orthogonal Q -> LU pieces -> reassembled W (= Q at init)
        Q, _ = jnp.linalg.qr(jax.random.normal(k_q, (C, C), jnp.float32))
        P, L, U = jax.scipy.linalg.lu(Q)
        S = jnp.diag(U)
        W = P @ (jnp.tril(L, -1) + jnp.eye(C)) @ (jnp.triu(U, 1) + jnp.diag(S))
        W_l.append(W)
        invdet_l.append(jnp.sum(jnp.log(jnp.abs(S))))
        # AffineCoupling MLP: first two layers N(0, 0.05) / zero bias; last layer
        # small uniform (stand-in for torch's default Linear init). Stored (in, out).
        w0_l.append(0.05 * jax.random.normal(k_w0, (C // 2, F), jnp.float32))
        b0_l.append(jnp.zeros((1, F), jnp.float32))
        w1_l.append(0.05 * jax.random.normal(k_w1, (F, F), jnp.float32))
        b1_l.append(jnp.zeros((1, F), jnp.float32))
        bound = 1.0 / math.sqrt(F)
        w2_l.append(jax.random.uniform(k_w2, (F, C), jnp.float32, -bound, bound))
        b2_l.append(jax.random.uniform(k_b2, (1, C), jnp.float32, -bound, bound))
    return dict(
        W=jnp.stack(W_l).astype(jnp.float32),
        inv_logdet=jnp.stack(invdet_l).astype(jnp.float32),
        w0=jnp.stack(w0_l), b0=jnp.stack(b0_l),
        w1=jnp.stack(w1_l), b1=jnp.stack(b1_l),
        w2=jnp.stack(w2_l), b2=jnp.stack(b2_l),
        pw=jnp.zeros((C, 2 * C), jnp.float32),     # ZeroNN weight (unused: 0 @ W == 0)
        pb=jnp.zeros((1, 2 * C), jnp.float32),
        pscale=jnp.zeros((1, 2 * C), jnp.float32),
    )


# ----------------------------------------------------------------------------
# Pure-JAX reference (numerical sanity check; mirrors the torch forward)
# ----------------------------------------------------------------------------
def block_forward_ref(x, params, n_flow):
    out = x
    B, C = x.shape
    half = C // 2
    scalar_ld = jnp.float32(0.0)
    vec_ld = jnp.zeros((B,), jnp.float32)
    for i in range(n_flow):
        mu = jnp.mean(out, axis=0, keepdims=True)
        std = jnp.sqrt(jnp.sum((out - mu) ** 2, axis=0, keepdims=True) / (B - 1))
        scale = 1.0 / (std + 1e-6)
        out = scale * (out - mu)
        scalar_ld = scalar_ld + jnp.sum(jnp.log(jnp.abs(scale)))
        out = out @ params['W'][i]
        scalar_ld = scalar_ld + params['inv_logdet'][i]
        in_a, in_b = out[:, :half], out[:, half:]
        if i % 2 == 1:
            in_a, in_b = in_b, in_a
        h = jax.nn.leaky_relu(in_a @ params['w0'][i] + params['b0'][i], 0.01)
        h = jax.nn.leaky_relu(h @ params['w1'][i] + params['b1'][i], 0.01)
        net = h @ params['w2'][i] + params['b2'][i]
        log_s, t = net[:, :half], net[:, half:]
        s = jax.nn.sigmoid(log_s + 2.0)
        out_b = (in_b + t) * s
        vec_ld = vec_ld + jnp.sum(jnp.log(s), axis=1)
        out = jnp.concatenate([out_b, in_a] if i % 2 == 1 else [in_a, out_b], axis=1)
    zero = jnp.zeros_like(out)
    p = (zero @ params['pw'] + params['pb']) * jnp.exp(params['pscale'] * 3.0)
    mean, log_sd = p[:, :C], p[:, C:]
    mean = jnp.broadcast_to(mean, (B, C))
    log_sd = jnp.broadcast_to(log_sd, (B, C))
    log_p = (-0.5 * math.log(2.0 * math.pi) - log_sd
             - 0.5 * (out - mean) ** 2 / jnp.exp(2.0 * log_sd))
    return out, scalar_ld + vec_ld, jnp.sum(log_p, axis=1), mean, log_sd


# ----------------------------------------------------------------------------
if __name__ == "__main__":
    B, C, N_FLOW, MLP_DIM = 2, 4, 4, 32   # in_channel=4, n_flow=4, mlp_dim=32

    key = jax.random.PRNGKey(0)
    k_x, k_p = jax.random.split(key)
    x = jax.random.normal(k_x, (B, C), jnp.float32)
    params = init_params(k_p, C, N_FLOW, MLP_DIM)

    out, logdet, log_p, mean, log_sd = block_forward(x, params, N_FLOW)
    jax.block_until_ready((out, logdet, log_p, mean, log_sd))

    r_out, r_ld, r_lp, r_mean, r_lsd = block_forward_ref(x, params, N_FLOW)
    np.testing.assert_allclose(np.asarray(out), np.asarray(r_out), rtol=5e-3, atol=5e-3)
    np.testing.assert_allclose(np.asarray(logdet), np.asarray(r_ld), rtol=5e-3, atol=5e-3)
    np.testing.assert_allclose(np.asarray(log_p), np.asarray(r_lp), rtol=5e-3, atol=5e-3)
    np.testing.assert_allclose(np.asarray(mean), np.asarray(r_mean), rtol=5e-3, atol=5e-3)
    np.testing.assert_allclose(np.asarray(log_sd), np.asarray(r_lsd), rtol=5e-3, atol=5e-3)

    print("KERNEL_OK")
</pallas_src>

<mosaic_0001>
module attributes {stable_mosaic.version = 11 : i64} {
  func.func @kernel(%arg0: memref<2x2x2xf32, #tpu.memory_space<vmem>>, %arg1: memref<4x56x32xf32, #tpu.memory_space<vmem>>, %arg2: memref<4x112x2xf32, #tpu.memory_space<vmem>>, %arg3: memref<4x2xf32, #tpu.memory_space<vmem>>, %arg4: memref<2x2x2xf32, #tpu.memory_space<vmem>>, %arg5: memref<2x2xf32, #tpu.memory_space<vmem>>) attributes {dimension_semantics = [], scalar_prefetch = 0 : i64, scratch_operands = 0 : i64, tpu.core_type = #tpu.core_type<tc>} {
    %c0 = arith.constant 0 : index
    %c0_0 = arith.constant 0 : index
    %c0_1 = arith.constant 0 : index
    %0 = vector.load %arg0[%c0, %c0_0, %c0_1] : memref<2x2x2xf32, #tpu.memory_space<vmem>>, vector<1x2x2xf32>
    %1 = vector.shape_cast %0 : vector<1x2x2xf32> to vector<2x2xf32>
    %c1 = arith.constant 1 : index
    %c0_2 = arith.constant 0 : index
    %c0_3 = arith.constant 0 : index
    %2 = vector.load %arg0[%c1, %c0_2, %c0_3] : memref<2x2x2xf32, #tpu.memory_space<vmem>>, vector<1x2x2xf32>
    %3 = vector.shape_cast %2 : vector<1x2x2xf32> to vector<2x2xf32>
    %cst = arith.constant 0.000000e+00 : f32
    %4 = vector.broadcast %cst : f32 to vector<2x1xf32>
    %cst_4 = arith.constant dense<0.000000e+00> : vector<2xf32>
    %5 = vector.multi_reduction <add>, %1, %cst_4 [0] : vector<2x2xf32> to vector<2xf32>
    %6 = vector.shape_cast %5 : vector<2xf32> to vector<1x2xf32>
    %cst_5 = arith.constant 5.000000e-01 : f32
    %7 = vector.broadcast %cst_5 : f32 to vector<1x2xf32>
    %8 = arith.mulf %6, %7 : vector<1x2xf32>
    %9 = vector.broadcast %8 : vector<1x2xf32> to vector<2x2xf32>
    %10 = arith.subf %1, %9 : vector<2x2xf32>
    %11 = arith.mulf %10, %10 : vector<2x2xf32>
    %cst_6 = arith.constant dense<0.000000e+00> : vector<2xf32>
    %12 = vector.multi_reduction <add>, %11, %cst_6 [0] : vector<2x2xf32> to vector<2xf32>
    %13 = vector.shape_cast %12 : vector<2xf32> to vector<1x2xf32>
    %cst_7 = arith.constant 1.000000e+00 : f32
    %14 = vector.broadcast %cst_7 : f32 to vector<1x2xf32>
    %15 = arith.mulf %13, %14 : vector<1x2xf32>
    %16 = math.sqrt %15 : vector<1x2xf32>
    %cst_8 = arith.constant 9.99999997E-7 : f32
    %17 = vector.broadcast %cst_8 : f32 to vector<1x2xf32>
    %18 = arith.addf %16, %17 : vector<1x2xf32>
    %19 = vector.broadcast %18 : vector<1x2xf32> to vector<2x2xf32>
    %20 = arith.divf %10, %19 : vector<2x2xf32>
    %21 = math.log %18 : vector<1x2xf32>
    %22 = vector.shape_cast %21 : vector<1x2xf32> to vector<1x1x2xf32>
    %cst_9 = arith.constant dense<0.000000e+00> : vector<1xf32>
    %23 = vector.multi_reduction <add>, %22, %cst_9 [1, 2] : vector<1x1x2xf32> to vector<1xf32>
    %24 = vector.shape_cast %23 : vector<1xf32> to vector<1x1x1xf32>
    %25 = vector.extract %24[0, 0, 0] : f32 from vector<1x1x1xf32>
    %cst_10 = arith.constant 0.000000e+00 : f32
    %26 = arith.subf %cst_10, %25 : f32
    %cst_11 = arith.constant dense<0.000000e+00> : vector<2xf32>
    %27 = vector.multi_reduction <add>, %3, %cst_11 [0] : vector<2x2xf32> to vector<2xf32>
    %28 = vector.shape_cast %27 : vector<2xf32> to vector<1x2xf32>
    %cst_12 = arith.constant 5.000000e-01 : f32
    %29 = vector.broadcast %cst_12 : f32 to vector<1x2xf32>
    %30 = arith.mulf %28, %29 : vector<1x2xf32>
    %31 = vector.broadcast %30 : vector<1x2xf32> to vector<2x2xf32>
    %32 = arith.subf %3, %31 : vector<2x2xf32>
    %33 = arith.mulf %32, %32 : vector<2x2xf32>
    %cst_13 = arith.constant dense<0.000000e+00> : vector<2xf32>
    %34 = vector.multi_reduction <add>, %33, %cst_13 [0] : vector<2x2xf32> to vector<2xf32>
    %35 = vector.shape_cast %34 : vector<2xf32> to vector<1x2xf32>
    %cst_14 = arith.constant 1.000000e+00 : f32
    %36 = vector.broadcast %cst_14 : f32 to vector<1x2xf32>
    %37 = arith.mulf %35, %36 : vector<1x2xf32>
    %38 = math.sqrt %37 : vector<1x2xf32>
    %cst_15 = arith.constant 9.99999997E-7 : f32
    %39 = vector.broadcast %cst_15 : f32 to vector<1x2xf32>
    %40 = arith.addf %38, %39 : vector<1x2xf32>
    %41 = vector.broadcast %40 : vector<1x2xf32> to vector<2x2xf32>
    %42 = arith.divf %32, %41 : vector<2x2xf32>
    %43 = math.log %40 : vector<1x2xf32>
    %44 = vector.shape_cast %43 : vector<1x2xf32> to vector<1x1x2xf32>
    %cst_16 = arith.constant dense<0.000000e+00> : vector<1xf32>
    %45 = vector.multi_reduction <add>, %44, %cst_16 [1, 2] : vector<1x1x2xf32> to vector<1xf32>
    %46 = vector.shape_cast %45 : vector<1xf32> to vector<1x1x1xf32>
    %47 = vector.extract %46[0, 0, 0] : f32 from vector<1x1x1xf32>
    %cst_17 = arith.constant 0.000000e+00 : f32
    %48 = arith.subf %cst_17, %47 : f32
    %cst_18 = arith.constant 0.000000e+00 : f32
    %49 = arith.addf %cst_18, %26 : f32
    %50 = arith.addf %49, %48 : f32
    %c0_19 = arith.constant 0 : index
    %c0_20 = arith.constant 0 : index
    %c0_21 = arith.constant 0 : index
    %51 = vector.load %arg1[%c0_19, %c0_20, %c0_21] : memref<4x56x32xf32, #tpu.memory_space<vmem>>, vector<1x56x32xf32>
    %52 = vector.shape_cast %51 : vector<1x56x32xf32> to vector<56x32xf32>
    %c0_22 = arith.constant 0 : index
    %c0_23 = arith.constant 0 : index
    %c0_24 = arith.constant 0 : index
    %53 = vector.load %arg2[%c0_22, %c0_23, %c0_24] : memref<4x112x2xf32, #tpu.memory_space<vmem>>, vector<1x112x2xf32>
    %54 = vector.shape_cast %53 : vector<1x112x2xf32> to vector<112x2xf32>
    %55 = vector.extract_strided_slice %52 {offsets = [0, 0], sizes = [2, 32], strides = [1, 1]} : vector<56x32xf32> to vector<2x32xf32>
    %56 = vector.extract_strided_slice %52 {offsets = [8, 0], sizes = [1, 32], strides = [1, 1]} : vector<56x32xf32> to vector<1x32xf32>
    %57 = vector.extract_strided_slice %52 {offsets = [16, 0], sizes = [32, 32], strides = [1, 1]} : vector<56x32xf32> to vector<32x32xf32>
    %58 = vector.extract_strided_slice %52 {offsets = [48, 0], sizes = [1, 32], strides = [1, 1]} : vector<56x32xf32> to vector<1x32xf32>
    %59 = vector.extract_strided_slice %54 {offsets = [0, 0], sizes = [2, 2], strides = [1, 1]} : vector<112x2xf32> to vector<2x2xf32>
    %60 = vector.extract_strided_slice %54 {offsets = [8, 0], sizes = [2, 2], strides = [1, 1]} : vector<112x2xf32> to vector<2x2xf32>
    %61 = vector.extract_strided_slice %54 {offsets = [16, 0], sizes = [2, 2], strides = [1, 1]} : vector<112x2xf32> to vector<2x2xf32>
    %62 = vector.extract_strided_slice %54 {offsets = [24, 0], sizes = [2, 2], strides = [1, 1]} : vector<112x2xf32> to vector<2x2xf32>
    %63 = vector.extract_strided_slice %54 {offsets = [32, 0], sizes = [32, 2], strides = [1, 1]} : vector<112x2xf32> to vector<32x2xf32>
    %64 = vector.extract_strided_slice %54 {offsets = [64, 0], sizes = [32, 2], strides = [1, 1]} : vector<112x2xf32> to vector<32x2xf32>
    %65 = vector.extract_strided_slice %54 {offsets = [96, 0], sizes = [1, 2], strides = [1, 1]} : vector<112x2xf32> to vector<1x2xf32>
    %66 = vector.extract_strided_slice %54 {offsets = [104, 0], sizes = [1, 2], strides = [1, 1]} : vector<112x2xf32> to vector<1x2xf32>
    %cst_25 = arith.constant dense<0.000000e+00> : vector<2x2xf32>
    %67 = tpu.matmul %20, %59, %cst_25 {dimension_numbers = #tpu.dot_dimension_numbers<[1], [0], [0], [1], [0, 0, 1, 1], [], []>} : vector<2x2xf32>, vector<2x2xf32>, vector<2x2xf32> -> vector<2x2xf32>
    %cst_26 = arith.constant dense<0.000000e+00> : vector<2x2xf32>
    %68 = tpu.matmul %42, %61, %cst_26 {dimension_numbers = #tpu.dot_dimension_numbers<[1], [0], [0], [1], [0, 0, 1, 1], [], []>} : vector<2x2xf32>, vector<2x2xf32>, vector<2x2xf32> -> vector<2x2xf32>
    %69 = arith.addf %67, %68 : vector<2x2xf32>
    %cst_27 = arith.constant dense<0.000000e+00> : vector<2x2xf32>
    %70 = tpu.matmul %20, %60, %cst_27 {dimension_numbers = #tpu.dot_dimension_numbers<[1], [0], [0], [1], [0, 0, 1, 1], [], []>} : vector<2x2xf32>, vector<2x2xf32>, vector<2x2xf32> -> vector<2x2xf32>
    %cst_28 = arith.constant dense<0.000000e+00> : vector<2x2xf32>
    %71 = tpu.matmul %42, %62, %cst_28 {dimension_numbers = #tpu.dot_dimension_numbers<[1], [0], [0], [1], [0, 0, 1, 1], [], []>} : vector<2x2xf32>, vector<2x2xf32>, vector<2x2xf32> -> vector<2x2xf32>
    %72 = arith.addf %70, %71 : vector<2x2xf32>
    %cst_29 = arith.constant dense<0.000000e+00> : vector<2x32xf32>
    %73 = tpu.matmul %69, %55, %cst_29 {dimension_numbers = #tpu.dot_dimension_numbers<[1], [0], [0], [1], [0, 0, 1, 1], [], []>} : vector<2x2xf32>, vector<2x32xf32>, vector<2x32xf32> -> vector<2x32xf32>
    %74 = vector.broadcast %56 : vector<1x32xf32> to vector<2x32xf32>
    %75 = arith.addf %73, %74 : vector<2x32xf32>
    %cst_30 = arith.constant 0.000000e+00 : f32
    %76 = vector.broadcast %cst_30 : f32 to vector<2x32xf32>
    %77 = arith.cmpf ogt, %75, %76 : vector<2x32xf32>
    %cst_31 = arith.constant 0.00999999977 : f32
    %78 = vector.broadcast %cst_31 : f32 to vector<2x32xf32>
    %79 = arith.mulf %78, %75 : vector<2x32xf32>
    %80 = arith.select %77, %75, %79 : vector<2x32xi1>, vector<2x32xf32>
    %cst_32 = arith.constant dense<0.000000e+00> : vector<2x32xf32>
    %81 = tpu.matmul %80, %57, %cst_32 {dimension_numbers = #tpu.dot_dimension_numbers<[1], [0], [0], [1], [0, 0, 1, 1], [], []>} : vector<2x32xf32>, vector<32x32xf32>, vector<2x32xf32> -> vector<2x32xf32>
    %82 = vector.broadcast %58 : vector<1x32xf32> to vector<2x32xf32>
    %83 = arith.addf %81, %82 : vector<2x32xf32>
    %cst_33 = arith.constant 0.000000e+00 : f32
    %84 = vector.broadcast %cst_33 : f32 to vector<2x32xf32>
    %85 = arith.cmpf ogt, %83, %84 : vector<2x32xf32>
    %cst_34 = arith.constant 0.00999999977 : f32
    %86 = vector.broadcast %cst_34 : f32 to vector<2x32xf32>
    %87 = arith.mulf %86, %83 : vector<2x32xf32>
    %88 = arith.select %85, %83, %87 : vector<2x32xi1>, vector<2x32xf32>
    %cst_35 = arith.constant dense<0.000000e+00> : vector<2x2xf32>
    %89 = tpu.matmul %88, %63, %cst_35 {dimension_numbers = #tpu.dot_dimension_numbers<[1], [0], [0], [1], [0, 0, 1, 1], [], []>} : vector<2x32xf32>, vector<32x2xf32>, vector<2x2xf32> -> vector<2x2xf32>
    %90 = vector.broadcast %65 : vector<1x2xf32> to vector<2x2xf32>
    %91 = arith.addf %89, %90 : vector<2x2xf32>
    %cst_36 = arith.constant dense<0.000000e+00> : vector<2x2xf32>
    %92 = tpu.matmul %88, %64, %cst_36 {dimension_numbers = #tpu.dot_dimension_numbers<[1], [0], [0], [1], [0, 0, 1, 1], [], []>} : vector<2x32xf32>, vector<32x2xf32>, vector<2x2xf32> -> vector<2x2xf32>
    %93 = vector.broadcast %66 : vector<1x2xf32> to vector<2x2xf32>
    %94 = arith.addf %92, %93 : vector<2x2xf32>
    %cst_37 = arith.constant 2.000000e+00 : f32
    %95 = vector.broadcast %cst_37 : f32 to vector<2x2xf32>
    %96 = arith.addf %91, %95 : vector<2x2xf32>
    %cst_38 = arith.constant 0.000000e+00 : f32
    %97 = vector.broadcast %cst_38 : f32 to vector<2x2xf32>
    %98 = arith.minimumf %96, %97 : vector<2x2xf32>
    %99 = math.absf %96 : vector<2x2xf32>
    %cst_39 = arith.constant 0.000000e+00 : f32
    %100 = vector.broadcast %cst_39 : f32 to vector<2x2xf32>
    %101 = arith.subf %100, %99 : vector<2x2xf32>
    %102 = math.exp %101 : vector<2x2xf32>
    %cst_40 = arith.constant 1.000000e+00 : f32
    %103 = vector.broadcast %cst_40 : f32 to vector<2x2xf32>
    %104 = arith.addf %103, %102 : vector<2x2xf32>
    %105 = math.log %104 : vector<2x2xf32>
    %106 = arith.subf %98, %105 : vector<2x2xf32>
    %107 = math.exp %106 : vector<2x2xf32>
    %108 = arith.addf %72, %94 : vector<2x2xf32>
    %109 = arith.mulf %108, %107 : vector<2x2xf32>
    %cst_41 = arith.constant dense<0.000000e+00> : vector<2xf32>
    %110 = vector.multi_reduction <add>, %106, %cst_41 [1] : vector<2x2xf32> to vector<2xf32>
    %111 = vector.shape_cast %110 : vector<2xf32> to vector<2x1xf32>
    %112 = arith.addf %4, %111 : vector<2x1xf32>
    %cst_42 = arith.constant dense<0.000000e+00> : vector<2xf32>
    %113 = vector.multi_reduction <add>, %69, %cst_42 [0] : vector<2x2xf32> to vector<2xf32>
    %114 = vector.shape_cast %113 : vector<2xf32> to vector<1x2xf32>
    %cst_43 = arith.constant 5.000000e-01 : f32
    %115 = vector.broadcast %cst_43 : f32 to vector<1x2xf32>
    %116 = arith.mulf %114, %115 : vector<1x2xf32>
    %117 = vector.broadcast %116 : vector<1x2xf32> to vector<2x2xf32>
    %118 = arith.subf %69, %117 : vector<2x2xf32>
    %119 = arith.mulf %118, %118 : vector<2x2xf32>
    %cst_44 = arith.constant dense<0.000000e+00> : vector<2xf32>
    %120 = vector.multi_reduction <add>, %119, %cst_44 [0] : vector<2x2xf32> to vector<2xf32>
    %121 = vector.shape_cast %120 : vector<2xf32> to vector<1x2xf32>
    %cst_45 = arith.constant 1.000000e+00 : f32
    %122 = vector.broadcast %cst_45 : f32 to vector<1x2xf32>
    %123 = arith.mulf %121, %122 : vector<1x2xf32>
    %124 = math.sqrt %123 : vector<1x2xf32>
    %cst_46 = arith.constant 9.99999997E-7 : f32
    %125 = vector.broadcast %cst_46 : f32 to vector<1x2xf32>
    %126 = arith.addf %124, %125 : vector<1x2xf32>
    %127 = vector.broadcast %126 : vector<1x2xf32> to vector<2x2xf32>
    %128 = arith.divf %118, %127 : vector<2x2xf32>
    %129 = math.log %126 : vector<1x2xf32>
    %130 = vector.shape_cast %129 : vector<1x2xf32> to vector<1x1x2xf32>
    %cst_47 = arith.constant dense<0.000000e+00> : vector<1xf32>
    %131 = vector.multi_reduction <add>, %130, %cst_47 [1, 2] : vector<1x1x2xf32> to vector<1xf32>
    %132 = vector.shape_cast %131 : vector<1xf32> to vector<1x1x1xf32>
    %133 = vector.extract %132[0, 0, 0] : f32 from vector<1x1x1xf32>
    %cst_48 = arith.constant 0.000000e+00 : f32
    %134 = arith.subf %cst_48, %133 : f32
    %cst_49 = arith.constant dense<0.000000e+00> : vector<2xf32>
    %135 = vector.multi_reduction <add>, %109, %cst_49 [0] : vector<2x2xf32> to vector<2xf32>
    %136 = vector.shape_cast %135 : vector<2xf32> to vector<1x2xf32>
    %cst_50 = arith.constant 5.000000e-01 : f32
    %137 = vector.broadcast %cst_50 : f32 to vector<1x2xf32>
    %138 = arith.mulf %136, %137 : vector<1x2xf32>
    %139 = vector.broadcast %138 : vector<1x2xf32> to vector<2x2xf32>
    %140 = arith.subf %109, %139 : vector<2x2xf32>
    %141 = arith.mulf %140, %140 : vector<2x2xf32>
    %cst_51 = arith.constant dense<0.000000e+00> : vector<2xf32>
    %142 = vector.multi_reduction <add>, %141, %cst_51 [0] : vector<2x2xf32> to vector<2xf32>
    %143 = vector.shape_cast %142 : vector<2xf32> to vector<1x2xf32>
    %cst_52 = arith.constant 1.000000e+00 : f32
    %144 = vector.broadcast %cst_52 : f32 to vector<1x2xf32>
    %145 = arith.mulf %143, %144 : vector<1x2xf32>
    %146 = math.sqrt %145 : vector<1x2xf32>
    %cst_53 = arith.constant 9.99999997E-7 : f32
    %147 = vector.broadcast %cst_53 : f32 to vector<1x2xf32>
    %148 = arith.addf %146, %147 : vector<1x2xf32>
    %149 = vector.broadcast %148 : vector<1x2xf32> to vector<2x2xf32>
    %150 = arith.divf %140, %149 : vector<2x2xf32>
    %151 = math.log %148 : vector<1x2xf32>
    %152 = vector.shape_cast %151 : vector<1x2xf32> to vector<1x1x2xf32>
    %cst_54 = arith.constant dense<0.000000e+00> : vector<1xf32>
    %153 = vector.multi_reduction <add>, %152, %cst_54 [1, 2] : vector<1x1x2xf32> to vector<1xf32>
    %154 = vector.shape_cast %153 : vector<1xf32> to vector<1x1x1xf32>
    %155 = vector.extract %154[0, 0, 0] : f32 from vector<1x1x1xf32>
    %cst_55 = arith.constant 0.000000e+00 : f32
    %156 = arith.subf %cst_55, %155 : f32
    %157 = arith.addf %50, %134 : f32
    %158 = arith.addf %157, %156 : f32
    %c1_56 = arith.constant 1 : index
    %c0_57 = arith.constant 0 : index
    %c0_58 = arith.constant 0 : index
    %159 = vector.load %arg1[%c1_56, %c0_57, %c0_58] : memref<4x56x32xf32, #tpu.memory_space<vmem>>, vector<1x56x32xf32>
    %160 = vector.shape_cast %159 : vector<1x56x32xf32> to vector<56x32xf32>
    %c1_59 = arith.constant 1 : index
    %c0_60 = arith.constant 0 : index
    %c0_61 = arith.constant 0 : index
    %161 = vector.load %arg2[%c1_59, %c0_60, %c0_61] : memref<4x112x2xf32, #tpu.memory_space<vmem>>, vector<1x112x2xf32>
    %162 = vector.shape_cast %161 : vector<1x112x2xf32> to vector<112x2xf32>
    %163 = vector.extract_strided_slice %160 {offsets = [0, 0], sizes = [2, 32], strides = [1, 1]} : vector<56x32xf32> to vector<2x32xf32>
    %164 = vector.extract_strided_slice %160 {offsets = [8, 0], sizes = [1, 32], strides = [1, 1]} : vector<56x32xf32> to vector<1x32xf32>
    %165 = vector.extract_strided_slice %160 {offsets = [16, 0], sizes = [32, 32], strides = [1, 1]} : vector<56x32xf32> to vector<32x32xf32>
    %166 = vector.extract_strided_slice %160 {offsets = [48, 0], sizes = [1, 32], strides = [1, 1]} : vector<56x32xf32> to vector<1x32xf32>
    %167 = vector.extract_strided_slice %162 {offsets = [0, 0], sizes = [2, 2], strides = [1, 1]} : vector<112x2xf32> to vector<2x2xf32>
    %168 = vector.extract_strided_slice %162 {offsets = [8, 0], sizes = [2, 2], strides = [1, 1]} : vector<112x2xf32> to vector<2x2xf32>
    %169 = vector.extract_strided_slice %162 {offsets = [16, 0], sizes = [2, 2], strides = [1, 1]} : vector<112x2xf32> to vector<2x2xf32>
    %170 = vector.extract_strided_slice %162 {offsets = [24, 0], sizes = [2, 2], strides = [1, 1]} : vector<112x2xf32> to vector<2x2xf32>
    %171 = vector.extract_strided_slice %162 {offsets = [32, 0], sizes = [32, 2], strides = [1, 1]} : vector<112x2xf32> to vector<32x2xf32>
    %172 = vector.extract_strided_slice %162 {offsets = [64, 0], sizes = [32, 2], strides = [1, 1]} : vector<112x2xf32> to vector<32x2xf32>
    %173 = vector.extract_strided_slice %162 {offsets = [96, 0], sizes = [1, 2], strides = [1, 1]} : vector<112x2xf32> to vector<1x2xf32>
    %174 = vector.extract_strided_slice %162 {offsets = [104, 0], sizes = [1, 2], strides = [1, 1]} : vector<112x2xf32> to vector<1x2xf32>
    %cst_62 = arith.constant dense<0.000000e+00> : vector<2x2xf32>
    %175 = tpu.matmul %128, %167, %cst_62 {dimension_numbers = #tpu.dot_dimension_numbers<[1], [0], [0], [1], [0, 0, 1, 1], [], []>} : vector<2x2xf32>, vector<2x2xf32>, vector<2x2xf32> -> vector<2x2xf32>
    %cst_63 = arith.constant dense<0.000000e+00> : vector<2x2xf32>
    %176 = tpu.matmul %150, %169, %cst_63 {dimension_numbers = #tpu.dot_dimension_numbers<[1], [0], [0], [1], [0, 0, 1, 1], [], []>} : vector<2x2xf32>, vector<2x2xf32>, vector<2x2xf32> -> vector<2x2xf32>
    %177 = arith.addf %175, %176 : vector<2x2xf32>
    %cst_64 = arith.constant dense<0.000000e+00> : vector<2x2xf32>
    %178 = tpu.matmul %128, %168, %cst_64 {dimension_numbers = #tpu.dot_dimension_numbers<[1], [0], [0], [1], [0, 0, 1, 1], [], []>} : vector<2x2xf32>, vector<2x2xf32>, vector<2x2xf32> -> vector<2x2xf32>
    %cst_65 = arith.constant dense<0.000000e+00> : vector<2x2xf32>
    %179 = tpu.matmul %150, %170, %cst_65 {dimension_numbers = #tpu.dot_dimension_numbers<[1], [0], [0], [1], [0, 0, 1, 1], [], []>} : vector<2x2xf32>, vector<2x2xf32>, vector<2x2xf32> -> vector<2x2xf32>
    %180 = arith.addf %178, %179 : vector<2x2xf32>
    %cst_66 = arith.constant dense<0.000000e+00> : vector<2x32xf32>
    %181 = tpu.matmul %180, %163, %cst_66 {dimension_numbers = #tpu.dot_dimension_numbers<[1], [0], [0], [1], [0, 0, 1, 1], [], []>} : vector<2x2xf32>, vector<2x32xf32>, vector<2x32xf32> -> vector<2x32xf32>
    %182 = vector.broadcast %164 : vector<1x32xf32> to vector<2x32xf32>
    %183 = arith.addf %181, %182 : vector<2x32xf32>
    %cst_67 = arith.constant 0.000000e+00 : f32
    %184 = vector.broadcast %cst_67 : f32 to vector<2x32xf32>
    %185 = arith.cmpf ogt, %183, %184 : vector<2x32xf32>
    %cst_68 = arith.constant 0.00999999977 : f32
    %186 = vector.broadcast %cst_68 : f32 to vector<2x32xf32>
    %187 = arith.mulf %186, %183 : vector<2x32xf32>
    %188 = arith.select %185, %183, %187 : vector<2x32xi1>, vector<2x32xf32>
    %cst_69 = arith.constant dense<0.000000e+00> : vector<2x32xf32>
    %189 = tpu.matmul %188, %165, %cst_69 {dimension_numbers = #tpu.dot_dimension_numbers<[1], [0], [0], [1], [0, 0, 1, 1], [], []>} : vector<2x32xf32>, vector<32x32xf32>, vector<2x32xf32> -> vector<2x32xf32>
    %190 = vector.broadcast %166 : vector<1x32xf32> to vector<2x32xf32>
    %191 = arith.addf %189, %190 : vector<2x32xf32>
    %cst_70 = arith.constant 0.000000e+00 : f32
    %192 = vector.broadcast %cst_70 : f32 to vector<2x32xf32>
    %193 = arith.cmpf ogt, %191, %192 : vector<2x32xf32>
    %cst_71 = arith.constant 0.00999999977 : f32
    %194 = vector.broadcast %cst_71 : f32 to vector<2x32xf32>
    %195 = arith.mulf %194, %191 : vector<2x32xf32>
    %196 = arith.select %193, %191, %195 : vector<2x32xi1>, vector<2x32xf32>
    %cst_72 = arith.constant dense<0.000000e+00> : vector<2x2xf32>
    %197 = tpu.matmul %196, %171, %cst_72 {dimension_numbers = #tpu.dot_dimension_numbers<[1], [0], [0], [1], [0, 0, 1, 1], [], []>} : vector<2x32xf32>, vector<32x2xf32>, vector<2x2xf32> -> vector<2x2xf32>
    %198 = vector.broadcast %173 : vector<1x2xf32> to vector<2x2xf32>
    %199 = arith.addf %197, %198 : vector<2x2xf32>
    %cst_73 = arith.constant dense<0.000000e+00> : vector<2x2xf32>
    %200 = tpu.matmul %196, %172, %cst_73 {dimension_numbers = #tpu.dot_dimension_numbers<[1], [0], [0], [1], [0, 0, 1, 1], [], []>} : vector<2x32xf32>, vector<32x2xf32>, vector<2x2xf32> -> vector<2x2xf32>
    %201 = vector.broadcast %174 : vector<1x2xf32> to vector<2x2xf32>
    %202 = arith.addf %200, %201 : vector<2x2xf32>
    %cst_74 = arith.constant 2.000000e+00 : f32
    %203 = vector.broadcast %cst_74 : f32 to vector<2x2xf32>
    %204 = arith.addf %199, %203 : vector<2x2xf32>
    %cst_75 = arith.constant 0.000000e+00 : f32
    %205 = vector.broadcast %cst_75 : f32 to vector<2x2xf32>
    %206 = arith.minimumf %204, %205 : vector<2x2xf32>
    %207 = math.absf %204 : vector<2x2xf32>
    %cst_76 = arith.constant 0.000000e+00 : f32
    %208 = vector.broadcast %cst_76 : f32 to vector<2x2xf32>
    %209 = arith.subf %208, %207 : vector<2x2xf32>
    %210 = math.exp %209 : vector<2x2xf32>
    %cst_77 = arith.constant 1.000000e+00 : f32
    %211 = vector.broadcast %cst_77 : f32 to vector<2x2xf32>
    %212 = arith.addf %211, %210 : vector<2x2xf32>
    %213 = math.log %212 : vector<2x2xf32>
    %214 = arith.subf %206, %213 : vector<2x2xf32>
    %215 = math.exp %214 : vector<2x2xf32>
    %216 = arith.addf %177, %202 : vector<2x2xf32>
    %217 = arith.mulf %216, %215 : vector<2x2xf32>
    %cst_78 = arith.constant dense<0.000000e+00> : vector<2xf32>
    %218 = vector.multi_reduction <add>, %214, %cst_78 [1] : vector<2x2xf32> to vector<2xf32>
    %219 = vector.shape_cast %218 : vector<2xf32> to vector<2x1xf32>
    %220 = arith.addf %112, %219 : vector<2x1xf32>
    %cst_79 = arith.constant dense<0.000000e+00> : vector<2xf32>
    %221 = vector.multi_reduction <add>, %217, %cst_79 [0] : vector<2x2xf32> to vector<2xf32>
    %222 = vector.shape_cast %221 : vector<2xf32> to vector<1x2xf32>
    %cst_80 = arith.constant 5.000000e-01 : f32
    %223 = vector.broadcast %cst_80 : f32 to vector<1x2xf32>
    %224 = arith.mulf %222, %223 : vector<1x2xf32>
    %225 = vector.broadcast %224 : vector<1x2xf32> to vector<2x2xf32>
    %226 = arith.subf %217, %225 : vector<2x2xf32>
    %227 = arith.mulf %226, %226 : vector<2x2xf32>
    %cst_81 = arith.constant dense<0.000000e+00> : vector<2xf32>
    %228 = vector.multi_reduction <add>, %227, %cst_81 [0] : vector<2x2xf32> to vector<2xf32>
    %229 = vector.shape_cast %228 : vector<2xf32> to vector<1x2xf32>
    %cst_82 = arith.constant 1.000000e+00 : f32
    %230 = vector.broadcast %cst_82 : f32 to vector<1x2xf32>
    %231 = arith.mulf %229, %230 : vector<1x2xf32>
    %232 = math.sqrt %231 : vector<1x2xf32>
    %cst_83 = arith.constant 9.99999997E-7 : f32
    %233 = vector.broadcast %cst_83 : f32 to vector<1x2xf32>
    %234 = arith.addf %232, %233 : vector<1x2xf32>
    %235 = vector.broadcast %234 : vector<1x2xf32> to vector<2x2xf32>
    %236 = arith.divf %226, %235 : vector<2x2xf32>
    %237 = math.log %234 : vector<1x2xf32>
    %238 = vector.shape_cast %237 : vector<1x2xf32> to vector<1x1x2xf32>
    %cst_84 = arith.constant dense<0.000000e+00> : vector<1xf32>
    %239 = vector.multi_reduction <add>, %238, %cst_84 [1, 2] : vector<1x1x2xf32> to vector<1xf32>
    %240 = vector.shape_cast %239 : vector<1xf32> to vector<1x1x1xf32>
    %241 = vector.extract %240[0, 0, 0] : f32 from vector<1x1x1xf32>
    %cst_85 = arith.constant 0.000000e+00 : f32
    %242 = arith.subf %cst_85, %241 : f32
    %cst_86 = arith.constant dense<0.000000e+00> : vector<2xf32>
    %243 = vector.multi_reduction <add>, %180, %cst_86 [0] : vector<2x2xf32> to vector<2xf32>
    %244 = vector.shape_cast %243 : vector<2xf32> to vector<1x2xf32>
    %cst_87 = arith.constant 5.000000e-01 : f32
    %245 = vector.broadcast %cst_87 : f32 to vector<1x2xf32>
    %246 = arith.mulf %244, %245 : vector<1x2xf32>
    %247 = vector.broadcast %246 : vector<1x2xf32> to vector<2x2xf32>
    %248 = arith.subf %180, %247 : vector<2x2xf32>
    %249 = arith.mulf %248, %248 : vector<2x2xf32>
    %cst_88 = arith.constant dense<0.000000e+00> : vector<2xf32>
    %250 = vector.multi_reduction <add>, %249, %cst_88 [0] : vector<2x2xf32> to vector<2xf32>
    %251 = vector.shape_cast %250 : vector<2xf32> to vector<1x2xf32>
    %cst_89 = arith.constant 1.000000e+00 : f32
    %252 = vector.broadcast %cst_89 : f32 to vector<1x2xf32>
    %253 = arith.mulf %251, %252 : vector<1x2xf32>
    %254 = math.sqrt %253 : vector<1x2xf32>
    %cst_90 = arith.constant 9.99999997E-7 : f32
    %255 = vector.broadcast %cst_90 : f32 to vector<1x2xf32>
    %256 = arith.addf %254, %255 : vector<1x2xf32>
    %257 = vector.broadcast %256 : vector<1x2xf32> to vector<2x2xf32>
    %258 = arith.divf %248, %257 : vector<2x2xf32>
    %259 = math.log %256 : vector<1x2xf32>
    %260 = vector.shape_cast %259 : vector<1x2xf32> to vector<1x1x2xf32>
    %cst_91 = arith.constant dense<0.000000e+00> : vector<1xf32>
    %261 = vector.multi_reduction <add>, %260, %cst_91 [1, 2] : vector<1x1x2xf32> to vector<1xf32>
    %262 = vector.shape_cast %261 : vector<1xf32> to vector<1x1x1xf32>
    %263 = vector.extract %262[0, 0, 0] : f32 from vector<1x1x1xf32>
    %cst_92 = arith.constant 0.000000e+00 : f32
    %264 = arith.subf %cst_92, %263 : f32
    %265 = arith.addf %158, %242 : f32
    %266 = arith.addf %265, %264 : f32
    %c2 = arith.constant 2 : index
    %c0_93 = arith.constant 0 : index
    %c0_94 = arith.constant 0 : index
    %267 = vector.load %arg1[%c2, %c0_93, %c0_94] : memref<4x56x32xf32, #tpu.memory_space<vmem>>, vector<1x56x32xf32>
    %268 = vector.shape_cast %267 : vector<1x56x32xf32> to vector<56x32xf32>
    %c2_95 = arith.constant 2 : index
    %c0_96 = arith.constant 0 : index
    %c0_97 = arith.constant 0 : index
    %269 = vector.load %arg2[%c2_95, %c0_96, %c0_97] : memref<4x112x2xf32, #tpu.memory_space<vmem>>, vector<1x112x2xf32>
    %270 = vector.shape_cast %269 : vector<1x112x2xf32> to vector<112x2xf32>
    %271 = vector.extract_strided_slice %268 {offsets = [0, 0], sizes = [2, 32], strides = [1, 1]} : vector<56x32xf32> to vector<2x32xf32>
    %272 = vector.extract_strided_slice %268 {offsets = [8, 0], sizes = [1, 32], strides = [1, 1]} : vector<56x32xf32> to vector<1x32xf32>
    %273 = vector.extract_strided_slice %268 {offsets = [16, 0], sizes = [32, 32], strides = [1, 1]} : vector<56x32xf32> to vector<32x32xf32>
    %274 = vector.extract_strided_slice %268 {offsets = [48, 0], sizes = [1, 32], strides = [1, 1]} : vector<56x32xf32> to vector<1x32xf32>
    %275 = vector.extract_strided_slice %270 {offsets = [0, 0], sizes = [2, 2], strides = [1, 1]} : vector<112x2xf32> to vector<2x2xf32>
    %276 = vector.extract_strided_slice %270 {offsets = [8, 0], sizes = [2, 2], strides = [1, 1]} : vector<112x2xf32> to vector<2x2xf32>
    %277 = vector.extract_strided_slice %270 {offsets = [16, 0], sizes = [2, 2], strides = [1, 1]} : vector<112x2xf32> to vector<2x2xf32>
    %278 = vector.extract_strided_slice %270 {offsets = [24, 0], sizes = [2, 2], strides = [1, 1]} : vector<112x2xf32> to vector<2x2xf32>
    %279 = vector.extract_strided_slice %270 {offsets = [32, 0], sizes = [32, 2], strides = [1, 1]} : vector<112x2xf32> to vector<32x2xf32>
    %280 = vector.extract_strided_slice %270 {offsets = [64, 0], sizes = [32, 2], strides = [1, 1]} : vector<112x2xf32> to vector<32x2xf32>
    %281 = vector.extract_strided_slice %270 {offsets = [96, 0], sizes = [1, 2], strides = [1, 1]} : vector<112x2xf32> to vector<1x2xf32>
    %282 = vector.extract_strided_slice %270 {offsets = [104, 0], sizes = [1, 2], strides = [1, 1]} : vector<112x2xf32> to vector<1x2xf32>
    %cst_98 = arith.constant dense<0.000000e+00> : vector<2x2xf32>
    %283 = tpu.matmul %236, %275, %cst_98 {dimension_numbers = #tpu.dot_dimension_numbers<[1], [0], [0], [1], [0, 0, 1, 1], [], []>} : vector<2x2xf32>, vector<2x2xf32>, vector<2x2xf32> -> vector<2x2xf32>
    %cst_99 = arith.constant dense<0.000000e+00> : vector<2x2xf32>
    %284 = tpu.matmul %258, %277, %cst_99 {dimension_numbers = #tpu.dot_dimension_numbers<[1], [0], [0], [1], [0, 0, 1, 1], [], []>} : vector<2x2xf32>, vector<2x2xf32>, vector<2x2xf32> -> vector<2x2xf32>
    %285 = arith.addf %283, %284 : vector<2x2xf32>
    %cst_100 = arith.constant dense<0.000000e+00> : vector<2x2xf32>
    %286 = tpu.matmul %236, %276, %cst_100 {dimension_numbers = #tpu.dot_dimension_numbers<[1], [0], [0], [1], [0, 0, 1, 1], [], []>} : vector<2x2xf32>, vector<2x2xf32>, vector<2x2xf32> -> vector<2x2xf32>
    %cst_101 = arith.constant dense<0.000000e+00> : vector<2x2xf32>
    %287 = tpu.matmul %258, %278, %cst_101 {dimension_numbers = #tpu.dot_dimension_numbers<[1], [0], [0], [1], [0, 0, 1, 1], [], []>} : vector<2x2xf32>, vector<2x2xf32>, vector<2x2xf32> -> vector<2x2xf32>
    %288 = arith.addf %286, %287 : vector<2x2xf32>
    %cst_102 = arith.constant dense<0.000000e+00> : vector<2x32xf32>
    %289 = tpu.matmul %285, %271, %cst_102 {dimension_numbers = #tpu.dot_dimension_numbers<[1], [0], [0], [1], [0, 0, 1, 1], [], []>} : vector<2x2xf32>, vector<2x32xf32>, vector<2x32xf32> -> vector<2x32xf32>
    %290 = vector.broadcast %272 : vector<1x32xf32> to vector<2x32xf32>
    %291 = arith.addf %289, %290 : vector<2x32xf32>
    %cst_103 = arith.constant 0.000000e+00 : f32
    %292 = vector.broadcast %cst_103 : f32 to vector<2x32xf32>
    %293 = arith.cmpf ogt, %291, %292 : vector<2x32xf32>
    %cst_104 = arith.constant 0.00999999977 : f32
    %294 = vector.broadcast %cst_104 : f32 to vector<2x32xf32>
    %295 = arith.mulf %294, %291 : vector<2x32xf32>
    %296 = arith.select %293, %291, %295 : vector<2x32xi1>, vector<2x32xf32>
    %cst_105 = arith.constant dense<0.000000e+00> : vector<2x32xf32>
    %297 = tpu.matmul %296, %273, %cst_105 {dimension_numbers = #tpu.dot_dimension_numbers<[1], [0], [0], [1], [0, 0, 1, 1], [], []>} : vector<2x32xf32>, vector<32x32xf32>, vector<2x32xf32> -> vector<2x32xf32>
    %298 = vector.broadcast %274 : vector<1x32xf32> to vector<2x32xf32>
    %299 = arith.addf %297, %298 : vector<2x32xf32>
    %cst_106 = arith.constant 0.000000e+00 : f32
    %300 = vector.broadcast %cst_106 : f32 to vector<2x32xf32>
    %301 = arith.cmpf ogt, %299, %300 : vector<2x32xf32>
    %cst_107 = arith.constant 0.00999999977 : f32
    %302 = vector.broadcast %cst_107 : f32 to vector<2x32xf32>
    %303 = arith.mulf %302, %299 : vector<2x32xf32>
    %304 = arith.select %301, %299, %303 : vector<2x32xi1>, vector<2x32xf32>
    %cst_108 = arith.constant dense<0.000000e+00> : vector<2x2xf32>
    %305 = tpu.matmul %304, %279, %cst_108 {dimension_numbers = #tpu.dot_dimension_numbers<[1], [0], [0], [1], [0, 0, 1, 1], [], []>} : vector<2x32xf32>, vector<32x2xf32>, vector<2x2xf32> -> vector<2x2xf32>
    %306 = vector.broadcast %281 : vector<1x2xf32> to vector<2x2xf32>
    %307 = arith.addf %305, %306 : vector<2x2xf32>
    %cst_109 = arith.constant dense<0.000000e+00> : vector<2x2xf32>
    %308 = tpu.matmul %304, %280, %cst_109 {dimension_numbers = #tpu.dot_dimension_numbers<[1], [0], [0], [1], [0, 0, 1, 1], [], []>} : vector<2x32xf32>, vector<32x2xf32>, vector<2x2xf32> -> vector<2x2xf32>
    %309 = vector.broadcast %282 : vector<1x2xf32> to vector<2x2xf32>
    %310 = arith.addf %308, %309 : vector<2x2xf32>
    %cst_110 = arith.constant 2.000000e+00 : f32
    %311 = vector.broadcast %cst_110 : f32 to vector<2x2xf32>
    %312 = arith.addf %307, %311 : vector<2x2xf32>
    %cst_111 = arith.constant 0.000000e+00 : f32
    %313 = vector.broadcast %cst_111 : f32 to vector<2x2xf32>
    %314 = arith.minimumf %312, %313 : vector<2x2xf32>
    %315 = math.absf %312 : vector<2x2xf32>
    %cst_112 = arith.constant 0.000000e+00 : f32
    %316 = vector.broadcast %cst_112 : f32 to vector<2x2xf32>
    %317 = arith.subf %316, %315 : vector<2x2xf32>
    %318 = math.exp %317 : vector<2x2xf32>
    %cst_113 = arith.constant 1.000000e+00 : f32
    %319 = vector.broadcast %cst_113 : f32 to vector<2x2xf32>
    %320 = arith.addf %319, %318 : vector<2x2xf32>
    %321 = math.log %320 : vector<2x2xf32>
    %322 = arith.subf %314, %321 : vector<2x2xf32>
    %323 = math.exp %322 : vector<2x2xf32>
    %324 = arith.addf %288, %310 : vector<2x2xf32>
    %325 = arith.mulf %324, %323 : vector<2x2xf32>
    %cst_114 = arith.constant dense<0.000000e+00> : vector<2xf32>
    %326 = vector.multi_reduction <add>, %322, %cst_114 [1] : vector<2x2xf32> to vector<2xf32>
    %327 = vector.shape_cast %326 : vector<2xf32> to vector<2x1xf32>
    %328 = arith.addf %220, %327 : vector<2x1xf32>
    %cst_115 = arith.constant dense<0.000000e+00> : vector<2xf32>
    %329 = vector.multi_reduction <add>, %285, %cst_115 [0] : vector<2x2xf32> to vector<2xf32>
    %330 = vector.shape_cast %329 : vector<2xf32> to vector<1x2xf32>
    %cst_116 = arith.constant 5.000000e-01 : f32
    %331 = vector.broadcast %cst_116 : f32 to vector<1x2xf32>
    %332 = arith.mulf %330, %331 : vector<1x2xf32>
    %333 = vector.broadcast %332 : vector<1x2xf32> to vector<2x2xf32>
    %334 = arith.subf %285, %333 : vector<2x2xf32>
    %335 = arith.mulf %334, %334 : vector<2x2xf32>
    %cst_117 = arith.constant dense<0.000000e+00> : vector<2xf32>
    %336 = vector.multi_reduction <add>, %335, %cst_117 [0] : vector<2x2xf32> to vector<2xf32>
    %337 = vector.shape_cast %336 : vector<2xf32> to vector<1x2xf32>
    %cst_118 = arith.constant 1.000000e+00 : f32
    %338 = vector.broadcast %cst_118 : f32 to vector<1x2xf32>
    %339 = arith.mulf %337, %338 : vector<1x2xf32>
    %340 = math.sqrt %339 : vector<1x2xf32>
    %cst_119 = arith.constant 9.99999997E-7 : f32
    %341 = vector.broadcast %cst_119 : f32 to vector<1x2xf32>
    %342 = arith.addf %340, %341 : vector<1x2xf32>
    %343 = vector.broadcast %342 : vector<1x2xf32> to vector<2x2xf32>
    %344 = arith.divf %334, %343 : vector<2x2xf32>
    %345 = math.log %342 : vector<1x2xf32>
    %346 = vector.shape_cast %345 : vector<1x2xf32> to vector<1x1x2xf32>
    %cst_120 = arith.constant dense<0.000000e+00> : vector<1xf32>
    %347 = vector.multi_reduction <add>, %346, %cst_120 [1, 2] : vector<1x1x2xf32> to vector<1xf32>
    %348 = vector.shape_cast %347 : vector<1xf32> to vector<1x1x1xf32>
    %349 = vector.extract %348[0, 0, 0] : f32 from vector<1x1x1xf32>
    %cst_121 = arith.constant 0.000000e+00 : f32
    %350 = arith.subf %cst_121, %349 : f32
    %cst_122 = arith.constant dense<0.000000e+00> : vector<2xf32>
    %351 = vector.multi_reduction <add>, %325, %cst_122 [0] : vector<2x2xf32> to vector<2xf32>
    %352 = vector.shape_cast %351 : vector<2xf32> to vector<1x2xf32>
    %cst_123 = arith.constant 5.000000e-01 : f32
    %353 = vector.broadcast %cst_123 : f32 to vector<1x2xf32>
    %354 = arith.mulf %352, %353 : vector<1x2xf32>
    %355 = vector.broadcast %354 : vector<1x2xf32> to vector<2x2xf32>
    %356 = arith.subf %325, %355 : vector<2x2xf32>
    %357 = arith.mulf %356, %356 : vector<2x2xf32>
    %cst_124 = arith.constant dense<0.000000e+00> : vector<2xf32>
    %358 = vector.multi_reduction <add>, %357, %cst_124 [0] : vector<2x2xf32> to vector<2xf32>
    %359 = vector.shape_cast %358 : vector<2xf32> to vector<1x2xf32>
    %cst_125 = arith.constant 1.000000e+00 : f32
    %360 = vector.broadcast %cst_125 : f32 to vector<1x2xf32>
    %361 = arith.mulf %359, %360 : vector<1x2xf32>
    %362 = math.sqrt %361 : vector<1x2xf32>
    %cst_126 = arith.constant 9.99999997E-7 : f32
    %363 = vector.broadcast %cst_126 : f32 to vector<1x2xf32>
    %364 = arith.addf %362, %363 : vector<1x2xf32>
    %365 = vector.broadcast %364 : vector<1x2xf32> to vector<2x2xf32>
    %366 = arith.divf %356, %365 : vector<2x2xf32>
    %367 = math.log %364 : vector<1x2xf32>
    %368 = vector.shape_cast %367 : vector<1x2xf32> to vector<1x1x2xf32>
    %cst_127 = arith.constant dense<0.000000e+00> : vector<1xf32>
    %369 = vector.multi_reduction <add>, %368, %cst_127 [1, 2] : vector<1x1x2xf32> to vector<1xf32>
    %370 = vector.shape_cast %369 : vector<1xf32> to vector<1x1x1xf32>
    %371 = vector.extract %370[0, 0, 0] : f32 from vector<1x1x1xf32>
    %cst_128 = arith.constant 0.000000e+00 : f32
    %372 = arith.subf %cst_128, %371 : f32
    %373 = arith.addf %266, %350 : f32
    %374 = arith.addf %373, %372 : f32
    %c3 = arith.constant 3 : index
    %c0_129 = arith.constant 0 : index
    %c0_130 = arith.constant 0 : index
    %375 = vector.load %arg1[%c3, %c0_129, %c0_130] : memref<4x56x32xf32, #tpu.memory_space<vmem>>, vector<1x56x32xf32>
    %376 = vector.shape_cast %375 : vector<1x56x32xf32> to vector<56x32xf32>
    %c3_131 = arith.constant 3 : index
    %c0_132 = arith.constant 0 : index
    %c0_133 = arith.constant 0 : index
    %377 = vector.load %arg2[%c3_131, %c0_132, %c0_133] : memref<4x112x2xf32, #tpu.memory_space<vmem>>, vector<1x112x2xf32>
    %378 = vector.shape_cast %377 : vector<1x112x2xf32> to vector<112x2xf32>
    %379 = vector.extract_strided_slice %376 {offsets = [0, 0], sizes = [2, 32], strides = [1, 1]} : vector<56x32xf32> to vector<2x32xf32>
    %380 = vector.extract_strided_slice %376 {offsets = [8, 0], sizes = [1, 32], strides = [1, 1]} : vector<56x32xf32> to vector<1x32xf32>
    %381 = vector.extract_strided_slice %376 {offsets = [16, 0], sizes = [32, 32], strides = [1, 1]} : vector<56x32xf32> to vector<32x32xf32>
    %382 = vector.extract_strided_slice %376 {offsets = [48, 0], sizes = [1, 32], strides = [1, 1]} : vector<56x32xf32> to vector<1x32xf32>
    %383 = vector.extract_strided_slice %378 {offsets = [0, 0], sizes = [2, 2], strides = [1, 1]} : vector<112x2xf32> to vector<2x2xf32>
    %384 = vector.extract_strided_slice %378 {offsets = [8, 0], sizes = [2, 2], strides = [1, 1]} : vector<112x2xf32> to vector<2x2xf32>
    %385 = vector.extract_strided_slice %378 {offsets = [16, 0], sizes = [2, 2], strides = [1, 1]} : vector<112x2xf32> to vector<2x2xf32>
    %386 = vector.extract_strided_slice %378 {offsets = [24, 0], sizes = [2, 2], strides = [1, 1]} : vector<112x2xf32> to vector<2x2xf32>
    %387 = vector.extract_strided_slice %378 {offsets = [32, 0], sizes = [32, 2], strides = [1, 1]} : vector<112x2xf32> to vector<32x2xf32>
    %388 = vector.extract_strided_slice %378 {offsets = [64, 0], sizes = [32, 2], strides = [1, 1]} : vector<112x2xf32> to vector<32x2xf32>
    %389 = vector.extract_strided_slice %378 {offsets = [96, 0], sizes = [1, 2], strides = [1, 1]} : vector<112x2xf32> to vector<1x2xf32>
    %390 = vector.extract_strided_slice %378 {offsets = [104, 0], sizes = [1, 2], strides = [1, 1]} : vector<112x2xf32> to vector<1x2xf32>
    %cst_134 = arith.constant dense<0.000000e+00> : vector<2x2xf32>
    %391 = tpu.matmul %344, %383, %cst_134 {dimension_numbers = #tpu.dot_dimension_numbers<[1], [0], [0], [1], [0, 0, 1, 1], [], []>} : vector<2x2xf32>, vector<2x2xf32>, vector<2x2xf32> -> vector<2x2xf32>
    %cst_135 = arith.constant dense<0.000000e+00> : vector<2x2xf32>
    %392 = tpu.matmul %366, %385, %cst_135 {dimension_numbers = #tpu.dot_dimension_numbers<[1], [0], [0], [1], [0, 0, 1, 1], [], []>} : vector<2x2xf32>, vector<2x2xf32>, vector<2x2xf32> -> vector<2x2xf32>
    %393 = arith.addf %391, %392 : vector<2x2xf32>
    %cst_136 = arith.constant dense<0.000000e+00> : vector<2x2xf32>
    %394 = tpu.matmul %344, %384, %cst_136 {dimension_numbers = #tpu.dot_dimension_numbers<[1], [0], [0], [1], [0, 0, 1, 1], [], []>} : vector<2x2xf32>, vector<2x2xf32>, vector<2x2xf32> -> vector<2x2xf32>
    %cst_137 = arith.constant dense<0.000000e+00> : vector<2x2xf32>
    %395 = tpu.matmul %366, %386, %cst_137 {dimension_numbers = #tpu.dot_dimension_numbers<[1], [0], [0], [1], [0, 0, 1, 1], [], []>} : vector<2x2xf32>, vector<2x2xf32>, vector<2x2xf32> -> vector<2x2xf32>
    %396 = arith.addf %394, %395 : vector<2x2xf32>
    %cst_138 = arith.constant dense<0.000000e+00> : vector<2x32xf32>
    %397 = tpu.matmul %396, %379, %cst_138 {dimension_numbers = #tpu.dot_dimension_numbers<[1], [0], [0], [1], [0, 0, 1, 1], [], []>} : vector<2x2xf32>, vector<2x32xf32>, vector<2x32xf32> -> vector<2x32xf32>
    %398 = vector.broadcast %380 : vector<1x32xf32> to vector<2x32xf32>
    %399 = arith.addf %397, %398 : vector<2x32xf32>
    %cst_139 = arith.constant 0.000000e+00 : f32
    %400 = vector.broadcast %cst_139 : f32 to vector<2x32xf32>
    %401 = arith.cmpf ogt, %399, %400 : vector<2x32xf32>
    %cst_140 = arith.constant 0.00999999977 : f32
    %402 = vector.broadcast %cst_140 : f32 to vector<2x32xf32>
    %403 = arith.mulf %402, %399 : vector<2x32xf32>
    %404 = arith.select %401, %399, %403 : vector<2x32xi1>, vector<2x32xf32>
    %cst_141 = arith.constant dense<0.000000e+00> : vector<2x32xf32>
    %405 = tpu.matmul %404, %381, %cst_141 {dimension_numbers = #tpu.dot_dimension_numbers<[1], [0], [0], [1], [0, 0, 1, 1], [], []>} : vector<2x32xf32>, vector<32x32xf32>, vector<2x32xf32> -> vector<2x32xf32>
    %406 = vector.broadcast %382 : vector<1x32xf32> to vector<2x32xf32>
    %407 = arith.addf %405, %406 : vector<2x32xf32>
    %cst_142 = arith.constant 0.000000e+00 : f32
    %408 = vector.broadcast %cst_142 : f32 to vector<2x32xf32>
    %409 = arith.cmpf ogt, %407, %408 : vector<2x32xf32>
    %cst_143 = arith.constant 0.00999999977 : f32
    %410 = vector.broadcast %cst_143 : f32 to vector<2x32xf32>
    %411 = arith.mulf %410, %407 : vector<2x32xf32>
    %412 = arith.select %409, %407, %411 : vector<2x32xi1>, vector<2x32xf32>
    %cst_144 = arith.constant dense<0.000000e+00> : vector<2x2xf32>
    %413 = tpu.matmul %412, %387, %cst_144 {dimension_numbers = #tpu.dot_dimension_numbers<[1], [0], [0], [1], [0, 0, 1, 1], [], []>} : vector<2x32xf32>, vector<32x2xf32>, vector<2x2xf32> -> vector<2x2xf32>
    %414 = vector.broadcast %389 : vector<1x2xf32> to vector<2x2xf32>
    %415 = arith.addf %413, %414 : vector<2x2xf32>
    %cst_145 = arith.constant dense<0.000000e+00> : vector<2x2xf32>
    %416 = tpu.matmul %412, %388, %cst_145 {dimension_numbers = #tpu.dot_dimension_numbers<[1], [0], [0], [1], [0, 0, 1, 1], [], []>} : vector<2x32xf32>, vector<32x2xf32>, vector<2x2xf32> -> vector<2x2xf32>
    %417 = vector.broadcast %390 : vector<1x2xf32> to vector<2x2xf32>
    %418 = arith.addf %416, %417 : vector<2x2xf32>
    %cst_146 = arith.constant 2.000000e+00 : f32
    %419 = vector.broadcast %cst_146 : f32 to vector<2x2xf32>
    %420 = arith.addf %415, %419 : vector<2x2xf32>
    %cst_147 = arith.constant 0.000000e+00 : f32
    %421 = vector.broadcast %cst_147 : f32 to vector<2x2xf32>
    %422 = arith.minimumf %420, %421 : vector<2x2xf32>
    %423 = math.absf %420 : vector<2x2xf32>
    %cst_148 = arith.constant 0.000000e+00 : f32
    %424 = vector.broadcast %cst_148 : f32 to vector<2x2xf32>
    %425 = arith.subf %424, %423 : vector<2x2xf32>
    %426 = math.exp %425 : vector<2x2xf32>
    %cst_149 = arith.constant 1.000000e+00 : f32
    %427 = vector.broadcast %cst_149 : f32 to vector<2x2xf32>
    %428 = arith.addf %427, %426 : vector<2x2xf32>
    %429 = math.log %428 : vector<2x2xf32>
    %430 = arith.subf %422, %429 : vector<2x2xf32>
    %431 = math.exp %430 : vector<2x2xf32>
    %432 = arith.addf %393, %418 : vector<2x2xf32>
    %433 = arith.mulf %432, %431 : vector<2x2xf32>
    %cst_150 = arith.constant dense<0.000000e+00> : vector<2xf32>
    %434 = vector.multi_reduction <add>, %430, %cst_150 [1] : vector<2x2xf32> to vector<2xf32>
    %435 = vector.shape_cast %434 : vector<2xf32> to vector<2x1xf32>
    %436 = arith.addf %328, %435 : vector<2x1xf32>
    %c0_151 = arith.constant 0 : index
    %c0_152 = arith.constant 0 : index
    %437 = vector.load %arg3[%c0_151, %c0_152] : memref<4x2xf32, #tpu.memory_space<vmem>>, vector<1x2xf32>
    %c1_153 = arith.constant 1 : index
    %c0_154 = arith.constant 0 : index
    %438 = vector.load %arg3[%c1_153, %c0_154] : memref<4x2xf32, #tpu.memory_space<vmem>>, vector<1x2xf32>
    %c2_155 = arith.constant 2 : index
    %c0_156 = arith.constant 0 : index
    %439 = vector.load %arg3[%c2_155, %c0_156] : memref<4x2xf32, #tpu.memory_space<vmem>>, vector<1x2xf32>
    %c3_157 = arith.constant 3 : index
    %c0_158 = arith.constant 0 : index
    %440 = vector.load %arg3[%c3_157, %c0_158] : memref<4x2xf32, #tpu.memory_space<vmem>>, vector<1x2xf32>
    %cst_159 = arith.constant -0.918938517 : f32
    %441 = vector.broadcast %cst_159 : f32 to vector<1x2xf32>
    %442 = arith.subf %441, %439 : vector<1x2xf32>
    %443 = vector.broadcast %437 : vector<1x2xf32> to vector<2x2xf32>
    %444 = arith.subf %433, %443 : vector<2x2xf32>
    %445 = arith.mulf %444, %444 : vector<2x2xf32>
    %cst_160 = arith.constant 5.000000e-01 : f32
    %446 = vector.broadcast %cst_160 : f32 to vector<2x2xf32>
    %447 = arith.mulf %446, %445 : vector<2x2xf32>
    %cst_161 = arith.constant -2.000000e+00 : f32
    %448 = vector.broadcast %cst_161 : f32 to vector<1x2xf32>
    %449 = arith.mulf %448, %439 : vector<1x2xf32>
    %450 = math.exp %449 : vector<1x2xf32>
    %451 = vector.broadcast %450 : vector<1x2xf32> to vector<2x2xf32>
    %452 = arith.mulf %447, %451 : vector<2x2xf32>
    %453 = vector.broadcast %442 : vector<1x2xf32> to vector<2x2xf32>
    %454 = arith.subf %453, %452 : vector<2x2xf32>
    %cst_162 = arith.constant -0.918938517 : f32
    %455 = vector.broadcast %cst_162 : f32 to vector<1x2xf32>
    %456 = arith.subf %455, %440 : vector<1x2xf32>
    %457 = vector.broadcast %438 : vector<1x2xf32> to vector<2x2xf32>
    %458 = arith.subf %396, %457 : vector<2x2xf32>
    %459 = arith.mulf %458, %458 : vector<2x2xf32>
    %cst_163 = arith.constant 5.000000e-01 : f32
    %460 = vector.broadcast %cst_163 : f32 to vector<2x2xf32>
    %461 = arith.mulf %460, %459 : vector<2x2xf32>
    %cst_164 = arith.constant -2.000000e+00 : f32
    %462 = vector.broadcast %cst_164 : f32 to vector<1x2xf32>
    %463 = arith.mulf %462, %440 : vector<1x2xf32>
    %464 = math.exp %463 : vector<1x2xf32>
    %465 = vector.broadcast %464 : vector<1x2xf32> to vector<2x2xf32>
    %466 = arith.mulf %461, %465 : vector<2x2xf32>
    %467 = vector.broadcast %456 : vector<1x2xf32> to vector<2x2xf32>
    %468 = arith.subf %467, %466 : vector<2x2xf32>
    %cst_165 = arith.constant dense<0.000000e+00> : vector<2xf32>
    %469 = vector.multi_reduction <add>, %454, %cst_165 [1] : vector<2x2xf32> to vector<2xf32>
    %470 = vector.shape_cast %469 : vector<2xf32> to vector<2x1xf32>
    %cst_166 = arith.constant dense<0.000000e+00> : vector<2xf32>
    %471 = vector.multi_reduction <add>, %468, %cst_166 [1] : vector<2x2xf32> to vector<2xf32>
    %472 = vector.shape_cast %471 : vector<2xf32> to vector<2x1xf32>
    %473 = arith.addf %470, %472 : vector<2x1xf32>
    %c0_167 = arith.constant 0 : index
    %c0_168 = arith.constant 0 : index
    %c0_169 = arith.constant 0 : index
    %474 = vector.load %arg4[%c0_167, %c0_168, %c0_169] : memref<2x2x2xf32, #tpu.memory_space<vmem>>, vector<1x2x2xf32>
    %475 = vector.shape_cast %474 : vector<1x2x2xf32> to vector<2x2xf32>
    %476 = vector.shape_cast %433 : vector<2x2xf32> to vector<1x2x2xf32>
    tpu.vector_store %arg4[%c0_167, %c0_168, %c0_169], %476 {strides = array<i32>} : memref<2x2x2xf32, #tpu.memory_space<vmem>>, vector<1x2x2xf32>,
    %c1_170 = arith.constant 1 : index
    %c0_171 = arith.constant 0 : index
    %c0_172 = arith.constant 0 : index
    %477 = vector.load %arg4[%c1_170, %c0_171, %c0_172] : memref<2x2x2xf32, #tpu.memory_space<vmem>>, vector<1x2x2xf32>
    %478 = vector.shape_cast %477 : vector<1x2x2xf32> to vector<2x2xf32>
    %479 = vector.shape_cast %396 : vector<2x2xf32> to vector<1x2x2xf32>
    tpu.vector_store %arg4[%c1_170, %c0_171, %c0_172], %479 {strides = array<i32>} : memref<2x2x2xf32, #tpu.memory_space<vmem>>, vector<1x2x2xf32>,
    %480 = vector.broadcast %374 : f32 to vector<2x1xf32>
    %481 = arith.addf %436, %480 : vector<2x1xf32>
    %482 = tpu.concatenate %481, %473 in 1 : vector<2x1xf32>, vector<2x1xf32> -> vector<2x2xf32>
    %c0_173 = arith.constant 0 : index
    %c0_174 = arith.constant 0 : index
    %483 = vector.load %arg5[%c0_173, %c0_174] : memref<2x2xf32, #tpu.memory_space<vmem>>, vector<2x2xf32>
    tpu.vector_store %arg5[%c0_173, %c0_174], %482 {strides = array<i32>} : memref<2x2xf32, #tpu.memory_space<vmem>>, vector<2x2xf32>,
    return
  }
}

</mosaic_0001>

<llo_original>
// kernel: tpu_custom_call.1
$region0: #{tpu_custom_call.1}
  #allocation0 [shape = 'u32[]', space=smem, size = 0x4, offset = 0x4, fixed_abs, tag = 'smem constant byte address 0x4 - core index']
  #allocation1 [shape = 'u32[144,128]{1,0:T(1,128)}', space=vmem, size = 0x12000, scoped, tag = 'internal scratch']
  %s0 = inlined_call_operand.vmem [shape: f32[2,2,2], index: 0, kind: input, shape index: {}]
  %s1 = inlined_call_operand.vmem [shape: f32[4,56,32], index: 1, kind: input, shape index: {}]
  %s2 = inlined_call_operand.vmem [shape: f32[4,112,2], index: 2, kind: input, shape index: {}]
  %s3 = inlined_call_operand.vmem [shape: f32[4,2], index: 3, kind: input, shape index: {}]
  %s4 = inlined_call_operand.hbm [shape: f32[2,2,2], index: 4, kind: output, shape index: {0}]
  %s5 = inlined_call_operand.hbm [shape: f32[2,2], index: 5, kind: output, shape index: {1}]
  %6 = xla_tuple %s4, %s5
  %s7 = sld [smem:[#allocation0]]
  $region34: #{tpu_custom_call.1} parent=0
    _
  %s9 = ssub.s32 1, %s7
  %s10 = scalar_select 0, %s9, %s7
  $region1: #{tpu_custom_call.1} parent=0
    #allocation2 [shape = 'u8[2048]{0}', space=vmem, size = 0x800, scoped, tag = 'output window, operand 0, single buffered']
    #allocation3 [shape = 's32[1]{0}', space=sflag, size = 0x4, scoped, tag = 'scoped memory for tpu_custom_call.1']
    #allocation4 [shape = 'u8[1024]{0}', space=vmem, size = 0x400, scoped, tag = 'output window, operand 1, single buffered']
    #allocation5 [shape = 's32[1]{0}', space=sflag, size = 0x4, scoped, tag = 'scoped memory for tpu_custom_call.1']
    %11 = vsyncpa [#allocation3], 0
    %12 = vsyncpa [#allocation5], 0
    // Predicated region
    $region2: #{tpu_custom_call.1} parent=1 // pred_check
      _
    $region3: #{tpu_custom_call.1} parent=1 // pred_check_branch
      %14 = sbr.rel (0) target = $region5
    $region4: #{tpu_custom_call.1} parent=1 // pred_region
      _
    $region5: #{tpu_custom_call.1} parent=1 // pred_fallthru
      _
    // Predicated region
    $region6: #{tpu_custom_call.1} parent=1 // pred_check
      _
    $region7: #{tpu_custom_call.1} parent=1 // pred_check_branch
      %16 = sbr.rel (0) target = $region9
    $region8: #{tpu_custom_call.1} parent=1 // pred_region
      _
    $region9: #{tpu_custom_call.1} parent=1 // pred_fallthru
      _
    // Predicated region
    $region10: #{tpu_custom_call.1} parent=1 // pred_check
      _
    $region11: #{tpu_custom_call.1} parent=1 // pred_check_branch
      %18 = sbr.rel (0) target = $region13
    $region12: #{tpu_custom_call.1} parent=1 // pred_region
      _
    $region13: #{tpu_custom_call.1} parent=1 // pred_fallthru
      _
    // Predicated region
    $region14: #{tpu_custom_call.1} parent=1 // pred_check
      _
    $region15: #{tpu_custom_call.1} parent=1 // pred_check_branch
      %20 = sbr.rel (0) target = $region17
    $region16: #{tpu_custom_call.1} parent=1 // pred_region
      _
    $region17: #{tpu_custom_call.1} parent=1 // pred_fallthru
      _
    %v21 = vld [vmem:[%s0] sm:$0x3]
    %s22 = scalar_lea.vmem %s0, 2
    %v23 = vld [vmem:[%s22] sm:$0x3]
    %vm24 = vcmask 9216
    %v25 = vsel %vm24, %v21, 0.0
    %v26 = vrot.slane %v25, 4
    %v27 = vadd.f32 %v25, %v26
    %v28 = vrot.slane %v27, 2
    %v29 = vadd.f32 %v27, %v28
    %v30 = vrot.slane %v29, 1
    %v31 = vadd.f32 %v29, %v30
    %v32 = vmul.f32 %v31, 0.5
    %v33 = vsub.f32 %v21, %v32
    %v34 = vmul.f32 %v33, %v33
    %v35 = vsel %vm24, %v34, 0.0
    %v36 = vrot.slane %v35, 4
    %v37 = vadd.f32 %v35, %v36
    %v38 = vrot.slane %v37, 2
    %v39 = vadd.f32 %v37, %v38
    %v40 = vrot.slane %v39, 1
    %v41 = vadd.f32 %v39, %v40
    %v42 = vrsqrt.pop %v41
    %v43 = vmul.f32 %v41, %v42
    %vm44 = vcmp.eq.f32.partialorder %v41, inf
    %v45 = vsel %vm44, %v41, %v43
    %vm46 = vcmp.eq.f32.partialorder %v41, 0.0
    %v47 = vand.u32 %v41, 2147483648
    %v48 = vsel %vm46, %v47, %v45
    %v49 = vadd.f32 %v48, 1e-06
    %v50 = vrcp.pop %v49
    %v51 = vmul.f32 %v33, %v50
    %v52 = vlog2.pop %v49
    %v53 = vmul.f32 %v52, 0.6931472
    %vm54 = vcmask 8192
    %v55 = vsel %vm54, %v53, 0.0
    %56 = vadd.xlane.f32.xlu0 %v55
    %v57 = vpop.xlane.xlu0 %56
    %v58 = vrot.slane %v57, 4
    %v59 = vadd.f32 %v57, %v58
    %v60 = vrot.slane %v59, 2
    %v61 = vadd.f32 %v59, %v60
    %v62 = vrot.slane %v61, 1
    %v63 = vadd.f32 %v61, %v62
    %s64 = vtos %v63
    %s65 = ssub.f32 0.0, %s64
    %v66 = vsel %vm24, %v23, 0.0
    %v67 = vrot.slane %v66, 4
    %v68 = vadd.f32 %v66, %v67
    %v69 = vrot.slane %v68, 2
    %v70 = vadd.f32 %v68, %v69
    %v71 = vrot.slane %v70, 1
    %v72 = vadd.f32 %v70, %v71
    %v73 = vmul.f32 %v72, 0.5
    %v74 = vsub.f32 %v23, %v73
    %v75 = vmul.f32 %v74, %v74
    %v76 = vsel %vm24, %v75, 0.0
    %v77 = vrot.slane %v76, 4
    %v78 = vadd.f32 %v76, %v77
    %v79 = vrot.slane %v78, 2
    %v80 = vadd.f32 %v78, %v79
    %v81 = vrot.slane %v80, 1
    %v82 = vadd.f32 %v80, %v81
    %v83 = vrsqrt.pop %v82
    %v84 = vmul.f32 %v82, %v83
    %vm85 = vcmp.eq.f32.partialorder %v82, inf
    %v86 = vsel %vm85, %v82, %v84
    %vm87 = vcmp.eq.f32.partialorder %v82, 0.0
    %v88 = vand.u32 %v82, 2147483648
    %v89 = vsel %vm87, %v88, %v86
    %v90 = vadd.f32 %v89, 1e-06
    %v91 = vrcp.pop %v90
    %v92 = vmul.f32 %v74, %v91
    %v93 = vlog2.pop %v90
    %v94 = vmul.f32 %v93, 0.6931472
    %v95 = vsel %vm54, %v94, 0.0
    %96 = vadd.xlane.f32.xlu0 %v95
    %v97 = vpop.xlane.xlu0 %96
    %v98 = vrot.slane %v97, 4
    %v99 = vadd.f32 %v97, %v98
    %v100 = vrot.slane %v99, 2
    %v101 = vadd.f32 %v99, %v100
    %v102 = vrot.slane %v101, 1
    %v103 = vadd.f32 %v101, %v102
    %s104 = vtos %v103
    %s105 = ssub.f32 0.0, %s104
    %s106 = sadd.f32 %s65, 0.0
    %s107 = sadd.f32 %s106, %s105
    %v108 = vld [vmem:[%s1] sm:$0xff]
    %v109 = vld [vmem:[%s1 + $0x8] sm:$0xff]
    %v110 = vld [vmem:[%s1 + $0x10] sm:$0xff]
    %v111 = vld [vmem:[%s1 + $0x18] sm:$0xff]
    %v112 = vld [vmem:[%s1 + $0x20] sm:$0xff]
    %v113 = vld [vmem:[%s1 + $0x28] sm:$0xff]
    %v114 = vld [vmem:[%s1 + $0x30] sm:$0xff]
    %v115 = vld [vmem:[%s2] sm:$0xff]
    %v116 = vld [vmem:[%s2 + $0x8] sm:$0xff]
    %v117 = vld [vmem:[%s2 + $0x10] sm:$0xff]
    %v118 = vld [vmem:[%s2 + $0x18] sm:$0xff]
    %v119 = vld [vmem:[%s2 + $0x20] sm:$0xff]
    %v120 = vld [vmem:[%s2 + $0x28] sm:$0xff]
    %v121 = vld [vmem:[%s2 + $0x30] sm:$0xff]
    %v122 = vld [vmem:[%s2 + $0x38] sm:$0xff]
    %v123 = vld [vmem:[%s2 + $0x40] sm:$0xff]
    %v124 = vld [vmem:[%s2 + $0x48] sm:$0xff]
    %v125 = vld [vmem:[%s2 + $0x50] sm:$0xff]
    %v126 = vld [vmem:[%s2 + $0x58] sm:$0xff]
    %v127 = vld [vmem:[%s2 + $0x60] sm:$0xff]
    %v128 = vld [vmem:[%s2 + $0x68] sm:$0xff]
    %vm129 = vcmask 15360
    %v131 = vsel %vm129, %v92, 0
    %vm133 = vcmask 1041408
    %v135 = vsel %vm133, %v117, 0
    %137 = vmatprep.subr.mxu0 0.0
    %138 = vmatpush1.msra.mxu0 %v135
    %139 = vmatprep.subr.mxu0 0.0
    %140 = vmatpush1.msra.mxu0 0.0
    %141 = vmatprep.subr.mxu0 0.0
    %142 = vmatpush1.msra.mxu0 0.0
    %143 = vmatprep.subr.mxu0 0.0
    %144 = vmatpush1.msra.mxu0 0.0
    %145 = vmatprep.subr.mxu0 0.0
    %146 = vmatpush1.msra.mxu0 0.0
    %147 = vmatprep.subr.mxu0 0.0
    %148 = vmatpush1.msra.mxu0 0.0
    %149 = vmatprep.subr.mxu0 0.0
    %150 = vmatpush1.msra.mxu0 0.0
    %151 = vmatprep.subr.mxu0 0.0
    %152 = vmatpush1.msra.mxu0 0.0
    %153 = vmatprep.subr.mxu0 0.0
    %154 = vmatpush1.msra.mxu0 0.0
    %155 = vmatprep.subr.mxu0 0.0
    %156 = vmatpush1.msra.mxu0 0.0
    %157 = vmatprep.subr.mxu0 0.0
    %158 = vmatpush1.msra.mxu0 0.0
    %159 = vmatprep.subr.mxu0 0.0
    %160 = vmatpush1.msra.mxu0 0.0
    %161 = vmatprep.subr.mxu0 0.0
    %162 = vmatpush1.msra.mxu0 0.0
    %163 = vmatprep.subr.mxu0 0.0
    %164 = vmatpush1.msra.mxu0 0.0
    %165 = vmatprep.subr.mxu0 0.0
    %166 = vmatpush1.msra.mxu0 0.0
    %167 = vmatprep.subr.mxu0 0.0
    %168 = vmatpush1.msra.mxu0 0.0
    %169 = vmatprep.subr.mxu0 0.0
    %170 = vmatpush1.msra.mxu0 0.0
    %171 = vmatprep.subr.mxu0 0.0
    %172 = vmatpush1.msra.mxu0 0.0
    %173 = vmatprep.subr.mxu0 0.0
    %174 = vmatpush1.msra.mxu0 0.0
    %175 = vmatprep.subr.mxu0 0.0
    %176 = vmatpush1.msra.mxu0 0.0
    %177 = vmatprep.subr.mxu0 0.0
    %178 = vmatpush1.msra.mxu0 0.0
    %179 = vmatprep.subr.mxu0 0.0
    %180 = vmatpush1.msra.mxu0 0.0
    %181 = vmatprep.subr.mxu0 0.0
    %182 = vmatpush1.msra.mxu0 0.0
    %183 = vmatprep.subr.mxu0 0.0
    %184 = vmatpush1.msra.mxu0 0.0
    %185 = vmatprep.subr.mxu0 0.0
    %186 = vmatpush1.msra.mxu0 0.0
    %187 = vmatprep.subr.mxu0 0.0
    %188 = vmatpush1.msra.mxu0 0.0
    %189 = vmatprep.subr.mxu0 0.0
    %190 = vmatpush1.msra.mxu0 0.0
    %191 = vmatprep.subr.mxu0 0.0
    %192 = vmatpush1.msra.mxu0 0.0
    %193 = vmatprep.subr.mxu0 0.0
    %194 = vmatpush1.msra.mxu0 0.0
    %195 = vmatprep.subr.mxu0 0.0
    %196 = vmatpush1.msra.mxu0 0.0
    %197 = vmatprep.subr.mxu0 0.0
    %198 = vmatpush1.msra.mxu0 0.0
    %199 = vmatprep.subr.mxu0 0.0
    %200 = vmatpush1.msra.mxu0 0.0
    %201 = vmatprep.mubr.f32.mxu0 0.0
    %202 = vmatmul.mubr.f32.gmra.mrb[0].mxu0 %v131
    %v203 = vpop.f32.mrb[0].mxu0
    %v204 = vadd.f32 0.0, %v203
    %v205 = vpop.f32.mrb[0].mxu0
    %206 = vdwg.mxu0
    %v208 = vsel %vm129, %v51, 0
    %v211 = vsel %vm133, %v115, 0
    %213 = vmatprep.subr.mxu0 0.0
    %214 = vmatpush1.msra.mxu0 %v211
    %215 = vmatprep.subr.mxu0 0.0
    %216 = vmatpush1.msra.mxu0 0.0
    %217 = vmatprep.subr.mxu0 0.0
    %218 = vmatpush1.msra.mxu0 0.0
    %219 = vmatprep.subr.mxu0 0.0
    %220 = vmatpush1.msra.mxu0 0.0
    %221 = vmatprep.subr.mxu0 0.0
    %222 = vmatpush1.msra.mxu0 0.0
    %223 = vmatprep.subr.mxu0 0.0
    %224 = vmatpush1.msra.mxu0 0.0
    %225 = vmatprep.subr.mxu0 0.0
    %226 = vmatpush1.msra.mxu0 0.0
    %227 = vmatprep.subr.mxu0 0.0
    %228 = vmatpush1.msra.mxu0 0.0
    %229 = vmatprep.subr.mxu0 0.0
    %230 = vmatpush1.msra.mxu0 0.0
    %231 = vmatprep.subr.mxu0 0.0
    %232 = vmatpush1.msra.mxu0 0.0
    %233 = vmatprep.subr.mxu0 0.0
    %234 = vmatpush1.msra.mxu0 0.0
    %235 = vmatprep.subr.mxu0 0.0
    %236 = vmatpush1.msra.mxu0 0.0
    %237 = vmatprep.subr.mxu0 0.0
    %238 = vmatpush1.msra.mxu0 0.0
    %239 = vmatprep.subr.mxu0 0.0
    %240 = vmatpush1.msra.mxu0 0.0
    %241 = vmatprep.subr.mxu0 0.0
    %242 = vmatpush1.msra.mxu0 0.0
    %243 = vmatprep.subr.mxu0 0.0
    %244 = vmatpush1.msra.mxu0 0.0
    %245 = vmatprep.subr.mxu0 0.0
    %246 = vmatpush1.msra.mxu0 0.0
    %247 = vmatprep.subr.mxu0 0.0
    %248 = vmatpush1.msra.mxu0 0.0
    %249 = vmatprep.subr.mxu0 0.0
    %250 = vmatpush1.msra.mxu0 0.0
    %251 = vmatprep.subr.mxu0 0.0
    %252 = vmatpush1.msra.mxu0 0.0
    %253 = vmatprep.subr.mxu0 0.0
    %254 = vmatpush1.msra.mxu0 0.0
    %255 = vmatprep.subr.mxu0 0.0
    %256 = vmatpush1.msra.mxu0 0.0
    %257 = vmatprep.subr.mxu0 0.0
    %258 = vmatpush1.msra.mxu0 0.0
    %259 = vmatprep.subr.mxu0 0.0
    %260 = vmatpush1.msra.mxu0 0.0
    %261 = vmatprep.subr.mxu0 0.0
    %262 = vmatpush1.msra.mxu0 0.0
    %263 = vmatprep.subr.mxu0 0.0
    %264 = vmatpush1.msra.mxu0 0.0
    %265 = vmatprep.subr.mxu0 0.0
    %266 = vmatpush1.msra.mxu0 0.0
    %267 = vmatprep.subr.mxu0 0.0
    %268 = vmatpush1.msra.mxu0 0.0
    %269 = vmatprep.subr.mxu0 0.0
    %270 = vmatpush1.msra.mxu0 0.0
    %271 = vmatprep.subr.mxu0 0.0
    %272 = vmatpush1.msra.mxu0 0.0
    %273 = vmatprep.subr.mxu0 0.0
    %274 = vmatpush1.msra.mxu0 0.0
    %275 = vmatprep.subr.mxu0 0.0
    %276 = vmatpush1.msra.mxu0 0.0
    %277 = vmatprep.mubr.f32.mxu0 0.0
    %278 = vmatmul.mubr.f32.gmra.mrb[0].mxu0 %v208
    %v279 = vpop.f32.mrb[0].mxu0
    %v280 = vadd.f32 %v204, %v279
    %v281 = vpop.f32.mrb[0].mxu0
    %282 = vdwg.mxu0
    %v284 = vsel %vm133, %v118, 0
    %286 = vmatprep.subr.mxu0 0.0
    %287 = vmatpush1.msra.mxu0 %v284
    %288 = vmatprep.subr.mxu0 0.0
    %289 = vmatpush1.msra.mxu0 0.0
    %290 = vmatprep.subr.mxu0 0.0
    %291 = vmatpush1.msra.mxu0 0.0
    %292 = vmatprep.subr.mxu0 0.0
    %293 = vmatpush1.msra.mxu0 0.0
    %294 = vmatprep.subr.mxu0 0.0
    %295 = vmatpush1.msra.mxu0 0.0
    %296 = vmatprep.subr.mxu0 0.0
    %297 = vmatpush1.msra.mxu0 0.0
    %298 = vmatprep.subr.mxu0 0.0
    %299 = vmatpush1.msra.mxu0 0.0
    %300 = vmatprep.subr.mxu0 0.0
    %301 = vmatpush1.msra.mxu0 0.0
    %302 = vmatprep.subr.mxu0 0.0
    %303 = vmatpush1.msra.mxu0 0.0
    %304 = vmatprep.subr.mxu0 0.0
    %305 = vmatpush1.msra.mxu0 0.0
    %306 = vmatprep.subr.mxu0 0.0
    %307 = vmatpush1.msra.mxu0 0.0
    %308 = vmatprep.subr.mxu0 0.0
    %309 = vmatpush1.msra.mxu0 0.0
    %310 = vmatprep.subr.mxu0 0.0
    %311 = vmatpush1.msra.mxu0 0.0
    %312 = vmatprep.subr.mxu0 0.0
    %313 = vmatpush1.msra.mxu0 0.0
    %314 = vmatprep.subr.mxu0 0.0
    %315 = vmatpush1.msra.mxu0 0.0
    %316 = vmatprep.subr.mxu0 0.0
    %317 = vmatpush1.msra.mxu0 0.0
    %318 = vmatprep.subr.mxu0 0.0
    %319 = vmatpush1.msra.mxu0 0.0
    %320 = vmatprep.subr.mxu0 0.0
    %321 = vmatpush1.msra.mxu0 0.0
    %322 = vmatprep.subr.mxu0 0.0
    %323 = vmatpush1.msra.mxu0 0.0
    %324 = vmatprep.subr.mxu0 0.0
    %325 = vmatpush1.msra.mxu0 0.0
    %326 = vmatprep.subr.mxu0 0.0
    %327 = vmatpush1.msra.mxu0 0.0
    %328 = vmatprep.subr.mxu0 0.0
    %329 = vmatpush1.msra.mxu0 0.0
    %330 = vmatprep.subr.mxu0 0.0
    %331 = vmatpush1.msra.mxu0 0.0
    %332 = vmatprep.subr.mxu0 0.0
    %333 = vmatpush1.msra.mxu0 0.0
    %334 = vmatprep.subr.mxu0 0.0
    %335 = vmatpush1.msra.mxu0 0.0
    %336 = vmatprep.subr.mxu0 0.0
    %337 = vmatpush1.msra.mxu0 0.0
    %338 = vmatprep.subr.mxu0 0.0
    %339 = vmatpush1.msra.mxu0 0.0
    %340 = vmatprep.subr.mxu0 0.0
    %341 = vmatpush1.msra.mxu0 0.0
    %342 = vmatprep.subr.mxu0 0.0
    %343 = vmatpush1.msra.mxu0 0.0
    %344 = vmatprep.subr.mxu0 0.0
    %345 = vmatpush1.msra.mxu0 0.0
    %346 = vmatprep.subr.mxu0 0.0
    %347 = vmatpush1.msra.mxu0 0.0
    %348 = vmatprep.subr.mxu0 0.0
    %349 = vmatpush1.msra.mxu0 0.0
    %350 = vmatprep.mubr.f32.mxu0 0.0
    %351 = vmatmul.mubr.f32.gmra.mrb[0].mxu0 %v131
    %v352 = vpop.f32.mrb[0].mxu0
    %v353 = vadd.f32 0.0, %v352
    %v354 = vpop.f32.mrb[0].mxu0
    %355 = vdwg.mxu0
    %v357 = vsel %vm133, %v116, 0
    %359 = vmatprep.subr.mxu0 0.0
    %360 = vmatpush1.msra.mxu0 %v357
    %361 = vmatprep.subr.mxu0 0.0
    %362 = vmatpush1.msra.mxu0 0.0
    %363 = vmatprep.subr.mxu0 0.0
    %364 = vmatpush1.msra.mxu0 0.0
    %365 = vmatprep.subr.mxu0 0.0
    %366 = vmatpush1.msra.mxu0 0.0
    %367 = vmatprep.subr.mxu0 0.0
    %368 = vmatpush1.msra.mxu0 0.0
    %369 = vmatprep.subr.mxu0 0.0
    %370 = vmatpush1.msra.mxu0 0.0
    %371 = vmatprep.subr.mxu0 0.0
    %372 = vmatpush1.msra.mxu0 0.0
    %373 = vmatprep.subr.mxu0 0.0
    %374 = vmatpush1.msra.mxu0 0.0
    %375 = vmatprep.subr.mxu0 0.0
    %376 = vmatpush1.msra.mxu0 0.0
    %377 = vmatprep.subr.mxu0 0.0
    %378 = vmatpush1.msra.mxu0 0.0
    %379 = vmatprep.subr.mxu0 0.0
    %380 = vmatpush1.msra.mxu0 0.0
    %381 = vmatprep.subr.mxu0 0.0
    %382 = vmatpush1.msra.mxu0 0.0
    %383 = vmatprep.subr.mxu0 0.0
    %384 = vmatpush1.msra.mxu0 0.0
    %385 = vmatprep.subr.mxu0 0.0
    %386 = vmatpush1.msra.mxu0 0.0
    %387 = vmatprep.subr.mxu0 0.0
    %388 = vmatpush1.msra.mxu0 0.0
    %389 = vmatprep.subr.mxu0 0.0
    %390 = vmatpush1.msra.mxu0 0.0
    %391 = vmatprep.subr.mxu0 0.0
    %392 = vmatpush1.msra.mxu0 0.0
    %393 = vmatprep.subr.mxu0 0.0
    %394 = vmatpush1.msra.mxu0 0.0
    %395 = vmatprep.subr.mxu0 0.0
    %396 = vmatpush1.msra.mxu0 0.0
    %397 = vmatprep.subr.mxu0 0.0
    %398 = vmatpush1.msra.mxu0 0.0
    %399 = vmatprep.subr.mxu0 0.0
    %400 = vmatpush1.msra.mxu0 0.0
    %401 = vmatprep.subr.mxu0 0.0
    %402 = vmatpush1.msra.mxu0 0.0
    %403 = vmatprep.subr.mxu0 0.0
    %404 = vmatpush1.msra.mxu0 0.0
    %405 = vmatprep.subr.mxu0 0.0
    %406 = vmatpush1.msra.mxu0 0.0
    %407 = vmatprep.subr.mxu0 0.0
    %408 = vmatpush1.msra.mxu0 0.0
    %409 = vmatprep.subr.mxu0 0.0
    %410 = vmatpush1.msra.mxu0 0.0
    %411 = vmatprep.subr.mxu0 0.0
    %412 = vmatpush1.msra.mxu0 0.0
    %413 = vmatprep.subr.mxu0 0.0
    %414 = vmatpush1.msra.mxu0 0.0
    %415 = vmatprep.subr.mxu0 0.0
    %416 = vmatpush1.msra.mxu0 0.0
    %417 = vmatprep.subr.mxu0 0.0
    %418 = vmatpush1.msra.mxu0 0.0
    %419 = vmatprep.subr.mxu0 0.0
    %420 = vmatpush1.msra.mxu0 0.0
    %421 = vmatprep.subr.mxu0 0.0
    %422 = vmatpush1.msra.mxu0 0.0
    %423 = vmatprep.mubr.f32.mxu0 0.0
    %424 = vmatmul.mubr.f32.gmra.mrb[0].mxu0 %v208
    %v425 = vpop.f32.mrb[0].mxu0
    %v426 = vadd.f32 %v353, %v425
    %v427 = vpop.f32.mrb[0].mxu0
    %428 = vdwg.mxu0
    %v429 = vlaneseq
    %v430 = vshrl.u32 %v429, 7
    %v431 = vsub.s32 0, %v430
    %v432 = vrot.slane %v109, %v431
    %v434 = vsel %vm129, %v280, 0
    %v437 = vsel %vm133, %v108, 0
    %439 = vmatprep.subr.mxu0 0.0
    %440 = vmatpush1.msra.mxu0 %v437
    %441 = vmatprep.subr.mxu0 0.0
    %442 = vmatpush1.msra.mxu0 0.0
    %443 = vmatprep.subr.mxu0 0.0
    %444 = vmatpush1.msra.mxu0 0.0
    %445 = vmatprep.subr.mxu0 0.0
    %446 = vmatpush1.msra.mxu0 0.0
    %447 = vmatprep.subr.mxu0 0.0
    %448 = vmatpush1.msra.mxu0 0.0
    %449 = vmatprep.subr.mxu0 0.0
    %450 = vmatpush1.msra.mxu0 0.0
    %451 = vmatprep.subr.mxu0 0.0
    %452 = vmatpush1.msra.mxu0 0.0
    %453 = vmatprep.subr.mxu0 0.0
    %454 = vmatpush1.msra.mxu0 0.0
    %455 = vmatprep.subr.mxu0 0.0
    %456 = vmatpush1.msra.mxu0 0.0
    %457 = vmatprep.subr.mxu0 0.0
    %458 = vmatpush1.msra.mxu0 0.0
    %459 = vmatprep.subr.mxu0 0.0
    %460 = vmatpush1.msra.mxu0 0.0
    %461 = vmatprep.subr.mxu0 0.0
    %462 = vmatpush1.msra.mxu0 0.0
    %463 = vmatprep.subr.mxu0 0.0
    %464 = vmatpush1.msra.mxu0 0.0
    %465 = vmatprep.subr.mxu0 0.0
    %466 = vmatpush1.msra.mxu0 0.0
    %467 = vmatprep.subr.mxu0 0.0
    %468 = vmatpush1.msra.mxu0 0.0
    %469 = vmatprep.subr.mxu0 0.0
    %470 = vmatpush1.msra.mxu0 0.0
    %471 = vmatprep.subr.mxu0 0.0
    %472 = vmatpush1.msra.mxu0 0.0
    %473 = vmatprep.subr.mxu0 0.0
    %474 = vmatpush1.msra.mxu0 0.0
    %475 = vmatprep.subr.mxu0 0.0
    %476 = vmatpush1.msra.mxu0 0.0
    %477 = vmatprep.subr.mxu0 0.0
    %478 = vmatpush1.msra.mxu0 0.0
    %479 = vmatprep.subr.mxu0 0.0
    %480 = vmatpush1.msra.mxu0 0.0
    %481 = vmatprep.subr.mxu0 0.0
    %482 = vmatpush1.msra.mxu0 0.0
    %483 = vmatprep.subr.mxu0 0.0
    %484 = vmatpush1.msra.mxu0 0.0
    %485 = vmatprep.subr.mxu0 0.0
    %486 = vmatpush1.msra.mxu0 0.0
    %487 = vmatprep.subr.mxu0 0.0
    %488 = vmatpush1.msra.mxu0 0.0
    %489 = vmatprep.subr.mxu0 0.0
    %490 = vmatpush1.msra.mxu0 0.0
    %491 = vmatprep.subr.mxu0 0.0
    %492 = vmatpush1.msra.mxu0 0.0
    %493 = vmatprep.subr.mxu0 0.0
    %494 = vmatpush1.msra.mxu0 0.0
    %495 = vmatprep.subr.mxu0 0.0
    %496 = vmatpush1.msra.mxu0 0.0
    %497 = vmatprep.subr.mxu0 0.0
    %498 = vmatpush1.msra.mxu0 0.0
    %499 = vmatprep.subr.mxu0 0.0
    %500 = vmatpush1.msra.mxu0 0.0
    %501 = vmatprep.subr.mxu0 0.0
    %502 = vmatpush1.msra.mxu0 0.0
    %503 = vmatprep.mubr.f32.mxu0 0.0
    %504 = vmatmul.mubr.f32.gmra.mrb[0].mxu0 %v434
    %v505 = vpop.f32.mrb[0].mxu0
    %v506 = vadd.f32 %v432, %v505
    %v507 = vpop.f32.mrb[0].mxu0
    %508 = vdwg.mxu0
    %vm509 = vcmp.gt.f32.partialorder %v506, 0.0
    %v510 = vmul.f32 %v506, 0.01
    %v511 = vsel %vm509, %v506, %v510
    %v512 = vlaneseq
    %v513 = vshrl.u32 %v512, 7
    %v514 = vsub.s32 0, %v513
    %v515 = vrot.slane %v114, %v514
    %vm516 = vcmask 261120
    %v518 = vsel %vm516, %v511, 0
    %520 = vmatprep.subr.mxu0 0.0
    %521 = vmatpush1.msra.mxu0 %v110
    %522 = vmatprep.subr.mxu0 0.0
    %523 = vmatpush1.msra.mxu0 %v111
    %524 = vmatprep.subr.mxu0 0.0
    %525 = vmatpush1.msra.mxu0 %v112
    %526 = vmatprep.subr.mxu0 0.0
    %527 = vmatpush1.msra.mxu0 %v113
    %528 = vmatprep.subr.mxu0 0.0
    %529 = vmatpush1.msra.mxu0 0.0
    %530 = vmatprep.subr.mxu0 0.0
    %531 = vmatpush1.msra.mxu0 0.0
    %532 = vmatprep.subr.mxu0 0.0
    %533 = vmatpush1.msra.mxu0 0.0
    %534 = vmatprep.subr.mxu0 0.0
    %535 = vmatpush1.msra.mxu0 0.0
    %536 = vmatprep.subr.mxu0 0.0
    %537 = vmatpush1.msra.mxu0 0.0
    %538 = vmatprep.subr.mxu0 0.0
    %539 = vmatpush1.msra.mxu0 0.0
    %540 = vmatprep.subr.mxu0 0.0
    %541 = vmatpush1.msra.mxu0 0.0
    %542 = vmatprep.subr.mxu0 0.0
    %543 = vmatpush1.msra.mxu0 0.0
    %544 = vmatprep.subr.mxu0 0.0
    %545 = vmatpush1.msra.mxu0 0.0
    %546 = vmatprep.subr.mxu0 0.0
    %547 = vmatpush1.msra.mxu0 0.0
    %548 = vmatprep.subr.mxu0 0.0
    %549 = vmatpush1.msra.mxu0 0.0
    %550 = vmatprep.subr.mxu0 0.0
    %551 = vmatpush1.msra.mxu0 0.0
    %552 = vmatprep.subr.mxu0 0.0
    %553 = vmatpush1.msra.mxu0 0.0
    %554 = vmatprep.subr.mxu0 0.0
    %555 = vmatpush1.msra.mxu0 0.0
    %556 = vmatprep.subr.mxu0 0.0
    %557 = vmatpush1.msra.mxu0 0.0
    %558 = vmatprep.subr.mxu0 0.0
    %559 = vmatpush1.msra.mxu0 0.0
    %560 = vmatprep.subr.mxu0 0.0
    %561 = vmatpush1.msra.mxu0 0.0
    %562 = vmatprep.subr.mxu0 0.0
    %563 = vmatpush1.msra.mxu0 0.0
    %564 = vmatprep.subr.mxu0 0.0
    %565 = vmatpush1.msra.mxu0 0.0
    %566 = vmatprep.subr.mxu0 0.0
    %567 = vmatpush1.msra.mxu0 0.0
    %568 = vmatprep.subr.mxu0 0.0
    %569 = vmatpush1.msra.mxu0 0.0
    %570 = vmatprep.subr.mxu0 0.0
    %571 = vmatpush1.msra.mxu0 0.0
    %572 = vmatprep.subr.mxu0 0.0
    %573 = vmatpush1.msra.mxu0 0.0
    %574 = vmatprep.subr.mxu0 0.0
    %575 = vmatpush1.msra.mxu0 0.0
    %576 = vmatprep.subr.mxu0 0.0
    %577 = vmatpush1.msra.mxu0 0.0
    %578 = vmatprep.subr.mxu0 0.0
    %579 = vmatpush1.msra.mxu0 0.0
    %580 = vmatprep.subr.mxu0 0.0
    %581 = vmatpush1.msra.mxu0 0.0
    %582 = vmatprep.subr.mxu0 0.0
    %583 = vmatpush1.msra.mxu0 0.0
    %584 = vmatprep.mubr.f32.mxu0 0.0
    %585 = vmatmul.mubr.f32.gmra.mrb[0].mxu0 %v518
    %v586 = vpop.f32.mrb[0].mxu0
    %v587 = vadd.f32 %v515, %v586
    %v588 = vpop.f32.mrb[0].mxu0
    %589 = vdwg.mxu0
    %vm590 = vcmp.gt.f32.partialorder %v587, 0.0
    %v591 = vmul.f32 %v587, 0.01
    %v592 = vsel %vm590, %v587, %v591
    %v593 = vlaneseq
    %v594 = vshrl.u32 %v593, 7
    %v595 = vsub.s32 0, %v594
    %v596 = vrot.slane %v127, %v595
    %v598 = vsel %vm516, %v592, 0
    %600 = vmatprep.subr.mxu0 0.0
    %601 = vmatpush1.msra.mxu0 %v119
    %602 = vmatprep.subr.mxu0 0.0
    %603 = vmatpush1.msra.mxu0 %v120
    %604 = vmatprep.subr.mxu0 0.0
    %605 = vmatpush1.msra.mxu0 %v121
    %606 = vmatprep.subr.mxu0 0.0
    %607 = vmatpush1.msra.mxu0 %v122
    %608 = vmatprep.subr.mxu0 0.0
    %609 = vmatpush1.msra.mxu0 0.0
    %610 = vmatprep.subr.mxu0 0.0
    %611 = vmatpush1.msra.mxu0 0.0
    %612 = vmatprep.subr.mxu0 0.0
    %613 = vmatpush1.msra.mxu0 0.0
    %614 = vmatprep.subr.mxu0 0.0
    %615 = vmatpush1.msra.mxu0 0.0
    %616 = vmatprep.subr.mxu0 0.0
    %617 = vmatpush1.msra.mxu0 0.0
    %618 = vmatprep.subr.mxu0 0.0
    %619 = vmatpush1.msra.mxu0 0.0
    %620 = vmatprep.subr.mxu0 0.0
    %621 = vmatpush1.msra.mxu0 0.0
    %622 = vmatprep.subr.mxu0 0.0
    %623 = vmatpush1.msra.mxu0 0.0
    %624 = vmatprep.subr.mxu0 0.0
    %625 = vmatpush1.msra.mxu0 0.0
    %626 = vmatprep.subr.mxu0 0.0
    %627 = vmatpush1.msra.mxu0 0.0
    %628 = vmatprep.subr.mxu0 0.0
    %629 = vmatpush1.msra.mxu0 0.0
    %630 = vmatprep.subr.mxu0 0.0
    %631 = vmatpush1.msra.mxu0 0.0
    %632 = vmatprep.subr.mxu0 0.0
    %633 = vmatpush1.msra.mxu0 0.0
    %634 = vmatprep.subr.mxu0 0.0
    %635 = vmatpush1.msra.mxu0 0.0
    %636 = vmatprep.subr.mxu0 0.0
    %637 = vmatpush1.msra.mxu0 0.0
    %638 = vmatprep.subr.mxu0 0.0
    %639 = vmatpush1.msra.mxu0 0.0
    %640 = vmatprep.subr.mxu0 0.0
    %641 = vmatpush1.msra.mxu0 0.0
    %642 = vmatprep.subr.mxu0 0.0
    %643 = vmatpush1.msra.mxu0 0.0
    %644 = vmatprep.subr.mxu0 0.0
    %645 = vmatpush1.msra.mxu0 0.0
    %646 = vmatprep.subr.mxu0 0.0
    %647 = vmatpush1.msra.mxu0 0.0
    %648 = vmatprep.subr.mxu0 0.0
    %649 = vmatpush1.msra.mxu0 0.0
    %650 = vmatprep.subr.mxu0 0.0
    %651 = vmatpush1.msra.mxu0 0.0
    %652 = vmatprep.subr.mxu0 0.0
    %653 = vmatpush1.msra.mxu0 0.0
    %654 = vmatprep.subr.mxu0 0.0
    %655 = vmatpush1.msra.mxu0 0.0
    %656 = vmatprep.subr.mxu0 0.0
    %657 = vmatpush1.msra.mxu0 0.0
    %658 = vmatprep.subr.mxu0 0.0
    %659 = vmatpush1.msra.mxu0 0.0
    %660 = vmatprep.subr.mxu0 0.0
    %661 = vmatpush1.msra.mxu0 0.0
    %662 = vmatprep.subr.mxu0 0.0
    %663 = vmatpush1.msra.mxu0 0.0
    %664 = vmatprep.mubr.f32.mxu0 0.0
    %665 = vmatmul.mubr.f32.gmra.mrb[0].mxu0 %v598
    %v666 = vpop.f32.mrb[0].mxu0
    %v667 = vadd.f32 %v596, %v666
    %v668 = vpop.f32.mrb[0].mxu0
    %669 = vdwg.mxu0
    %v670 = vlaneseq
    %v671 = vshrl.u32 %v670, 7
    %v672 = vsub.s32 0, %v671
    %v673 = vrot.slane %v128, %v672
    %674 = vmatprep.subr.mxu0 0.0
    %675 = vmatpush1.msra.mxu0 %v123
    %676 = vmatprep.subr.mxu0 0.0
    %677 = vmatpush1.msra.mxu0 %v124
    %678 = vmatprep.subr.mxu0 0.0
    %679 = vmatpush1.msra.mxu0 %v125
    %680 = vmatprep.subr.mxu0 0.0
    %681 = vmatpush1.msra.mxu0 %v126
    %682 = vmatprep.subr.mxu0 0.0
    %683 = vmatpush1.msra.mxu0 0.0
    %684 = vmatprep.subr.mxu0 0.0
    %685 = vmatpush1.msra.mxu0 0.0
    %686 = vmatprep.subr.mxu0 0.0
    %687 = vmatpush1.msra.mxu0 0.0
    %688 = vmatprep.subr.mxu0 0.0
    %689 = vmatpush1.msra.mxu0 0.0
    %690 = vmatprep.subr.mxu0 0.0
    %691 = vmatpush1.msra.mxu0 0.0
    %692 = vmatprep.subr.mxu0 0.0
    %693 = vmatpush1.msra.mxu0 0.0
    %694 = vmatprep.subr.mxu0 0.0
    %695 = vmatpush1.msra.mxu0 0.0
    %696 = vmatprep.subr.mxu0 0.0
    %697 = vmatpush1.msra.mxu0 0.0
    %698 = vmatprep.subr.mxu0 0.0
    %699 = vmatpush1.msra.mxu0 0.0
    %700 = vmatprep.subr.mxu0 0.0
    %701 = vmatpush1.msra.mxu0 0.0
    %702 = vmatprep.subr.mxu0 0.0
    %703 = vmatpush1.msra.mxu0 0.0
    %704 = vmatprep.subr.mxu0 0.0
    %705 = vmatpush1.msra.mxu0 0.0
    %706 = vmatprep.subr.mxu0 0.0
    %707 = vmatpush1.msra.mxu0 0.0
    %708 = vmatprep.subr.mxu0 0.0
    %709 = vmatpush1.msra.mxu0 0.0
    %710 = vmatprep.subr.mxu0 0.0
    %711 = vmatpush1.msra.mxu0 0.0
    %712 = vmatprep.subr.mxu0 0.0
    %713 = vmatpush1.msra.mxu0 0.0
    %714 = vmatprep.subr.mxu0 0.0
    %715 = vmatpush1.msra.mxu0 0.0
    %716 = vmatprep.subr.mxu0 0.0
    %717 = vmatpush1.msra.mxu0 0.0
    %718 = vmatprep.subr.mxu0 0.0
    %719 = vmatpush1.msra.mxu0 0.0
    %720 = vmatprep.subr.mxu0 0.0
    %721 = vmatpush1.msra.mxu0 0.0
    %722 = vmatprep.subr.mxu0 0.0
    %723 = vmatpush1.msra.mxu0 0.0
    %724 = vmatprep.subr.mxu0 0.0
    %725 = vmatpush1.msra.mxu0 0.0
    %726 = vmatprep.subr.mxu0 0.0
    %727 = vmatpush1.msra.mxu0 0.0
    %728 = vmatprep.subr.mxu0 0.0
    %729 = vmatpush1.msra.mxu0 0.0
    %730 = vmatprep.subr.mxu0 0.0
    %731 = vmatpush1.msra.mxu0 0.0
    %732 = vmatprep.subr.mxu0 0.0
    %733 = vmatpush1.msra.mxu0 0.0
    %734 = vmatprep.subr.mxu0 0.0
    %735 = vmatpush1.msra.mxu0 0.0
    %736 = vmatprep.subr.mxu0 0.0
    %737 = vmatpush1.msra.mxu0 0.0
    %738 = vmatprep.mubr.f32.mxu0 0.0
    %739 = vmatmul.mubr.f32.gmra.mrb[0].mxu0 %v598
    %v740 = vpop.f32.mrb[0].mxu0
    %v741 = vadd.f32 %v673, %v740
    %v742 = vpop.f32.mrb[0].mxu0
    %743 = vdwg.mxu0
    %v744 = vadd.f32 %v667, 2.0
    %v745 = vmin.f32 %v744, 0.0
    %v746 = vand.u32 2147483647, %v744
    %v747 = vsub.f32 0.0, %v746
    %v748 = vmul.f32 %v747, 1.442695
    %v749 = vpow.pop %v748
    %v750 = vadd.f32 %v749, 1.0
    %v751 = vlog2.pop %v750
    %v752 = vmul.f32 %v751, 0.6931472
    %v753 = vsub.f32 %v745, %v752
    %v754 = vmul.f32 %v753, 1.442695
    %v755 = vpow.pop %v754
    %v756 = vadd.f32 %v426, %v741
    %v757 = vmul.f32 %v756, %v755
    %v758 = vsel %vm24, %v753, 0.0
    %759 = vadd.xlane.f32.xlu0 %v758
    %v760 = vpop.xlane.xlu0 %759
    %v761 = vadd.f32 %v760, 0.0
    %v762 = vsel %vm24, %v280, 0.0
    %v763 = vrot.slane %v762, 4
    %v764 = vadd.f32 %v762, %v763
    %v765 = vrot.slane %v764, 2
    %v766 = vadd.f32 %v764, %v765
    %v767 = vrot.slane %v766, 1
    %v768 = vadd.f32 %v766, %v767
    %v769 = vmul.f32 %v768, 0.5
    %v770 = vsub.f32 %v280, %v769
    %v771 = vmul.f32 %v770, %v770
    %v772 = vsel %vm24, %v771, 0.0
    %v773 = vrot.slane %v772, 4
    %v774 = vadd.f32 %v772, %v773
    %v775 = vrot.slane %v774, 2
    %v776 = vadd.f32 %v774, %v775
    %v777 = vrot.slane %v776, 1
    %v778 = vadd.f32 %v776, %v777
    %v779 = vrsqrt.pop %v778
    %v780 = vmul.f32 %v778, %v779
    %vm781 = vcmp.eq.f32.partialorder %v778, inf
    %v782 = vsel %vm781, %v778, %v780
    %vm783 = vcmp.eq.f32.partialorder %v778, 0.0
    %v784 = vand.u32 %v778, 2147483648
    %v785 = vsel %vm783, %v784, %v782
    %v786 = vadd.f32 %v785, 1e-06
    %v787 = vrcp.pop %v786
    %v788 = vmul.f32 %v770, %v787
    %v789 = vlog2.pop %v786
    %v790 = vmul.f32 %v789, 0.6931472
    %v791 = vsel %vm54, %v790, 0.0
    %792 = vadd.xlane.f32.xlu0 %v791
    %v793 = vpop.xlane.xlu0 %792
    %v794 = vrot.slane %v793, 4
    %v795 = vadd.f32 %v793, %v794
    %v796 = vrot.slane %v795, 2
    %v797 = vadd.f32 %v795, %v796
    %v798 = vrot.slane %v797, 1
    %v799 = vadd.f32 %v797, %v798
    %s800 = vtos %v799
    %s801 = ssub.f32 0.0, %s800
    %v802 = vsel %vm24, %v757, 0.0
    %v803 = vrot.slane %v802, 4
    %v804 = vadd.f32 %v802, %v803
    %v805 = vrot.slane %v804, 2
    %v806 = vadd.f32 %v804, %v805
    %v807 = vrot.slane %v806, 1
    %v808 = vadd.f32 %v806, %v807
    %v809 = vmul.f32 %v808, 0.5
    %v810 = vsub.f32 %v757, %v809
    %v811 = vmul.f32 %v810, %v810
    %v812 = vsel %vm24, %v811, 0.0
    %v813 = vrot.slane %v812, 4
    %v814 = vadd.f32 %v812, %v813
    %v815 = vrot.slane %v814, 2
    %v816 = vadd.f32 %v814, %v815
    %v817 = vrot.slane %v816, 1
    %v818 = vadd.f32 %v816, %v817
    %v819 = vrsqrt.pop %v818
    %v820 = vmul.f32 %v818, %v819
    %vm821 = vcmp.eq.f32.partialorder %v818, inf
    %v822 = vsel %vm821, %v818, %v820
    %vm823 = vcmp.eq.f32.partialorder %v818, 0.0
    %v824 = vand.u32 %v818, 2147483648
    %v825 = vsel %vm823, %v824, %v822
    %v826 = vadd.f32 %v825, 1e-06
    %v827 = vrcp.pop %v826
    %v828 = vmul.f32 %v810, %v827
    %v829 = vlog2.pop %v826
    %v830 = vmul.f32 %v829, 0.6931472
    %v831 = vsel %vm54, %v830, 0.0
    %832 = vadd.xlane.f32.xlu0 %v831
    %v833 = vpop.xlane.xlu0 %832
    %v834 = vrot.slane %v833, 4
    %v835 = vadd.f32 %v833, %v834
    %v836 = vrot.slane %v835, 2
    %v837 = vadd.f32 %v835, %v836
    %v838 = vrot.slane %v837, 1
    %v839 = vadd.f32 %v837, %v838
    %s840 = vtos %v839
    %s841 = ssub.f32 0.0, %s840
    %s842 = sadd.f32 %s107, %s801
    %s843 = sadd.f32 %s842, %s841
    %s844 = scalar_lea.vmem %s1, 56
    %v845 = vld [vmem:[%s844] sm:$0xff]
    %v846 = vld [vmem:[%s844 + $0x8] sm:$0xff]
    %v847 = vld [vmem:[%s844 + $0x10] sm:$0xff]
    %v848 = vld [vmem:[%s844 + $0x18] sm:$0xff]
    %v849 = vld [vmem:[%s844 + $0x20] sm:$0xff]
    %v850 = vld [vmem:[%s844 + $0x28] sm:$0xff]
    %v851 = vld [vmem:[%s844 + $0x30] sm:$0xff]
    %s852 = scalar_lea.vmem %s2, 112
    %v853 = vld [vmem:[%s852] sm:$0xff]
    %v854 = vld [vmem:[%s852 + $0x8] sm:$0xff]
    %v855 = vld [vmem:[%s852 + $0x10] sm:$0xff]
    %v856 = vld [vmem:[%s852 + $0x18] sm:$0xff]
    %v857 = vld [vmem:[%s852 + $0x20] sm:$0xff]
    %v858 = vld [vmem:[%s852 + $0x28] sm:$0xff]
    %v859 = vld [vmem:[%s852 + $0x30] sm:$0xff]
    %v860 = vld [vmem:[%s852 + $0x38] sm:$0xff]
    %v861 = vld [vmem:[%s852 + $0x40] sm:$0xff]
    %v862 = vld [vmem:[%s852 + $0x48] sm:$0xff]
    %v863 = vld [vmem:[%s852 + $0x50] sm:$0xff]
    %v864 = vld [vmem:[%s852 + $0x58] sm:$0xff]
    %v865 = vld [vmem:[%s852 + $0x60] sm:$0xff]
    %v866 = vld [vmem:[%s852 + $0x68] sm:$0xff]
    %v868 = vsel %vm129, %v828, 0
    %v871 = vsel %vm133, %v855, 0
    %873 = vmatprep.subr.mxu0 0.0
    %874 = vmatpush1.msra.mxu0 %v871
    %875 = vmatprep.subr.mxu0 0.0
    %876 = vmatpush1.msra.mxu0 0.0
    %877 = vmatprep.subr.mxu0 0.0
    %878 = vmatpush1.msra.mxu0 0.0
    %879 = vmatprep.subr.mxu0 0.0
    %880 = vmatpush1.msra.mxu0 0.0
    %881 = vmatprep.subr.mxu0 0.0
    %882 = vmatpush1.msra.mxu0 0.0
    %883 = vmatprep.subr.mxu0 0.0
    %884 = vmatpush1.msra.mxu0 0.0
    %885 = vmatprep.subr.mxu0 0.0
    %886 = vmatpush1.msra.mxu0 0.0
    %887 = vmatprep.subr.mxu0 0.0
    %888 = vmatpush1.msra.mxu0 0.0
    %889 = vmatprep.subr.mxu0 0.0
    %890 = vmatpush1.msra.mxu0 0.0
    %891 = vmatprep.subr.mxu0 0.0
    %892 = vmatpush1.msra.mxu0 0.0
    %893 = vmatprep.subr.mxu0 0.0
    %894 = vmatpush1.msra.mxu0 0.0
    %895 = vmatprep.subr.mxu0 0.0
    %896 = vmatpush1.msra.mxu0 0.0
    %897 = vmatprep.subr.mxu0 0.0
    %898 = vmatpush1.msra.mxu0 0.0
    %899 = vmatprep.subr.mxu0 0.0
    %900 = vmatpush1.msra.mxu0 0.0
    %901 = vmatprep.subr.mxu0 0.0
    %902 = vmatpush1.msra.mxu0 0.0
    %903 = vmatprep.subr.mxu0 0.0
    %904 = vmatpush1.msra.mxu0 0.0
    %905 = vmatprep.subr.mxu0 0.0
    %906 = vmatpush1.msra.mxu0 0.0
    %907 = vmatprep.subr.mxu0 0.0
    %908 = vmatpush1.msra.mxu0 0.0
    %909 = vmatprep.subr.mxu0 0.0
    %910 = vmatpush1.msra.mxu0 0.0
    %911 = vmatprep.subr.mxu0 0.0
    %912 = vmatpush1.msra.mxu0 0.0
    %913 = vmatprep.subr.mxu0 0.0
    %914 = vmatpush1.msra.mxu0 0.0
    %915 = vmatprep.subr.mxu0 0.0
    %916 = vmatpush1.msra.mxu0 0.0
    %917 = vmatprep.subr.mxu0 0.0
    %918 = vmatpush1.msra.mxu0 0.0
    %919 = vmatprep.subr.mxu0 0.0
    %920 = vmatpush1.msra.mxu0 0.0
    %921 = vmatprep.subr.mxu0 0.0
    %922 = vmatpush1.msra.mxu0 0.0
    %923 = vmatprep.subr.mxu0 0.0
    %924 = vmatpush1.msra.mxu0 0.0
    %925 = vmatprep.subr.mxu0 0.0
    %926 = vmatpush1.msra.mxu0 0.0
    %927 = vmatprep.subr.mxu0 0.0
    %928 = vmatpush1.msra.mxu0 0.0
    %929 = vmatprep.subr.mxu0 0.0
    %930 = vmatpush1.msra.mxu0 0.0
    %931 = vmatprep.subr.mxu0 0.0
    %932 = vmatpush1.msra.mxu0 0.0
    %933 = vmatprep.subr.mxu0 0.0
    %934 = vmatpush1.msra.mxu0 0.0
    %935 = vmatprep.subr.mxu0 0.0
    %936 = vmatpush1.msra.mxu0 0.0
    %937 = vmatprep.mubr.f32.mxu0 0.0
    %938 = vmatmul.mubr.f32.gmra.mrb[0].mxu0 %v868
    %v939 = vpop.f32.mrb[0].mxu0
    %v940 = vadd.f32 0.0, %v939
    %v941 = vpop.f32.mrb[0].mxu0
    %942 = vdwg.mxu0
    %v944 = vsel %vm129, %v788, 0
    %v947 = vsel %vm133, %v853, 0
    %949 = vmatprep.subr.mxu0 0.0
    %950 = vmatpush1.msra.mxu0 %v947
    %951 = vmatprep.subr.mxu0 0.0
    %952 = vmatpush1.msra.mxu0 0.0
    %953 = vmatprep.subr.mxu0 0.0
    %954 = vmatpush1.msra.mxu0 0.0
    %955 = vmatprep.subr.mxu0 0.0
    %956 = vmatpush1.msra.mxu0 0.0
    %957 = vmatprep.subr.mxu0 0.0
    %958 = vmatpush1.msra.mxu0 0.0
    %959 = vmatprep.subr.mxu0 0.0
    %960 = vmatpush1.msra.mxu0 0.0
    %961 = vmatprep.subr.mxu0 0.0
    %962 = vmatpush1.msra.mxu0 0.0
    %963 = vmatprep.subr.mxu0 0.0
    %964 = vmatpush1.msra.mxu0 0.0
    %965 = vmatprep.subr.mxu0 0.0
    %966 = vmatpush1.msra.mxu0 0.0
    %967 = vmatprep.subr.mxu0 0.0
    %968 = vmatpush1.msra.mxu0 0.0
    %969 = vmatprep.subr.mxu0 0.0
    %970 = vmatpush1.msra.mxu0 0.0
    %971 = vmatprep.subr.mxu0 0.0
    %972 = vmatpush1.msra.mxu0 0.0
    %973 = vmatprep.subr.mxu0 0.0
    %974 = vmatpush1.msra.mxu0 0.0
    %975 = vmatprep.subr.mxu0 0.0
    %976 = vmatpush1.msra.mxu0 0.0
    %977 = vmatprep.subr.mxu0 0.0
    %978 = vmatpush1.msra.mxu0 0.0
    %979 = vmatprep.subr.mxu0 0.0
    %980 = vmatpush1.msra.mxu0 0.0
    %981 = vmatprep.subr.mxu0 0.0
    %982 = vmatpush1.msra.mxu0 0.0
    %983 = vmatprep.subr.mxu0 0.0
    %984 = vmatpush1.msra.mxu0 0.0
    %985 = vmatprep.subr.mxu0 0.0
    %986 = vmatpush1.msra.mxu0 0.0
    %987 = vmatprep.subr.mxu0 0.0
    %988 = vmatpush1.msra.mxu0 0.0
    %989 = vmatprep.subr.mxu0 0.0
    %990 = vmatpush1.msra.mxu0 0.0
    %991 = vmatprep.subr.mxu0 0.0
    %992 = vmatpush1.msra.mxu0 0.0
    %993 = vmatprep.subr.mxu0 0.0
    %994 = vmatpush1.msra.mxu0 0.0
    %995 = vmatprep.subr.mxu0 0.0
    %996 = vmatpush1.msra.mxu0 0.0
    %997 = vmatprep.subr.mxu0 0.0
    %998 = vmatpush1.msra.mxu0 0.0
    %999 = vmatprep.subr.mxu0 0.0
    %1000 = vmatpush1.msra.mxu0 0.0
    %1001 = vmatprep.subr.mxu0 0.0
    %1002 = vmatpush1.msra.mxu0 0.0
    %1003 = vmatprep.subr.mxu0 0.0
    %1004 = vmatpush1.msra.mxu0 0.0
    %1005 = vmatprep.subr.mxu0 0.0
    %1006 = vmatpush1.msra.mxu0 0.0
    %1007 = vmatprep.subr.mxu0 0.0
    %1008 = vmatpush1.msra.mxu0 0.0
    %1009 = vmatprep.subr.mxu0 0.0
    %1010 = vmatpush1.msra.mxu0 0.0
    %1011 = vmatprep.subr.mxu0 0.0
    %1012 = vmatpush1.msra.mxu0 0.0
    %1013 = vmatprep.mubr.f32.mxu0 0.0
    %1014 = vmatmul.mubr.f32.gmra.mrb[0].mxu0 %v944
    %v1015 = vpop.f32.mrb[0].mxu0
    %v1016 = vadd.f32 %v940, %v1015
    %v1017 = vpop.f32.mrb[0].mxu0
    %1018 = vdwg.mxu0
    %v1020 = vsel %vm133, %v856, 0
    %1022 = vmatprep.subr.mxu0 0.0
    %1023 = vmatpush1.msra.mxu0 %v1020
    %1024 = vmatprep.subr.mxu0 0.0
    %1025 = vmatpush1.msra.mxu0 0.0
    %1026 = vmatprep.subr.mxu0 0.0
    %1027 = vmatpush1.msra.mxu0 0.0
    %1028 = vmatprep.subr.mxu0 0.0
    %1029 = vmatpush1.msra.mxu0 0.0
    %1030 = vmatprep.subr.mxu0 0.0
    %1031 = vmatpush1.msra.mxu0 0.0
    %1032 = vmatprep.subr.mxu0 0.0
    %1033 = vmatpush1.msra.mxu0 0.0
    %1034 = vmatprep.subr.mxu0 0.0
    %1035 = vmatpush1.msra.mxu0 0.0
    %1036 = vmatprep.subr.mxu0 0.0
    %1037 = vmatpush1.msra.mxu0 0.0
    %1038 = vmatprep.subr.mxu0 0.0
    %1039 = vmatpush1.msra.mxu0 0.0
    %1040 = vmatprep.subr.mxu0 0.0
    %1041 = vmatpush1.msra.mxu0 0.0
    %1042 = vmatprep.subr.mxu0 0.0
    %1043 = vmatpush1.msra.mxu0 0.0
    %1044 = vmatprep.subr.mxu0 0.0
    %1045 = vmatpush1.msra.mxu0 0.0
    %1046 = vmatprep.subr.mxu0 0.0
    %1047 = vmatpush1.msra.mxu0 0.0
    %1048 = vmatprep.subr.mxu0 0.0
    %1049 = vmatpush1.msra.mxu0 0.0
    %1050 = vmatprep.subr.mxu0 0.0
    %1051 = vmatpush1.msra.mxu0 0.0
    %1052 = vmatprep.subr.mxu0 0.0
    %1053 = vmatpush1.msra.mxu0 0.0
    %1054 = vmatprep.subr.mxu0 0.0
    %1055 = vmatpush1.msra.mxu0 0.0
    %1056 = vmatprep.subr.mxu0 0.0
    %1057 = vmatpush1.msra.mxu0 0.0
    %1058 = vmatprep.subr.mxu0 0.0
    %1059 = vmatpush1.msra.mxu0 0.0
    %1060 = vmatprep.subr.mxu0 0.0
    %1061 = vmatpush1.msra.mxu0 0.0
    %1062 = vmatprep.subr.mxu0 0.0
    %1063 = vmatpush1.msra.mxu0 0.0
    %1064 = vmatprep.subr.mxu0 0.0
    %1065 = vmatpush1.msra.mxu0 0.0
    %1066 = vmatprep.subr.mxu0 0.0
    %1067 = vmatpush1.msra.mxu0 0.0
    %1068 = vmatprep.subr.mxu0 0.0
    %1069 = vmatpush1.msra.mxu0 0.0
    %1070 = vmatprep.subr.mxu0 0.0
    %1071 = vmatpush1.msra.mxu0 0.0
    %1072 = vmatprep.subr.mxu0 0.0
    %1073 = vmatpush1.msra.mxu0 0.0
    %1074 = vmatprep.subr.mxu0 0.0
    %1075 = vmatpush1.msra.mxu0 0.0
    %1076 = vmatprep.subr.mxu0 0.0
    %1077 = vmatpush1.msra.mxu0 0.0
    %1078 = vmatprep.subr.mxu0 0.0
    %1079 = vmatpush1.msra.mxu0 0.0
    %1080 = vmatprep.subr.mxu0 0.0
    %1081 = vmatpush1.msra.mxu0 0.0
    %1082 = vmatprep.subr.mxu0 0.0
    %1083 = vmatpush1.msra.mxu0 0.0
    %1084 = vmatprep.subr.mxu0 0.0
    %1085 = vmatpush1.msra.mxu0 0.0
    %1086 = vmatprep.mubr.f32.mxu0 0.0
    %1087 = vmatmul.mubr.f32.gmra.mrb[0].mxu0 %v868
    %v1088 = vpop.f32.mrb[0].mxu0
    %v1089 = vadd.f32 0.0, %v1088
    %v1090 = vpop.f32.mrb[0].mxu0
    %1091 = vdwg.mxu0
    %v1093 = vsel %vm133, %v854, 0
    %1095 = vmatprep.subr.mxu0 0.0
    %1096 = vmatpush1.msra.mxu0 %v1093
    %1097 = vmatprep.subr.mxu0 0.0
    %1098 = vmatpush1.msra.mxu0 0.0
    %1099 = vmatprep.subr.mxu0 0.0
    %1100 = vmatpush1.msra.mxu0 0.0
    %1101 = vmatprep.subr.mxu0 0.0
    %1102 = vmatpush1.msra.mxu0 0.0
    %1103 = vmatprep.subr.mxu0 0.0
    %1104 = vmatpush1.msra.mxu0 0.0
    %1105 = vmatprep.subr.mxu0 0.0
    %1106 = vmatpush1.msra.mxu0 0.0
    %1107 = vmatprep.subr.mxu0 0.0
    %1108 = vmatpush1.msra.mxu0 0.0
    %1109 = vmatprep.subr.mxu0 0.0
    %1110 = vmatpush1.msra.mxu0 0.0
    %1111 = vmatprep.subr.mxu0 0.0
    %1112 = vmatpush1.msra.mxu0 0.0
    %1113 = vmatprep.subr.mxu0 0.0
    %1114 = vmatpush1.msra.mxu0 0.0
    %1115 = vmatprep.subr.mxu0 0.0
    %1116 = vmatpush1.msra.mxu0 0.0
    %1117 = vmatprep.subr.mxu0 0.0
    %1118 = vmatpush1.msra.mxu0 0.0
    %1119 = vmatprep.subr.mxu0 0.0
    %1120 = vmatpush1.msra.mxu0 0.0
    %1121 = vmatprep.subr.mxu0 0.0
    %1122 = vmatpush1.msra.mxu0 0.0
    %1123 = vmatprep.subr.mxu0 0.0
    %1124 = vmatpush1.msra.mxu0 0.0
    %1125 = vmatprep.subr.mxu0 0.0
    %1126 = vmatpush1.msra.mxu0 0.0
    %1127 = vmatprep.subr.mxu0 0.0
    %1128 = vmatpush1.msra.mxu0 0.0
    %1129 = vmatprep.subr.mxu0 0.0
    %1130 = vmatpush1.msra.mxu0 0.0
    %1131 = vmatprep.subr.mxu0 0.0
    %1132 = vmatpush1.msra.mxu0 0.0
    %1133 = vmatprep.subr.mxu0 0.0
    %1134 = vmatpush1.msra.mxu0 0.0
    %1135 = vmatprep.subr.mxu0 0.0
    %1136 = vmatpush1.msra.mxu0 0.0
    %1137 = vmatprep.subr.mxu0 0.0
    %1138 = vmatpush1.msra.mxu0 0.0
    %1139 = vmatprep.subr.mxu0 0.0
    %1140 = vmatpush1.msra.mxu0 0.0
    %1141 = vmatprep.subr.mxu0 0.0
    %1142 = vmatpush1.msra.mxu0 0.0
    %1143 = vmatprep.subr.mxu0 0.0
    %1144 = vmatpush1.msra.mxu0 0.0
    %1145 = vmatprep.subr.mxu0 0.0
    %1146 = vmatpush1.msra.mxu0 0.0
    %1147 = vmatprep.subr.mxu0 0.0
    %1148 = vmatpush1.msra.mxu0 0.0
    %1149 = vmatprep.subr.mxu0 0.0
    %1150 = vmatpush1.msra.mxu0 0.0
    %1151 = vmatprep.subr.mxu0 0.0
    %1152 = vmatpush1.msra.mxu0 0.0
    %1153 = vmatprep.subr.mxu0 0.0
    %1154 = vmatpush1.msra.mxu0 0.0
    %1155 = vmatprep.subr.mxu0 0.0
    %1156 = vmatpush1.msra.mxu0 0.0
    %1157 = vmatprep.subr.mxu0 0.0
    %1158 = vmatpush1.msra.mxu0 0.0
    %1159 = vmatprep.mubr.f32.mxu0 0.0
    %1160 = vmatmul.mubr.f32.gmra.mrb[0].mxu0 %v944
    %v1161 = vpop.f32.mrb[0].mxu0
    %v1162 = vadd.f32 %v1089, %v1161
    %v1163 = vpop.f32.mrb[0].mxu0
    %1164 = vdwg.mxu0
    %v1165 = vlaneseq
    %v1166 = vshrl.u32 %v1165, 7
    %v1167 = vsub.s32 0, %v1166
    %v1168 = vrot.slane %v846, %v1167
    %v1170 = vsel %vm129, %v1162, 0
    %v1173 = vsel %vm133, %v845, 0
    %1175 = vmatprep.subr.mxu0 0.0
    %1176 = vmatpush1.msra.mxu0 %v1173
    %1177 = vmatprep.subr.mxu0 0.0
    %1178 = vmatpush1.msra.mxu0 0.0
    %1179 = vmatprep.subr.mxu0 0.0
    %1180 = vmatpush1.msra.mxu0 0.0
    %1181 = vmatprep.subr.mxu0 0.0
    %1182 = vmatpush1.msra.mxu0 0.0
    %1183 = vmatprep.subr.mxu0 0.0
    %1184 = vmatpush1.msra.mxu0 0.0
    %1185 = vmatprep.subr.mxu0 0.0
    %1186 = vmatpush1.msra.mxu0 0.0
    %1187 = vmatprep.subr.mxu0 0.0
    %1188 = vmatpush1.msra.mxu0 0.0
    %1189 = vmatprep.subr.mxu0 0.0
    %1190 = vmatpush1.msra.mxu0 0.0
    %1191 = vmatprep.subr.mxu0 0.0
    %1192 = vmatpush1.msra.mxu0 0.0
    %1193 = vmatprep.subr.mxu0 0.0
    %1194 = vmatpush1.msra.mxu0 0.0
    %1195 = vmatprep.subr.mxu0 0.0
    %1196 = vmatpush1.msra.mxu0 0.0
    %1197 = vmatprep.subr.mxu0 0.0
    %1198 = vmatpush1.msra.mxu0 0.0
    %1199 = vmatprep.subr.mxu0 0.0
    %1200 = vmatpush1.msra.mxu0 0.0
    %1201 = vmatprep.subr.mxu0 0.0
    %1202 = vmatpush1.msra.mxu0 0.0
    %1203 = vmatprep.subr.mxu0 0.0
    %1204 = vmatpush1.msra.mxu0 0.0
    %1205 = vmatprep.subr.mxu0 0.0
    %1206 = vmatpush1.msra.mxu0 0.0
    %1207 = vmatprep.subr.mxu0 0.0
    %1208 = vmatpush1.msra.mxu0 0.0
    %1209 = vmatprep.subr.mxu0 0.0
    %1210 = vmatpush1.msra.mxu0 0.0
    %1211 = vmatprep.subr.mxu0 0.0
    %1212 = vmatpush1.msra.mxu0 0.0
    %1213 = vmatprep.subr.mxu0 0.0
    %1214 = vmatpush1.msra.mxu0 0.0
    %1215 = vmatprep.subr.mxu0 0.0
    %1216 = vmatpush1.msra.mxu0 0.0
    %1217 = vmatprep.subr.mxu0 0.0
    %1218 = vmatpush1.msra.mxu0 0.0
    %1219 = vmatprep.subr.mxu0 0.0
    %1220 = vmatpush1.msra.mxu0 0.0
    %1221 = vmatprep.subr.mxu0 0.0
    %1222 = vmatpush1.msra.mxu0 0.0
    %1223 = vmatprep.subr.mxu0 0.0
    %1224 = vmatpush1.msra.mxu0 0.0
    %1225 = vmatprep.subr.mxu0 0.0
    %1226 = vmatpush1.msra.mxu0 0.0
    %1227 = vmatprep.subr.mxu0 0.0
    %1228 = vmatpush1.msra.mxu0 0.0
    %1229 = vmatprep.subr.mxu0 0.0
    %1230 = vmatpush1.msra.mxu0 0.0
    %1231 = vmatprep.subr.mxu0 0.0
    %1232 = vmatpush1.msra.mxu0 0.0
    %1233 = vmatprep.subr.mxu0 0.0
    %1234 = vmatpush1.msra.mxu0 0.0
    %1235 = vmatprep.subr.mxu0 0.0
    %1236 = vmatpush1.msra.mxu0 0.0
    %1237 = vmatprep.subr.mxu0 0.0
    %1238 = vmatpush1.msra.mxu0 0.0
    %1239 = vmatprep.mubr.f32.mxu0 0.0
    %1240 = vmatmul.mubr.f32.gmra.mrb[0].mxu0 %v1170
    %v1241 = vpop.f32.mrb[0].mxu0
    %v1242 = vadd.f32 %v1168, %v1241
    %v1243 = vpop.f32.mrb[0].mxu0
    %1244 = vdwg.mxu0
    %vm1245 = vcmp.gt.f32.partialorder %v1242, 0.0
    %v1246 = vmul.f32 %v1242, 0.01
    %v1247 = vsel %vm1245, %v1242, %v1246
    %v1248 = vlaneseq
    %v1249 = vshrl.u32 %v1248, 7
    %v1250 = vsub.s32 0, %v1249
    %v1251 = vrot.slane %v851, %v1250
    %v1253 = vsel %vm516, %v1247, 0
    %1255 = vmatprep.subr.mxu0 0.0
    %1256 = vmatpush1.msra.mxu0 %v847
    %1257 = vmatprep.subr.mxu0 0.0
    %1258 = vmatpush1.msra.mxu0 %v848
    %1259 = vmatprep.subr.mxu0 0.0
    %1260 = vmatpush1.msra.mxu0 %v849
    %1261 = vmatprep.subr.mxu0 0.0
    %1262 = vmatpush1.msra.mxu0 %v850
    %1263 = vmatprep.subr.mxu0 0.0
    %1264 = vmatpush1.msra.mxu0 0.0
    %1265 = vmatprep.subr.mxu0 0.0
    %1266 = vmatpush1.msra.mxu0 0.0
    %1267 = vmatprep.subr.mxu0 0.0
    %1268 = vmatpush1.msra.mxu0 0.0
    %1269 = vmatprep.subr.mxu0 0.0
    %1270 = vmatpush1.msra.mxu0 0.0
    %1271 = vmatprep.subr.mxu0 0.0
    %1272 = vmatpush1.msra.mxu0 0.0
    %1273 = vmatprep.subr.mxu0 0.0
    %1274 = vmatpush1.msra.mxu0 0.0
    %1275 = vmatprep.subr.mxu0 0.0
    %1276 = vmatpush1.msra.mxu0 0.0
    %1277 = vmatprep.subr.mxu0 0.0
    %1278 = vmatpush1.msra.mxu0 0.0
    %1279 = vmatprep.subr.mxu0 0.0
    %1280 = vmatpush1.msra.mxu0 0.0
    %1281 = vmatprep.subr.mxu0 0.0
    %1282 = vmatpush1.msra.mxu0 0.0
    %1283 = vmatprep.subr.mxu0 0.0
    %1284 = vmatpush1.msra.mxu0 0.0
    %1285 = vmatprep.subr.mxu0 0.0
    %1286 = vmatpush1.msra.mxu0 0.0
    %1287 = vmatprep.subr.mxu0 0.0
    %1288 = vmatpush1.msra.mxu0 0.0
    %1289 = vmatprep.subr.mxu0 0.0
    %1290 = vmatpush1.msra.mxu0 0.0
    %1291 = vmatprep.subr.mxu0 0.0
    %1292 = vmatpush1.msra.mxu0 0.0
    %1293 = vmatprep.subr.mxu0 0.0
    %1294 = vmatpush1.msra.mxu0 0.0
    %1295 = vmatprep.subr.mxu0 0.0
    %1296 = vmatpush1.msra.mxu0 0.0
    %1297 = vmatprep.subr.mxu0 0.0
    %1298 = vmatpush1.msra.mxu0 0.0
    %1299 = vmatprep.subr.mxu0 0.0
    %1300 = vmatpush1.msra.mxu0 0.0
    %1301 = vmatprep.subr.mxu0 0.0
    %1302 = vmatpush1.msra.mxu0 0.0
    %1303 = vmatprep.subr.mxu0 0.0
    %1304 = vmatpush1.msra.mxu0 0.0
    %1305 = vmatprep.subr.mxu0 0.0
    %1306 = vmatpush1.msra.mxu0 0.0
    %1307 = vmatprep.subr.mxu0 0.0
    %1308 = vmatpush1.msra.mxu0 0.0
    %1309 = vmatprep.subr.mxu0 0.0
    %1310 = vmatpush1.msra.mxu0 0.0
    %1311 = vmatprep.subr.mxu0 0.0
    %1312 = vmatpush1.msra.mxu0 0.0
    %1313 = vmatprep.subr.mxu0 0.0
    %1314 = vmatpush1.msra.mxu0 0.0
    %1315 = vmatprep.subr.mxu0 0.0
    %1316 = vmatpush1.msra.mxu0 0.0
    %1317 = vmatprep.subr.mxu0 0.0
    %1318 = vmatpush1.msra.mxu0 0.0
    %1319 = vmatprep.mubr.f32.mxu0 0.0
    %1320 = vmatmul.mubr.f32.gmra.mrb[0].mxu0 %v1253
    %v1321 = vpop.f32.mrb[0].mxu0
    %v1322 = vadd.f32 %v1251, %v1321
    %v1323 = vpop.f32.mrb[0].mxu0
    %1324 = vdwg.mxu0
    %vm1325 = vcmp.gt.f32.partialorder %v1322, 0.0
    %v1326 = vmul.f32 %v1322, 0.01
    %v1327 = vsel %vm1325, %v1322, %v1326
    %v1328 = vlaneseq
    %v1329 = vshrl.u32 %v1328, 7
    %v1330 = vsub.s32 0, %v1329
    %v1331 = vrot.slane %v865, %v1330
    %v1333 = vsel %vm516, %v1327, 0
    %1335 = vmatprep.subr.mxu0 0.0
    %1336 = vmatpush1.msra.mxu0 %v857
    %1337 = vmatprep.subr.mxu0 0.0
    %1338 = vmatpush1.msra.mxu0 %v858
    %1339 = vmatprep.subr.mxu0 0.0
    %1340 = vmatpush1.msra.mxu0 %v859
    %1341 = vmatprep.subr.mxu0 0.0
    %1342 = vmatpush1.msra.mxu0 %v860
    %1343 = vmatprep.subr.mxu0 0.0
    %1344 = vmatpush1.msra.mxu0 0.0
    %1345 = vmatprep.subr.mxu0 0.0
    %1346 = vmatpush1.msra.mxu0 0.0
    %1347 = vmatprep.subr.mxu0 0.0
    %1348 = vmatpush1.msra.mxu0 0.0
    %1349 = vmatprep.subr.mxu0 0.0
    %1350 = vmatpush1.msra.mxu0 0.0
    %1351 = vmatprep.subr.mxu0 0.0
    %1352 = vmatpush1.msra.mxu0 0.0
    %1353 = vmatprep.subr.mxu0 0.0
    %1354 = vmatpush1.msra.mxu0 0.0
    %1355 = vmatprep.subr.mxu0 0.0
    %1356 = vmatpush1.msra.mxu0 0.0
    %1357 = vmatprep.subr.mxu0 0.0
    %1358 = vmatpush1.msra.mxu0 0.0
    %1359 = vmatprep.subr.mxu0 0.0
    %1360 = vmatpush1.msra.mxu0 0.0
    %1361 = vmatprep.subr.mxu0 0.0
    %1362 = vmatpush1.msra.mxu0 0.0
    %1363 = vmatprep.subr.mxu0 0.0
    %1364 = vmatpush1.msra.mxu0 0.0
    %1365 = vmatprep.subr.mxu0 0.0
    %1366 = vmatpush1.msra.mxu0 0.0
    %1367 = vmatprep.subr.mxu0 0.0
    %1368 = vmatpush1.msra.mxu0 0.0
    %1369 = vmatprep.subr.mxu0 0.0
    %1370 = vmatpush1.msra.mxu0 0.0
    %1371 = vmatprep.subr.mxu0 0.0
    %1372 = vmatpush1.msra.mxu0 0.0
    %1373 = vmatprep.subr.mxu0 0.0
    %1374 = vmatpush1.msra.mxu0 0.0
    %1375 = vmatprep.subr.mxu0 0.0
    %1376 = vmatpush1.msra.mxu0 0.0
    %1377 = vmatprep.subr.mxu0 0.0
    %1378 = vmatpush1.msra.mxu0 0.0
    %1379 = vmatprep.subr.mxu0 0.0
    %1380 = vmatpush1.msra.mxu0 0.0
    %1381 = vmatprep.subr.mxu0 0.0
    %1382 = vmatpush1.msra.mxu0 0.0
    %1383 = vmatprep.subr.mxu0 0.0
    %1384 = vmatpush1.msra.mxu0 0.0
    %1385 = vmatprep.subr.mxu0 0.0
    %1386 = vmatpush1.msra.mxu0 0.0
    %1387 = vmatprep.subr.mxu0 0.0
    %1388 = vmatpush1.msra.mxu0 0.0
    %1389 = vmatprep.subr.mxu0 0.0
    %1390 = vmatpush1.msra.mxu0 0.0
    %1391 = vmatprep.subr.mxu0 0.0
    %1392 = vmatpush1.msra.mxu0 0.0
    %1393 = vmatprep.subr.mxu0 0.0
    %1394 = vmatpush1.msra.mxu0 0.0
    %1395 = vmatprep.subr.mxu0 0.0
    %1396 = vmatpush1.msra.mxu0 0.0
    %1397 = vmatprep.subr.mxu0 0.0
    %1398 = vmatpush1.msra.mxu0 0.0
    %1399 = vmatprep.mubr.f32.mxu0 0.0
    %1400 = vmatmul.mubr.f32.gmra.mrb[0].mxu0 %v1333
    %v1401 = vpop.f32.mrb[0].mxu0
    %v1402 = vadd.f32 %v1331, %v1401
    %v1403 = vpop.f32.mrb[0].mxu0
    %1404 = vdwg.mxu0
    %v1405 = vlaneseq
    %v1406 = vshrl.u32 %v1405, 7
    %v1407 = vsub.s32 0, %v1406
    %v1408 = vrot.slane %v866, %v1407
    %1409 = vmatprep.subr.mxu0 0.0
    %1410 = vmatpush1.msra.mxu0 %v861
    %1411 = vmatprep.subr.mxu0 0.0
    %1412 = vmatpush1.msra.mxu0 %v862
    %1413 = vmatprep.subr.mxu0 0.0
    %1414 = vmatpush1.msra.mxu0 %v863
    %1415 = vmatprep.subr.mxu0 0.0
    %1416 = vmatpush1.msra.mxu0 %v864
    %1417 = vmatprep.subr.mxu0 0.0
    %1418 = vmatpush1.msra.mxu0 0.0
    %1419 = vmatprep.subr.mxu0 0.0
    %1420 = vmatpush1.msra.mxu0 0.0
    %1421 = vmatprep.subr.mxu0 0.0
    %1422 = vmatpush1.msra.mxu0 0.0
    %1423 = vmatprep.subr.mxu0 0.0
    %1424 = vmatpush1.msra.mxu0 0.0
    %1425 = vmatprep.subr.mxu0 0.0
    %1426 = vmatpush1.msra.mxu0 0.0
    %1427 = vmatprep.subr.mxu0 0.0
    %1428 = vmatpush1.msra.mxu0 0.0
    %1429 = vmatprep.subr.mxu0 0.0
    %1430 = vmatpush1.msra.mxu0 0.0
    %1431 = vmatprep.subr.mxu0 0.0
    %1432 = vmatpush1.msra.mxu0 0.0
    %1433 = vmatprep.subr.mxu0 0.0
    %1434 = vmatpush1.msra.mxu0 0.0
    %1435 = vmatprep.subr.mxu0 0.0
    %1436 = vmatpush1.msra.mxu0 0.0
    %1437 = vmatprep.subr.mxu0 0.0
    %1438 = vmatpush1.msra.mxu0 0.0
    %1439 = vmatprep.subr.mxu0 0.0
    %1440 = vmatpush1.msra.mxu0 0.0
    %1441 = vmatprep.subr.mxu0 0.0
    %1442 = vmatpush1.msra.mxu0 0.0
    %1443 = vmatprep.subr.mxu0 0.0
    %1444 = vmatpush1.msra.mxu0 0.0
    %1445 = vmatprep.subr.mxu0 0.0
    %1446 = vmatpush1.msra.mxu0 0.0
    %1447 = vmatprep.subr.mxu0 0.0
    %1448 = vmatpush1.msra.mxu0 0.0
    %1449 = vmatprep.subr.mxu0 0.0
    %1450 = vmatpush1.msra.mxu0 0.0
    %1451 = vmatprep.subr.mxu0 0.0
    %1452 = vmatpush1.msra.mxu0 0.0
    %1453 = vmatprep.subr.mxu0 0.0
    %1454 = vmatpush1.msra.mxu0 0.0
    %1455 = vmatprep.subr.mxu0 0.0
    %1456 = vmatpush1.msra.mxu0 0.0
    %1457 = vmatprep.subr.mxu0 0.0
    %1458 = vmatpush1.msra.mxu0 0.0
    %1459 = vmatprep.subr.mxu0 0.0
    %1460 = vmatpush1.msra.mxu0 0.0
    %1461 = vmatprep.subr.mxu0 0.0
    %1462 = vmatpush1.msra.mxu0 0.0
    %1463 = vmatprep.subr.mxu0 0.0
    %1464 = vmatpush1.msra.mxu0 0.0
    %1465 = vmatprep.subr.mxu0 0.0
    %1466 = vmatpush1.msra.mxu0 0.0
    %1467 = vmatprep.subr.mxu0 0.0
    %1468 = vmatpush1.msra.mxu0 0.0
    %1469 = vmatprep.subr.mxu0 0.0
    %1470 = vmatpush1.msra.mxu0 0.0
    %1471 = vmatprep.subr.mxu0 0.0
    %1472 = vmatpush1.msra.mxu0 0.0
    %1473 = vmatprep.mubr.f32.mxu0 0.0
    %1474 = vmatmul.mubr.f32.gmra.mrb[0].mxu0 %v1333
    %v1475 = vpop.f32.mrb[0].mxu0
    %v1476 = vadd.f32 %v1408, %v1475
    %v1477 = vpop.f32.mrb[0].mxu0
    %1478 = vdwg.mxu0
    %v1479 = vadd.f32 %v1402, 2.0
    %v1480 = vmin.f32 %v1479, 0.0
    %v1481 = vand.u32 2147483647, %v1479
    %v1482 = vsub.f32 0.0, %v1481
    %v1483 = vmul.f32 %v1482, 1.442695
    %v1484 = vpow.pop %v1483
    %v1485 = vadd.f32 %v1484, 1.0
    %v1486 = vlog2.pop %v1485
    %v1487 = vmul.f32 %v1486, 0.6931472
    %v1488 = vsub.f32 %v1480, %v1487
    %v1489 = vmul.f32 %v1488, 1.442695
    %v1490 = vpow.pop %v1489
    %v1491 = vadd.f32 %v1016, %v1476
    %v1492 = vmul.f32 %v1491, %v1490
    %v1493 = vsel %vm24, %v1488, 0.0
    %1494 = vadd.xlane.f32.xlu0 %v1493
    %v1495 = vpop.xlane.xlu0 %1494
    %v1496 = vadd.f32 %v761, %v1495
    %v1497 = vsel %vm24, %v1492, 0.0
    %v1498 = vrot.slane %v1497, 4
    %v1499 = vadd.f32 %v1497, %v1498
    %v1500 = vrot.slane %v1499, 2
    %v1501 = vadd.f32 %v1499, %v1500
    %v1502 = vrot.slane %v1501, 1
    %v1503 = vadd.f32 %v1501, %v1502
    %v1504 = vmul.f32 %v1503, 0.5
    %v1505 = vsub.f32 %v1492, %v1504
    %v1506 = vmul.f32 %v1505, %v1505
    %v1507 = vsel %vm24, %v1506, 0.0
    %v1508 = vrot.slane %v1507, 4
    %v1509 = vadd.f32 %v1507, %v1508
    %v1510 = vrot.slane %v1509, 2
    %v1511 = vadd.f32 %v1509, %v1510
    %v1512 = vrot.slane %v1511, 1
    %v1513 = vadd.f32 %v1511, %v1512
    %v1514 = vrsqrt.pop %v1513
    %v1515 = vmul.f32 %v1513, %v1514
    %vm1516 = vcmp.eq.f32.partialorder %v1513, inf
    %v1517 = vsel %vm1516, %v1513, %v1515
    %vm1518 = vcmp.eq.f32.partialorder %v1513, 0.0
    %v1519 = vand.u32 %v1513, 2147483648
    %v1520 = vsel %vm1518, %v1519, %v1517
    %v1521 = vadd.f32 %v1520, 1e-06
    %v1522 = vrcp.pop %v1521
    %v1523 = vmul.f32 %v1505, %v1522
    %v1524 = vlog2.pop %v1521
    %v1525 = vmul.f32 %v1524, 0.6931472
    %v1526 = vsel %vm54, %v1525, 0.0
    %1527 = vadd.xlane.f32.xlu0 %v1526
    %v1528 = vpop.xlane.xlu0 %1527
    %v1529 = vrot.slane %v1528, 4
    %v1530 = vadd.f32 %v1528, %v1529
    %v1531 = vrot.slane %v1530, 2
    %v1532 = vadd.f32 %v1530, %v1531
    %v1533 = vrot.slane %v1532, 1
    %v1534 = vadd.f32 %v1532, %v1533
    %s1535 = vtos %v1534
    %s1536 = ssub.f32 0.0, %s1535
    %v1537 = vsel %vm24, %v1162, 0.0
    %v1538 = vrot.slane %v1537, 4
    %v1539 = vadd.f32 %v1537, %v1538
    %v1540 = vrot.slane %v1539, 2
    %v1541 = vadd.f32 %v1539, %v1540
    %v1542 = vrot.slane %v1541, 1
    %v1543 = vadd.f32 %v1541, %v1542
    %v1544 = vmul.f32 %v1543, 0.5
    %v1545 = vsub.f32 %v1162, %v1544
    %v1546 = vmul.f32 %v1545, %v1545
    %v1547 = vsel %vm24, %v1546, 0.0
    %v1548 = vrot.slane %v1547, 4
    %v1549 = vadd.f32 %v1547, %v1548
    %v1550 = vrot.slane %v1549, 2
    %v1551 = vadd.f32 %v1549, %v1550
    %v1552 = vrot.slane %v1551, 1
    %v1553 = vadd.f32 %v1551, %v1552
    %v1554 = vrsqrt.pop %v1553
    %v1555 = vmul.f32 %v1553, %v1554
    %vm1556 = vcmp.eq.f32.partialorder %v1553, inf
    %v1557 = vsel %vm1556, %v1553, %v1555
    %vm1558 = vcmp.eq.f32.partialorder %v1553, 0.0
    %v1559 = vand.u32 %v1553, 2147483648
    %v1560 = vsel %vm1558, %v1559, %v1557
    %v1561 = vadd.f32 %v1560, 1e-06
    %v1562 = vrcp.pop %v1561
    %v1563 = vmul.f32 %v1545, %v1562
    %v1564 = vlog2.pop %v1561
    %v1565 = vmul.f32 %v1564, 0.6931472
    %v1566 = vsel %vm54, %v1565, 0.0
    %1567 = vadd.xlane.f32.xlu0 %v1566
    %v1568 = vpop.xlane.xlu0 %1567
    %v1569 = vrot.slane %v1568, 4
    %v1570 = vadd.f32 %v1568, %v1569
    %v1571 = vrot.slane %v1570, 2
    %v1572 = vadd.f32 %v1570, %v1571
    %v1573 = vrot.slane %v1572, 1
    %v1574 = vadd.f32 %v1572, %v1573
    %s1575 = vtos %v1574
    %s1576 = ssub.f32 0.0, %s1575
    %s1577 = sadd.f32 %s843, %s1536
    %s1578 = sadd.f32 %s1577, %s1576
    %s1579 = scalar_lea.vmem %s1, 112
    %v1580 = vld [vmem:[%s1579] sm:$0xff]
    %v1581 = vld [vmem:[%s1579 + $0x8] sm:$0xff]
    %v1582 = vld [vmem:[%s1579 + $0x10] sm:$0xff]
    %v1583 = vld [vmem:[%s1579 + $0x18] sm:$0xff]
    %v1584 = vld [vmem:[%s1579 + $0x20] sm:$0xff]
    %v1585 = vld [vmem:[%s1579 + $0x28] sm:$0xff]
    %v1586 = vld [vmem:[%s1579 + $0x30] sm:$0xff]
    %s1587 = scalar_lea.vmem %s2, 224
    %v1588 = vld [vmem:[%s1587] sm:$0xff]
    %v1589 = vld [vmem:[%s1587 + $0x8] sm:$0xff]
    %v1590 = vld [vmem:[%s1587 + $0x10] sm:$0xff]
    %v1591 = vld [vmem:[%s1587 + $0x18] sm:$0xff]
    %v1592 = vld [vmem:[%s1587 + $0x20] sm:$0xff]
    %v1593 = vld [vmem:[%s1587 + $0x28] sm:$0xff]
    %v1594 = vld [vmem:[%s1587 + $0x30] sm:$0xff]
    %v1595 = vld [vmem:[%s1587 + $0x38] sm:$0xff]
    %v1596 = vld [vmem:[%s1587 + $0x40] sm:$0xff]
    %v1597 = vld [vmem:[%s1587 + $0x48] sm:$0xff]
    %v1598 = vld [vmem:[%s1587 + $0x50] sm:$0xff]
    %v1599 = vld [vmem:[%s1587 + $0x58] sm:$0xff]
    %v1600 = vld [vmem:[%s1587 + $0x60] sm:$0xff]
    %v1601 = vld [vmem:[%s1587 + $0x68] sm:$0xff]
    %v1603 = vsel %vm129, %v1563, 0
    %v1606 = vsel %vm133, %v1590, 0
    %1608 = vmatprep.subr.mxu0 0.0
    %1609 = vmatpush1.msra.mxu0 %v1606
    %1610 = vmatprep.subr.mxu0 0.0
    %1611 = vmatpush1.msra.mxu0 0.0
    %1612 = vmatprep.subr.mxu0 0.0
    %1613 = vmatpush1.msra.mxu0 0.0
    %1614 = vmatprep.subr.mxu0 0.0
    %1615 = vmatpush1.msra.mxu0 0.0
    %1616 = vmatprep.subr.mxu0 0.0
    %1617 = vmatpush1.msra.mxu0 0.0
    %1618 = vmatprep.subr.mxu0 0.0
    %1619 = vmatpush1.msra.mxu0 0.0
    %1620 = vmatprep.subr.mxu0 0.0
    %1621 = vmatpush1.msra.mxu0 0.0
    %1622 = vmatprep.subr.mxu0 0.0
    %1623 = vmatpush1.msra.mxu0 0.0
    %1624 = vmatprep.subr.mxu0 0.0
    %1625 = vmatpush1.msra.mxu0 0.0
    %1626 = vmatprep.subr.mxu0 0.0
    %1627 = vmatpush1.msra.mxu0 0.0
    %1628 = vmatprep.subr.mxu0 0.0
    %1629 = vmatpush1.msra.mxu0 0.0
    %1630 = vmatprep.subr.mxu0 0.0
    %1631 = vmatpush1.msra.mxu0 0.0
    %1632 = vmatprep.subr.mxu0 0.0
    %1633 = vmatpush1.msra.mxu0 0.0
    %1634 = vmatprep.subr.mxu0 0.0
    %1635 = vmatpush1.msra.mxu0 0.0
    %1636 = vmatprep.subr.mxu0 0.0
    %1637 = vmatpush1.msra.mxu0 0.0
    %1638 = vmatprep.subr.mxu0 0.0
    %1639 = vmatpush1.msra.mxu0 0.0
    %1640 = vmatprep.subr.mxu0 0.0
    %1641 = vmatpush1.msra.mxu0 0.0
    %1642 = vmatprep.subr.mxu0 0.0
    %1643 = vmatpush1.msra.mxu0 0.0
    %1644 = vmatprep.subr.mxu0 0.0
    %1645 = vmatpush1.msra.mxu0 0.0
    %1646 = vmatprep.subr.mxu0 0.0
    %1647 = vmatpush1.msra.mxu0 0.0
    %1648 = vmatprep.subr.mxu0 0.0
    %1649 = vmatpush1.msra.mxu0 0.0
    %1650 = vmatprep.subr.mxu0 0.0
    %1651 = vmatpush1.msra.mxu0 0.0
    %1652 = vmatprep.subr.mxu0 0.0
    %1653 = vmatpush1.msra.mxu0 0.0
    %1654 = vmatprep.subr.mxu0 0.0
    %1655 = vmatpush1.msra.mxu0 0.0
    %1656 = vmatprep.subr.mxu0 0.0
    %1657 = vmatpush1.msra.mxu0 0.0
    %1658 = vmatprep.subr.mxu0 0.0
    %1659 = vmatpush1.msra.mxu0 0.0
    %1660 = vmatprep.subr.mxu0 0.0
    %1661 = vmatpush1.msra.mxu0 0.0
    %1662 = vmatprep.subr.mxu0 0.0
    %1663 = vmatpush1.msra.mxu0 0.0
    %1664 = vmatprep.subr.mxu0 0.0
    %1665 = vmatpush1.msra.mxu0 0.0
    %1666 = vmatprep.subr.mxu0 0.0
    %1667 = vmatpush1.msra.mxu0 0.0
    %1668 = vmatprep.subr.mxu0 0.0
    %1669 = vmatpush1.msra.mxu0 0.0
    %1670 = vmatprep.subr.mxu0 0.0
    %1671 = vmatpush1.msra.mxu0 0.0
    %1672 = vmatprep.mubr.f32.mxu0 0.0
    %1673 = vmatmul.mubr.f32.gmra.mrb[0].mxu0 %v1603
    %v1674 = vpop.f32.mrb[0].mxu0
    %v1675 = vadd.f32 0.0, %v1674
    %v1676 = vpop.f32.mrb[0].mxu0
    %1677 = vdwg.mxu0
    %v1679 = vsel %vm129, %v1523, 0
    %v1682 = vsel %vm133, %v1588, 0
    %1684 = vmatprep.subr.mxu0 0.0
    %1685 = vmatpush1.msra.mxu0 %v1682
    %1686 = vmatprep.subr.mxu0 0.0
    %1687 = vmatpush1.msra.mxu0 0.0
    %1688 = vmatprep.subr.mxu0 0.0
    %1689 = vmatpush1.msra.mxu0 0.0
    %1690 = vmatprep.subr.mxu0 0.0
    %1691 = vmatpush1.msra.mxu0 0.0
    %1692 = vmatprep.subr.mxu0 0.0
    %1693 = vmatpush1.msra.mxu0 0.0
    %1694 = vmatprep.subr.mxu0 0.0
    %1695 = vmatpush1.msra.mxu0 0.0
    %1696 = vmatprep.subr.mxu0 0.0
    %1697 = vmatpush1.msra.mxu0 0.0
    %1698 = vmatprep.subr.mxu0 0.0
    %1699 = vmatpush1.msra.mxu0 0.0
    %1700 = vmatprep.subr.mxu0 0.0
    %1701 = vmatpush1.msra.mxu0 0.0
    %1702 = vmatprep.subr.mxu0 0.0
    %1703 = vmatpush1.msra.mxu0 0.0
    %1704 = vmatprep.subr.mxu0 0.0
    %1705 = vmatpush1.msra.mxu0 0.0
    %1706 = vmatprep.subr.mxu0 0.0
    %1707 = vmatpush1.msra.mxu0 0.0
    %1708 = vmatprep.subr.mxu0 0.0
    %1709 = vmatpush1.msra.mxu0 0.0
    %1710 = vmatprep.subr.mxu0 0.0
    %1711 = vmatpush1.msra.mxu0 0.0
    %1712 = vmatprep.subr.mxu0 0.0
    %1713 = vmatpush1.msra.mxu0 0.0
    %1714 = vmatprep.subr.mxu0 0.0
    %1715 = vmatpush1.msra.mxu0 0.0
    %1716 = vmatprep.subr.mxu0 0.0
    %1717 = vmatpush1.msra.mxu0 0.0
    %1718 = vmatprep.subr.mxu0 0.0
    %1719 = vmatpush1.msra.mxu0 0.0
    %1720 = vmatprep.subr.mxu0 0.0
    %1721 = vmatpush1.msra.mxu0 0.0
    %1722 = vmatprep.subr.mxu0 0.0
    %1723 = vmatpush1.msra.mxu0 0.0
    %1724 = vmatprep.subr.mxu0 0.0
    %1725 = vmatpush1.msra.mxu0 0.0
    %1726 = vmatprep.subr.mxu0 0.0
    %1727 = vmatpush1.msra.mxu0 0.0
    %1728 = vmatprep.subr.mxu0 0.0
    %1729 = vmatpush1.msra.mxu0 0.0
    %1730 = vmatprep.subr.mxu0 0.0
    %1731 = vmatpush1.msra.mxu0 0.0
    %1732 = vmatprep.subr.mxu0 0.0
    %1733 = vmatpush1.msra.mxu0 0.0
    %1734 = vmatprep.subr.mxu0 0.0
    %1735 = vmatpush1.msra.mxu0 0.0
    %1736 = vmatprep.subr.mxu0 0.0
    %1737 = vmatpush1.msra.mxu0 0.0
    %1738 = vmatprep.subr.mxu0 0.0
    %1739 = vmatpush1.msra.mxu0 0.0
    %1740 = vmatprep.subr.mxu0 0.0
    %1741 = vmatpush1.msra.mxu0 0.0
    %1742 = vmatprep.subr.mxu0 0.0
    %1743 = vmatpush1.msra.mxu0 0.0
    %1744 = vmatprep.subr.mxu0 0.0
    %1745 = vmatpush1.msra.mxu0 0.0
    %1746 = vmatprep.subr.mxu0 0.0
    %1747 = vmatpush1.msra.mxu0 0.0
    %1748 = vmatprep.mubr.f32.mxu0 0.0
    %1749 = vmatmul.mubr.f32.gmra.mrb[0].mxu0 %v1679
    %v1750 = vpop.f32.mrb[0].mxu0
    %v1751 = vadd.f32 %v1675, %v1750
    %v1752 = vpop.f32.mrb[0].mxu0
    %1753 = vdwg.mxu0
    %v1755 = vsel %vm133, %v1591, 0
    %1757 = vmatprep.subr.mxu0 0.0
    %1758 = vmatpush1.msra.mxu0 %v1755
    %1759 = vmatprep.subr.mxu0 0.0
    %1760 = vmatpush1.msra.mxu0 0.0
    %1761 = vmatprep.subr.mxu0 0.0
    %1762 = vmatpush1.msra.mxu0 0.0
    %1763 = vmatprep.subr.mxu0 0.0
    %1764 = vmatpush1.msra.mxu0 0.0
    %1765 = vmatprep.subr.mxu0 0.0
    %1766 = vmatpush1.msra.mxu0 0.0
    %1767 = vmatprep.subr.mxu0 0.0
    %1768 = vmatpush1.msra.mxu0 0.0
    %1769 = vmatprep.subr.mxu0 0.0
    %1770 = vmatpush1.msra.mxu0 0.0
    %1771 = vmatprep.subr.mxu0 0.0
    %1772 = vmatpush1.msra.mxu0 0.0
    %1773 = vmatprep.subr.mxu0 0.0
    %1774 = vmatpush1.msra.mxu0 0.0
    %1775 = vmatprep.subr.mxu0 0.0
    %1776 = vmatpush1.msra.mxu0 0.0
    %1777 = vmatprep.subr.mxu0 0.0
    %1778 = vmatpush1.msra.mxu0 0.0
    %1779 = vmatprep.subr.mxu0 0.0
    %1780 = vmatpush1.msra.mxu0 0.0
    %1781 = vmatprep.subr.mxu0 0.0
    %1782 = vmatpush1.msra.mxu0 0.0
    %1783 = vmatprep.subr.mxu0 0.0
    %1784 = vmatpush1.msra.mxu0 0.0
    %1785 = vmatprep.subr.mxu0 0.0
    %1786 = vmatpush1.msra.mxu0 0.0
    %1787 = vmatprep.subr.mxu0 0.0
    %1788 = vmatpush1.msra.mxu0 0.0
    %1789 = vmatprep.subr.mxu0 0.0
    %1790 = vmatpush1.msra.mxu0 0.0
    %1791 = vmatprep.subr.mxu0 0.0
    %1792 = vmatpush1.msra.mxu0 0.0
    %1793 = vmatprep.subr.mxu0 0.0
    %1794 = vmatpush1.msra.mxu0 0.0
    %1795 = vmatprep.subr.mxu0 0.0
    %1796 = vmatpush1.msra.mxu0 0.0
    %1797 = vmatprep.subr.mxu0 0.0
    %1798 = vmatpush1.msra.mxu0 0.0
    %1799 = vmatprep.subr.mxu0 0.0
    %1800 = vmatpush1.msra.mxu0 0.0
    %1801 = vmatprep.subr.mxu0 0.0
    %1802 = vmatpush1.msra.mxu0 0.0
    %1803 = vmatprep.subr.mxu0 0.0
    %1804 = vmatpush1.msra.mxu0 0.0
    %1805 = vmatprep.subr.mxu0 0.0
    %1806 = vmatpush1.msra.mxu0 0.0
    %1807 = vmatprep.subr.mxu0 0.0
    %1808 = vmatpush1.msra.mxu0 0.0
    %1809 = vmatprep.subr.mxu0 0.0
    %1810 = vmatpush1.msra.mxu0 0.0
    %1811 = vmatprep.subr.mxu0 0.0
    %1812 = vmatpush1.msra.mxu0 0.0
    %1813 = vmatprep.subr.mxu0 0.0
    %1814 = vmatpush1.msra.mxu0 0.0
    %1815 = vmatprep.subr.mxu0 0.0
    %1816 = vmatpush1.msra.mxu0 0.0
    %1817 = vmatprep.subr.mxu0 0.0
    %1818 = vmatpush1.msra.mxu0 0.0
    %1819 = vmatprep.subr.mxu0 0.0
    %1820 = vmatpush1.msra.mxu0 0.0
    %1821 = vmatprep.mubr.f32.mxu0 0.0
    %1822 = vmatmul.mubr.f32.gmra.mrb[0].mxu0 %v1603
    %v1823 = vpop.f32.mrb[0].mxu0
    %v1824 = vadd.f32 0.0, %v1823
    %v1825 = vpop.f32.mrb[0].mxu0
    %1826 = vdwg.mxu0
    %v1828 = vsel %vm133, %v1589, 0
    %1830 = vmatprep.subr.mxu0 0.0
    %1831 = vmatpush1.msra.mxu0 %v1828
    %1832 = vmatprep.subr.mxu0 0.0
    %1833 = vmatpush1.msra.mxu0 0.0
    %1834 = vmatprep.subr.mxu0 0.0
    %1835 = vmatpush1.msra.mxu0 0.0
    %1836 = vmatprep.subr.mxu0 0.0
    %1837 = vmatpush1.msra.mxu0 0.0
    %1838 = vmatprep.subr.mxu0 0.0
    %1839 = vmatpush1.msra.mxu0 0.0
    %1840 = vmatprep.subr.mxu0 0.0
    %1841 = vmatpush1.msra.mxu0 0.0
    %1842 = vmatprep.subr.mxu0 0.0
    %1843 = vmatpush1.msra.mxu0 0.0
    %1844 = vmatprep.subr.mxu0 0.0
    %1845 = vmatpush1.msra.mxu0 0.0
    %1846 = vmatprep.subr.mxu0 0.0
    %1847 = vmatpush1.msra.mxu0 0.0
    %1848 = vmatprep.subr.mxu0 0.0
    %1849 = vmatpush1.msra.mxu0 0.0
    %1850 = vmatprep.subr.mxu0 0.0
    %1851 = vmatpush1.msra.mxu0 0.0
    %1852 = vmatprep.subr.mxu0 0.0
    %1853 = vmatpush1.msra.mxu0 0.0
    %1854 = vmatprep.subr.mxu0 0.0
    %1855 = vmatpush1.msra.mxu0 0.0
    %1856 = vmatprep.subr.mxu0 0.0
    %1857 = vmatpush1.msra.mxu0 0.0
    %1858 = vmatprep.subr.mxu0 0.0
    %1859 = vmatpush1.msra.mxu0 0.0
    %1860 = vmatprep.subr.mxu0 0.0
    %1861 = vmatpush1.msra.mxu0 0.0
    %1862 = vmatprep.subr.mxu0 0.0
    %1863 = vmatpush1.msra.mxu0 0.0
    %1864 = vmatprep.subr.mxu0 0.0
    %1865 = vmatpush1.msra.mxu0 0.0
    %1866 = vmatprep.subr.mxu0 0.0
    %1867 = vmatpush1.msra.mxu0 0.0
    %1868 = vmatprep.subr.mxu0 0.0
    %1869 = vmatpush1.msra.mxu0 0.0
    %1870 = vmatprep.subr.mxu0 0.0
    %1871 = vmatpush1.msra.mxu0 0.0
    %1872 = vmatprep.subr.mxu0 0.0
    %1873 = vmatpush1.msra.mxu0 0.0
    %1874 = vmatprep.subr.mxu0 0.0
    %1875 = vmatpush1.msra.mxu0 0.0
    %1876 = vmatprep.subr.mxu0 0.0
    %1877 = vmatpush1.msra.mxu0 0.0
    %1878 = vmatprep.subr.mxu0 0.0
    %1879 = vmatpush1.msra.mxu0 0.0
    %1880 = vmatprep.subr.mxu0 0.0
    %1881 = vmatpush1.msra.mxu0 0.0
    %1882 = vmatprep.subr.mxu0 0.0
    %1883 = vmatpush1.msra.mxu0 0.0
    %1884 = vmatprep.subr.mxu0 0.0
    %1885 = vmatpush1.msra.mxu0 0.0
    %1886 = vmatprep.subr.mxu0 0.0
    %1887 = vmatpush1.msra.mxu0 0.0
    %1888 = vmatprep.subr.mxu0 0.0
    %1889 = vmatpush1.msra.mxu0 0.0
    %1890 = vmatprep.subr.mxu0 0.0
    %1891 = vmatpush1.msra.mxu0 0.0
    %1892 = vmatprep.subr.mxu0 0.0
    %1893 = vmatpush1.msra.mxu0 0.0
    %1894 = vmatprep.mubr.f32.mxu0 0.0
    %1895 = vmatmul.mubr.f32.gmra.mrb[0].mxu0 %v1679
    %v1896 = vpop.f32.mrb[0].mxu0
    %v1897 = vadd.f32 %v1824, %v1896
    %v1898 = vpop.f32.mrb[0].mxu0
    %1899 = vdwg.mxu0
    %v1900 = vlaneseq
    %v1901 = vshrl.u32 %v1900, 7
    %v1902 = vsub.s32 0, %v1901
    %v1903 = vrot.slane %v1581, %v1902
    %v1905 = vsel %vm129, %v1751, 0
    %v1908 = vsel %vm133, %v1580, 0
    %1910 = vmatprep.subr.mxu0 0.0
    %1911 = vmatpush1.msra.mxu0 %v1908
    %1912 = vmatprep.subr.mxu0 0.0
    %1913 = vmatpush1.msra.mxu0 0.0
    %1914 = vmatprep.subr.mxu0 0.0
    %1915 = vmatpush1.msra.mxu0 0.0
    %1916 = vmatprep.subr.mxu0 0.0
    %1917 = vmatpush1.msra.mxu0 0.0
    %1918 = vmatprep.subr.mxu0 0.0
    %1919 = vmatpush1.msra.mxu0 0.0
    %1920 = vmatprep.subr.mxu0 0.0
    %1921 = vmatpush1.msra.mxu0 0.0
    %1922 = vmatprep.subr.mxu0 0.0
    %1923 = vmatpush1.msra.mxu0 0.0
    %1924 = vmatprep.subr.mxu0 0.0
    %1925 = vmatpush1.msra.mxu0 0.0
    %1926 = vmatprep.subr.mxu0 0.0
    %1927 = vmatpush1.msra.mxu0 0.0
    %1928 = vmatprep.subr.mxu0 0.0
    %1929 = vmatpush1.msra.mxu0 0.0
    %1930 = vmatprep.subr.mxu0 0.0
    %1931 = vmatpush1.msra.mxu0 0.0
    %1932 = vmatprep.subr.mxu0 0.0
    %1933 = vmatpush1.msra.mxu0 0.0
    %1934 = vmatprep.subr.mxu0 0.0
    %1935 = vmatpush1.msra.mxu0 0.0
    %1936 = vmatprep.subr.mxu0 0.0
    %1937 = vmatpush1.msra.mxu0 0.0
    %1938 = vmatprep.subr.mxu0 0.0
    %1939 = vmatpush1.msra.mxu0 0.0
    %1940 = vmatprep.subr.mxu0 0.0
    %1941 = vmatpush1.msra.mxu0 0.0
    %1942 = vmatprep.subr.mxu0 0.0
    %1943 = vmatpush1.msra.mxu0 0.0
    %1944 = vmatprep.subr.mxu0 0.0
    %1945 = vmatpush1.msra.mxu0 0.0
    %1946 = vmatprep.subr.mxu0 0.0
    %1947 = vmatpush1.msra.mxu0 0.0
    %1948 = vmatprep.subr.mxu0 0.0
    %1949 = vmatpush1.msra.mxu0 0.0
    %1950 = vmatprep.subr.mxu0 0.0
    %1951 = vmatpush1.msra.mxu0 0.0
    %1952 = vmatprep.subr.mxu0 0.0
    %1953 = vmatpush1.msra.mxu0 0.0
    %1954 = vmatprep.subr.mxu0 0.0
    %1955 = vmatpush1.msra.mxu0 0.0
    %1956 = vmatprep.subr.mxu0 0.0
    %1957 = vmatpush1.msra.mxu0 0.0
    %1958 = vmatprep.subr.mxu0 0.0
    %1959 = vmatpush1.msra.mxu0 0.0
    %1960 = vmatprep.subr.mxu0 0.0
    %1961 = vmatpush1.msra.mxu0 0.0
    %1962 = vmatprep.subr.mxu0 0.0
    %1963 = vmatpush1.msra.mxu0 0.0
    %1964 = vmatprep.subr.mxu0 0.0
    %1965 = vmatpush1.msra.mxu0 0.0
    %1966 = vmatprep.subr.mxu0 0.0
    %1967 = vmatpush1.msra.mxu0 0.0
    %1968 = vmatprep.subr.mxu0 0.0
    %1969 = vmatpush1.msra.mxu0 0.0
    %1970 = vmatprep.subr.mxu0 0.0
    %1971 = vmatpush1.msra.mxu0 0.0
    %1972 = vmatprep.subr.mxu0 0.0
    %1973 = vmatpush1.msra.mxu0 0.0
    %1974 = vmatprep.mubr.f32.mxu0 0.0
    %1975 = vmatmul.mubr.f32.gmra.mrb[0].mxu0 %v1905
    %v1976 = vpop.f32.mrb[0].mxu0
    %v1977 = vadd.f32 %v1903, %v1976
    %v1978 = vpop.f32.mrb[0].mxu0
    %1979 = vdwg.mxu0
    %vm1980 = vcmp.gt.f32.partialorder %v1977, 0.0
    %v1981 = vmul.f32 %v1977, 0.01
    %v1982 = vsel %vm1980, %v1977, %v1981
    %v1983 = vlaneseq
    %v1984 = vshrl.u32 %v1983, 7
    %v1985 = vsub.s32 0, %v1984
    %v1986 = vrot.slane %v1586, %v1985
    %v1988 = vsel %vm516, %v1982, 0
    %1990 = vmatprep.subr.mxu0 0.0
    %1991 = vmatpush1.msra.mxu0 %v1582
    %1992 = vmatprep.subr.mxu0 0.0
    %1993 = vmatpush1.msra.mxu0 %v1583
    %1994 = vmatprep.subr.mxu0 0.0
    %1995 = vmatpush1.msra.mxu0 %v1584
    %1996 = vmatprep.subr.mxu0 0.0
    %1997 = vmatpush1.msra.mxu0 %v1585
    %1998 = vmatprep.subr.mxu0 0.0
    %1999 = vmatpush1.msra.mxu0 0.0
    %2000 = vmatprep.subr.mxu0 0.0
    %2001 = vmatpush1.msra.mxu0 0.0
    %2002 = vmatprep.subr.mxu0 0.0
    %2003 = vmatpush1.msra.mxu0 0.0
    %2004 = vmatprep.subr.mxu0 0.0
    %2005 = vmatpush1.msra.mxu0 0.0
    %2006 = vmatprep.subr.mxu0 0.0
    %2007 = vmatpush1.msra.mxu0 0.0
    %2008 = vmatprep.subr.mxu0 0.0
    %2009 = vmatpush1.msra.mxu0 0.0
    %2010 = vmatprep.subr.mxu0 0.0
    %2011 = vmatpush1.msra.mxu0 0.0
    %2012 = vmatprep.subr.mxu0 0.0
    %2013 = vmatpush1.msra.mxu0 0.0
    %2014 = vmatprep.subr.mxu0 0.0
    %2015 = vmatpush1.msra.mxu0 0.0
    %2016 = vmatprep.subr.mxu0 0.0
    %2017 = vmatpush1.msra.mxu0 0.0
    %2018 = vmatprep.subr.mxu0 0.0
    %2019 = vmatpush1.msra.mxu0 0.0
    %2020 = vmatprep.subr.mxu0 0.0
    %2021 = vmatpush1.msra.mxu0 0.0
    %2022 = vmatprep.subr.mxu0 0.0
    %2023 = vmatpush1.msra.mxu0 0.0
    %2024 = vmatprep.subr.mxu0 0.0
    %2025 = vmatpush1.msra.mxu0 0.0
    %2026 = vmatprep.subr.mxu0 0.0
    %2027 = vmatpush1.msra.mxu0 0.0
    %2028 = vmatprep.subr.mxu0 0.0
    %2029 = vmatpush1.msra.mxu0 0.0
    %2030 = vmatprep.subr.mxu0 0.0
    %2031 = vmatpush1.msra.mxu0 0.0
    %2032 = vmatprep.subr.mxu0 0.0
    %2033 = vmatpush1.msra.mxu0 0.0
    %2034 = vmatprep.subr.mxu0 0.0
    %2035 = vmatpush1.msra.mxu0 0.0
    %2036 = vmatprep.subr.mxu0 0.0
    %2037 = vmatpush1.msra.mxu0 0.0
    %2038 = vmatprep.subr.mxu0 0.0
    %2039 = vmatpush1.msra.mxu0 0.0
    %2040 = vmatprep.subr.mxu0 0.0
    %2041 = vmatpush1.msra.mxu0 0.0
    %2042 = vmatprep.subr.mxu0 0.0
    %2043 = vmatpush1.msra.mxu0 0.0
    %2044 = vmatprep.subr.mxu0 0.0
    %2045 = vmatpush1.msra.mxu0 0.0
    %2046 = vmatprep.subr.mxu0 0.0
    %2047 = vmatpush1.msra.mxu0 0.0
    %2048 = vmatprep.subr.mxu0 0.0
    %2049 = vmatpush1.msra.mxu0 0.0
    %2050 = vmatprep.subr.mxu0 0.0
    %2051 = vmatpush1.msra.mxu0 0.0
    %2052 = vmatprep.subr.mxu0 0.0
    %2053 = vmatpush1.msra.mxu0 0.0
    %2054 = vmatprep.mubr.f32.mxu0 0.0
    %2055 = vmatmul.mubr.f32.gmra.mrb[0].mxu0 %v1988
    %v2056 = vpop.f32.mrb[0].mxu0
    %v2057 = vadd.f32 %v1986, %v2056
    %v2058 = vpop.f32.mrb[0].mxu0
    %2059 = vdwg.mxu0
    %vm2060 = vcmp.gt.f32.partialorder %v2057, 0.0
    %v2061 = vmul.f32 %v2057, 0.01
    %v2062 = vsel %vm2060, %v2057, %v2061
    %v2063 = vlaneseq
    %v2064 = vshrl.u32 %v2063, 7
    %v2065 = vsub.s32 0, %v2064
    %v2066 = vrot.slane %v1600, %v2065
    %v2068 = vsel %vm516, %v2062, 0
    %2070 = vmatprep.subr.mxu0 0.0
    %2071 = vmatpush1.msra.mxu0 %v1592
    %2072 = vmatprep.subr.mxu0 0.0
    %2073 = vmatpush1.msra.mxu0 %v1593
    %2074 = vmatprep.subr.mxu0 0.0
    %2075 = vmatpush1.msra.mxu0 %v1594
    %2076 = vmatprep.subr.mxu0 0.0
    %2077 = vmatpush1.msra.mxu0 %v1595
    %2078 = vmatprep.subr.mxu0 0.0
    %2079 = vmatpush1.msra.mxu0 0.0
    %2080 = vmatprep.subr.mxu0 0.0
    %2081 = vmatpush1.msra.mxu0 0.0
    %2082 = vmatprep.subr.mxu0 0.0
    %2083 = vmatpush1.msra.mxu0 0.0
    %2084 = vmatprep.subr.mxu0 0.0
    %2085 = vmatpush1.msra.mxu0 0.0
    %2086 = vmatprep.subr.mxu0 0.0
    %2087 = vmatpush1.msra.mxu0 0.0
    %2088 = vmatprep.subr.mxu0 0.0
    %2089 = vmatpush1.msra.mxu0 0.0
    %2090 = vmatprep.subr.mxu0 0.0
    %2091 = vmatpush1.msra.mxu0 0.0
    %2092 = vmatprep.subr.mxu0 0.0
    %2093 = vmatpush1.msra.mxu0 0.0
    %2094 = vmatprep.subr.mxu0 0.0
    %2095 = vmatpush1.msra.mxu0 0.0
    %2096 = vmatprep.subr.mxu0 0.0
    %2097 = vmatpush1.msra.mxu0 0.0
    %2098 = vmatprep.subr.mxu0 0.0
    %2099 = vmatpush1.msra.mxu0 0.0
    %2100 = vmatprep.subr.mxu0 0.0
    %2101 = vmatpush1.msra.mxu0 0.0
    %2102 = vmatprep.subr.mxu0 0.0
    %2103 = vmatpush1.msra.mxu0 0.0
    %2104 = vmatprep.subr.mxu0 0.0
    %2105 = vmatpush1.msra.mxu0 0.0
    %2106 = vmatprep.subr.mxu0 0.0
    %2107 = vmatpush1.msra.mxu0 0.0
    %2108 = vmatprep.subr.mxu0 0.0
    %2109 = vmatpush1.msra.mxu0 0.0
    %2110 = vmatprep.subr.mxu0 0.0
    %2111 = vmatpush1.msra.mxu0 0.0
    %2112 = vmatprep.subr.mxu0 0.0
    %2113 = vmatpush1.msra.mxu0 0.0
    %2114 = vmatprep.subr.mxu0 0.0
    %2115 = vmatpush1.msra.mxu0 0.0
    %2116 = vmatprep.subr.mxu0 0.0
    %2117 = vmatpush1.msra.mxu0 0.0
    %2118 = vmatprep.subr.mxu0 0.0
    %2119 = vmatpush1.msra.mxu0 0.0
    %2120 = vmatprep.subr.mxu0 0.0
    %2121 = vmatpush1.msra.mxu0 0.0
    %2122 = vmatprep.subr.mxu0 0.0
    %2123 = vmatpush1.msra.mxu0 0.0
    %2124 = vmatprep.subr.mxu0 0.0
    %2125 = vmatpush1.msra.mxu0 0.0
    %2126 = vmatprep.subr.mxu0 0.0
    %2127 = vmatpush1.msra.mxu0 0.0
    %2128 = vmatprep.subr.mxu0 0.0
    %2129 = vmatpush1.msra.mxu0 0.0
    %2130 = vmatprep.subr.mxu0 0.0
    %2131 = vmatpush1.msra.mxu0 0.0
    %2132 = vmatprep.subr.mxu0 0.0
    %2133 = vmatpush1.msra.mxu0 0.0
    %2134 = vmatprep.mubr.f32.mxu0 0.0
    %2135 = vmatmul.mubr.f32.gmra.mrb[0].mxu0 %v2068
    %v2136 = vpop.f32.mrb[0].mxu0
    %v2137 = vadd.f32 %v2066, %v2136
    %v2138 = vpop.f32.mrb[0].mxu0
    %2139 = vdwg.mxu0
    %v2140 = vlaneseq
    %v2141 = vshrl.u32 %v2140, 7
    %v2142 = vsub.s32 0, %v2141
    %v2143 = vrot.slane %v1601, %v2142
    %2144 = vmatprep.subr.mxu0 0.0
    %2145 = vmatpush1.msra.mxu0 %v1596
    %2146 = vmatprep.subr.mxu0 0.0
    %2147 = vmatpush1.msra.mxu0 %v1597
    %2148 = vmatprep.subr.mxu0 0.0
    %2149 = vmatpush1.msra.mxu0 %v1598
    %2150 = vmatprep.subr.mxu0 0.0
    %2151 = vmatpush1.msra.mxu0 %v1599
    %2152 = vmatprep.subr.mxu0 0.0
    %2153 = vmatpush1.msra.mxu0 0.0
    %2154 = vmatprep.subr.mxu0 0.0
    %2155 = vmatpush1.msra.mxu0 0.0
    %2156 = vmatprep.subr.mxu0 0.0
    %2157 = vmatpush1.msra.mxu0 0.0
    %2158 = vmatprep.subr.mxu0 0.0
    %2159 = vmatpush1.msra.mxu0 0.0
    %2160 = vmatprep.subr.mxu0 0.0
    %2161 = vmatpush1.msra.mxu0 0.0
    %2162 = vmatprep.subr.mxu0 0.0
    %2163 = vmatpush1.msra.mxu0 0.0
    %2164 = vmatprep.subr.mxu0 0.0
    %2165 = vmatpush1.msra.mxu0 0.0
    %2166 = vmatprep.subr.mxu0 0.0
    %2167 = vmatpush1.msra.mxu0 0.0
    %2168 = vmatprep.subr.mxu0 0.0
    %2169 = vmatpush1.msra.mxu0 0.0
    %2170 = vmatprep.subr.mxu0 0.0
    %2171 = vmatpush1.msra.mxu0 0.0
    %2172 = vmatprep.subr.mxu0 0.0
    %2173 = vmatpush1.msra.mxu0 0.0
    %2174 = vmatprep.subr.mxu0 0.0
    %2175 = vmatpush1.msra.mxu0 0.0
    %2176 = vmatprep.subr.mxu0 0.0
    %2177 = vmatpush1.msra.mxu0 0.0
    %2178 = vmatprep.subr.mxu0 0.0
    %2179 = vmatpush1.msra.mxu0 0.0
    %2180 = vmatprep.subr.mxu0 0.0
    %2181 = vmatpush1.msra.mxu0 0.0
    %2182 = vmatprep.subr.mxu0 0.0
    %2183 = vmatpush1.msra.mxu0 0.0
    %2184 = vmatprep.subr.mxu0 0.0
    %2185 = vmatpush1.msra.mxu0 0.0
    %2186 = vmatprep.subr.mxu0 0.0
    %2187 = vmatpush1.msra.mxu0 0.0
    %2188 = vmatprep.subr.mxu0 0.0
    %2189 = vmatpush1.msra.mxu0 0.0
    %2190 = vmatprep.subr.mxu0 0.0
    %2191 = vmatpush1.msra.mxu0 0.0
    %2192 = vmatprep.subr.mxu0 0.0
    %2193 = vmatpush1.msra.mxu0 0.0
    %2194 = vmatprep.subr.mxu0 0.0
    %2195 = vmatpush1.msra.mxu0 0.0
    %2196 = vmatprep.subr.mxu0 0.0
    %2197 = vmatpush1.msra.mxu0 0.0
    %2198 = vmatprep.subr.mxu0 0.0
    %2199 = vmatpush1.msra.mxu0 0.0
    %2200 = vmatprep.subr.mxu0 0.0
    %2201 = vmatpush1.msra.mxu0 0.0
    %2202 = vmatprep.subr.mxu0 0.0
    %2203 = vmatpush1.msra.mxu0 0.0
    %2204 = vmatprep.subr.mxu0 0.0
    %2205 = vmatpush1.msra.mxu0 0.0
    %2206 = vmatprep.subr.mxu0 0.0
    %2207 = vmatpush1.msra.mxu0 0.0
    %2208 = vmatprep.mubr.f32.mxu0 0.0
    %2209 = vmatmul.mubr.f32.gmra.mrb[0].mxu0 %v2068
    %v2210 = vpop.f32.mrb[0].mxu0
    %v2211 = vadd.f32 %v2143, %v2210
    %v2212 = vpop.f32.mrb[0].mxu0
    %2213 = vdwg.mxu0
    %v2214 = vadd.f32 %v2137, 2.0
    %v2215 = vmin.f32 %v2214, 0.0
    %v2216 = vand.u32 2147483647, %v2214
    %v2217 = vsub.f32 0.0, %v2216
    %v2218 = vmul.f32 %v2217, 1.442695
    %v2219 = vpow.pop %v2218
    %v2220 = vadd.f32 %v2219, 1.0
    %v2221 = vlog2.pop %v2220
    %v2222 = vmul.f32 %v2221, 0.6931472
    %v2223 = vsub.f32 %v2215, %v2222
    %v2224 = vmul.f32 %v2223, 1.442695
    %v2225 = vpow.pop %v2224
    %v2226 = vadd.f32 %v1897, %v2211
    %v2227 = vmul.f32 %v2226, %v2225
    %v2228 = vsel %vm24, %v2223, 0.0
    %2229 = vadd.xlane.f32.xlu0 %v2228
    %v2230 = vpop.xlane.xlu0 %2229
    %v2231 = vadd.f32 %v1496, %v2230
    %v2232 = vsel %vm24, %v1751, 0.0
    %v2233 = vrot.slane %v2232, 4
    %v2234 = vadd.f32 %v2232, %v2233
    %v2235 = vrot.slane %v2234, 2
    %v2236 = vadd.f32 %v2234, %v2235
    %v2237 = vrot.slane %v2236, 1
    %v2238 = vadd.f32 %v2236, %v2237
    %v2239 = vmul.f32 %v2238, 0.5
    %v2240 = vsub.f32 %v1751, %v2239
    %v2241 = vmul.f32 %v2240, %v2240
    %v2242 = vsel %vm24, %v2241, 0.0
    %v2243 = vrot.slane %v2242, 4
    %v2244 = vadd.f32 %v2242, %v2243
    %v2245 = vrot.slane %v2244, 2
    %v2246 = vadd.f32 %v2244, %v2245
    %v2247 = vrot.slane %v2246, 1
    %v2248 = vadd.f32 %v2246, %v2247
    %v2249 = vrsqrt.pop %v2248
    %v2250 = vmul.f32 %v2248, %v2249
    %vm2251 = vcmp.eq.f32.partialorder %v2248, inf
    %v2252 = vsel %vm2251, %v2248, %v2250
    %vm2253 = vcmp.eq.f32.partialorder %v2248, 0.0
    %v2254 = vand.u32 %v2248, 2147483648
    %v2255 = vsel %vm2253, %v2254, %v2252
    %v2256 = vadd.f32 %v2255, 1e-06
    %v2257 = vrcp.pop %v2256
    %v2258 = vmul.f32 %v2240, %v2257
    %v2259 = vlog2.pop %v2256
    %v2260 = vmul.f32 %v2259, 0.6931472
    %v2261 = vsel %vm54, %v2260, 0.0
    %2262 = vadd.xlane.f32.xlu0 %v2261
    %v2263 = vpop.xlane.xlu0 %2262
    %v2264 = vrot.slane %v2263, 4
    %v2265 = vadd.f32 %v2263, %v2264
    %v2266 = vrot.slane %v2265, 2
    %v2267 = vadd.f32 %v2265, %v2266
    %v2268 = vrot.slane %v2267, 1
    %v2269 = vadd.f32 %v2267, %v2268
    %s2270 = vtos %v2269
    %s2271 = ssub.f32 0.0, %s2270
    %v2272 = vsel %vm24, %v2227, 0.0
    %v2273 = vrot.slane %v2272, 4
    %v2274 = vadd.f32 %v2272, %v2273
    %v2275 = vrot.slane %v2274, 2
    %v2276 = vadd.f32 %v2274, %v2275
    %v2277 = vrot.slane %v2276, 1
    %v2278 = vadd.f32 %v2276, %v2277
    %v2279 = vmul.f32 %v2278, 0.5
    %v2280 = vsub.f32 %v2227, %v2279
    %v2281 = vmul.f32 %v2280, %v2280
    %v2282 = vsel %vm24, %v2281, 0.0
    %v2283 = vrot.slane %v2282, 4
    %v2284 = vadd.f32 %v2282, %v2283
    %v2285 = vrot.slane %v2284, 2
    %v2286 = vadd.f32 %v2284, %v2285
    %v2287 = vrot.slane %v2286, 1
    %v2288 = vadd.f32 %v2286, %v2287
    %v2289 = vrsqrt.pop %v2288
    %v2290 = vmul.f32 %v2288, %v2289
    %vm2291 = vcmp.eq.f32.partialorder %v2288, inf
    %v2292 = vsel %vm2291, %v2288, %v2290
    %vm2293 = vcmp.eq.f32.partialorder %v2288, 0.0
    %v2294 = vand.u32 %v2288, 2147483648
    %v2295 = vsel %vm2293, %v2294, %v2292
    %v2296 = vadd.f32 %v2295, 1e-06
    %v2297 = vrcp.pop %v2296
    %v2298 = vmul.f32 %v2280, %v2297
    %v2299 = vlog2.pop %v2296
    %v2300 = vmul.f32 %v2299, 0.6931472
    %v2301 = vsel %vm54, %v2300, 0.0
    %2302 = vadd.xlane.f32.xlu0 %v2301
    %v2303 = vpop.xlane.xlu0 %2302
    %v2304 = vrot.slane %v2303, 4
    %v2305 = vadd.f32 %v2303, %v2304
    %v2306 = vrot.slane %v2305, 2
    %v2307 = vadd.f32 %v2305, %v2306
    %v2308 = vrot.slane %v2307, 1
    %v2309 = vadd.f32 %v2307, %v2308
    %s2310 = vtos %v2309
    %s2311 = ssub.f32 0.0, %s2310
    %s2312 = sadd.f32 %s1578, %s2271
    %s2313 = sadd.f32 %s2312, %s2311
    %s2314 = scalar_lea.vmem %s1, 168
    %v2315 = vld [vmem:[%s2314] sm:$0xff]
    %v2316 = vld [vmem:[%s2314 + $0x8] sm:$0xff]
    %v2317 = vld [vmem:[%s2314 + $0x10] sm:$0xff]
    %v2318 = vld [vmem:[%s2314 + $0x18] sm:$0xff]
    %v2319 = vld [vmem:[%s2314 + $0x20] sm:$0xff]
    %v2320 = vld [vmem:[%s2314 + $0x28] sm:$0xff]
    %v2321 = vld [vmem:[%s2314 + $0x30] sm:$0xff]
    %s2322 = scalar_lea.vmem %s2, 336
    %v2323 = vld [vmem:[%s2322] sm:$0xff]
    %v2324 = vld [vmem:[%s2322 + $0x8] sm:$0xff]
    %v2325 = vld [vmem:[%s2322 + $0x10] sm:$0xff]
    %v2326 = vld [vmem:[%s2322 + $0x18] sm:$0xff]
    %v2327 = vld [vmem:[%s2322 + $0x20] sm:$0xff]
    %v2328 = vld [vmem:[%s2322 + $0x28] sm:$0xff]
    %v2329 = vld [vmem:[%s2322 + $0x30] sm:$0xff]
    %v2330 = vld [vmem:[%s2322 + $0x38] sm:$0xff]
    %v2331 = vld [vmem:[%s2322 + $0x40] sm:$0xff]
    %v2332 = vld [vmem:[%s2322 + $0x48] sm:$0xff]
    %v2333 = vld [vmem:[%s2322 + $0x50] sm:$0xff]
    %v2334 = vld [vmem:[%s2322 + $0x58] sm:$0xff]
    %v2335 = vld [vmem:[%s2322 + $0x60] sm:$0xff]
    %v2336 = vld [vmem:[%s2322 + $0x68] sm:$0xff]
    %v2338 = vsel %vm129, %v2298, 0
    %v2341 = vsel %vm133, %v2325, 0
    %2343 = vmatprep.subr.mxu0 0.0
    %2344 = vmatpush1.msra.mxu0 %v2341
    %2345 = vmatprep.subr.mxu0 0.0
    %2346 = vmatpush1.msra.mxu0 0.0
    %2347 = vmatprep.subr.mxu0 0.0
    %2348 = vmatpush1.msra.mxu0 0.0
    %2349 = vmatprep.subr.mxu0 0.0
    %2350 = vmatpush1.msra.mxu0 0.0
    %2351 = vmatprep.subr.mxu0 0.0
    %2352 = vmatpush1.msra.mxu0 0.0
    %2353 = vmatprep.subr.mxu0 0.0
    %2354 = vmatpush1.msra.mxu0 0.0
    %2355 = vmatprep.subr.mxu0 0.0
    %2356 = vmatpush1.msra.mxu0 0.0
    %2357 = vmatprep.subr.mxu0 0.0
    %2358 = vmatpush1.msra.mxu0 0.0
    %2359 = vmatprep.subr.mxu0 0.0
    %2360 = vmatpush1.msra.mxu0 0.0
    %2361 = vmatprep.subr.mxu0 0.0
    %2362 = vmatpush1.msra.mxu0 0.0
    %2363 = vmatprep.subr.mxu0 0.0
    %2364 = vmatpush1.msra.mxu0 0.0
    %2365 = vmatprep.subr.mxu0 0.0
    %2366 = vmatpush1.msra.mxu0 0.0
    %2367 = vmatprep.subr.mxu0 0.0
    %2368 = vmatpush1.msra.mxu0 0.0
    %2369 = vmatprep.subr.mxu0 0.0
    %2370 = vmatpush1.msra.mxu0 0.0
    %2371 = vmatprep.subr.mxu0 0.0
    %2372 = vmatpush1.msra.mxu0 0.0
    %2373 = vmatprep.subr.mxu0 0.0
    %2374 = vmatpush1.msra.mxu0 0.0
    %2375 = vmatprep.subr.mxu0 0.0
    %2376 = vmatpush1.msra.mxu0 0.0
    %2377 = vmatprep.subr.mxu0 0.0
    %2378 = vmatpush1.msra.mxu0 0.0
    %2379 = vmatprep.subr.mxu0 0.0
    %2380 = vmatpush1.msra.mxu0 0.0
    %2381 = vmatprep.subr.mxu0 0.0
    %2382 = vmatpush1.msra.mxu0 0.0
    %2383 = vmatprep.subr.mxu0 0.0
    %2384 = vmatpush1.msra.mxu0 0.0
    %2385 = vmatprep.subr.mxu0 0.0
    %2386 = vmatpush1.msra.mxu0 0.0
    %2387 = vmatprep.subr.mxu0 0.0
    %2388 = vmatpush1.msra.mxu0 0.0
    %2389 = vmatprep.subr.mxu0 0.0
    %2390 = vmatpush1.msra.mxu0 0.0
    %2391 = vmatprep.subr.mxu0 0.0
    %2392 = vmatpush1.msra.mxu0 0.0
    %2393 = vmatprep.subr.mxu0 0.0
    %2394 = vmatpush1.msra.mxu0 0.0
    %2395 = vmatprep.subr.mxu0 0.0
    %2396 = vmatpush1.msra.mxu0 0.0
    %2397 = vmatprep.subr.mxu0 0.0
    %2398 = vmatpush1.msra.mxu0 0.0
    %2399 = vmatprep.subr.mxu0 0.0
    %2400 = vmatpush1.msra.mxu0 0.0
    %2401 = vmatprep.subr.mxu0 0.0
    %2402 = vmatpush1.msra.mxu0 0.0
    %2403 = vmatprep.subr.mxu0 0.0
    %2404 = vmatpush1.msra.mxu0 0.0
    %2405 = vmatprep.subr.mxu0 0.0
    %2406 = vmatpush1.msra.mxu0 0.0
    %2407 = vmatprep.mubr.f32.mxu0 0.0
    %2408 = vmatmul.mubr.f32.gmra.mrb[0].mxu0 %v2338
    %v2409 = vpop.f32.mrb[0].mxu0
    %v2410 = vadd.f32 0.0, %v2409
    %v2411 = vpop.f32.mrb[0].mxu0
    %2412 = vdwg.mxu0
    %v2414 = vsel %vm129, %v2258, 0
    %v2417 = vsel %vm133, %v2323, 0
    %2419 = vmatprep.subr.mxu0 0.0
    %2420 = vmatpush1.msra.mxu0 %v2417
    %2421 = vmatprep.subr.mxu0 0.0
    %2422 = vmatpush1.msra.mxu0 0.0
    %2423 = vmatprep.subr.mxu0 0.0
    %2424 = vmatpush1.msra.mxu0 0.0
    %2425 = vmatprep.subr.mxu0 0.0
    %2426 = vmatpush1.msra.mxu0 0.0
    %2427 = vmatprep.subr.mxu0 0.0
    %2428 = vmatpush1.msra.mxu0 0.0
    %2429 = vmatprep.subr.mxu0 0.0
    %2430 = vmatpush1.msra.mxu0 0.0
    %2431 = vmatprep.subr.mxu0 0.0
    %2432 = vmatpush1.msra.mxu0 0.0
    %2433 = vmatprep.subr.mxu0 0.0
    %2434 = vmatpush1.msra.mxu0 0.0
    %2435 = vmatprep.subr.mxu0 0.0
    %2436 = vmatpush1.msra.mxu0 0.0
    %2437 = vmatprep.subr.mxu0 0.0
    %2438 = vmatpush1.msra.mxu0 0.0
    %2439 = vmatprep.subr.mxu0 0.0
    %2440 = vmatpush1.msra.mxu0 0.0
    %2441 = vmatprep.subr.mxu0 0.0
    %2442 = vmatpush1.msra.mxu0 0.0
    %2443 = vmatprep.subr.mxu0 0.0
    %2444 = vmatpush1.msra.mxu0 0.0
    %2445 = vmatprep.subr.mxu0 0.0
    %2446 = vmatpush1.msra.mxu0 0.0
    %2447 = vmatprep.subr.mxu0 0.0
    %2448 = vmatpush1.msra.mxu0 0.0
    %2449 = vmatprep.subr.mxu0 0.0
    %2450 = vmatpush1.msra.mxu0 0.0
    %2451 = vmatprep.subr.mxu0 0.0
    %2452 = vmatpush1.msra.mxu0 0.0
    %2453 = vmatprep.subr.mxu0 0.0
    %2454 = vmatpush1.msra.mxu0 0.0
    %2455 = vmatprep.subr.mxu0 0.0
    %2456 = vmatpush1.msra.mxu0 0.0
    %2457 = vmatprep.subr.mxu0 0.0
    %2458 = vmatpush1.msra.mxu0 0.0
    %2459 = vmatprep.subr.mxu0 0.0
    %2460 = vmatpush1.msra.mxu0 0.0
    %2461 = vmatprep.subr.mxu0 0.0
    %2462 = vmatpush1.msra.mxu0 0.0
    %2463 = vmatprep.subr.mxu0 0.0
    %2464 = vmatpush1.msra.mxu0 0.0
    %2465 = vmatprep.subr.mxu0 0.0
    %2466 = vmatpush1.msra.mxu0 0.0
    %2467 = vmatprep.subr.mxu0 0.0
    %2468 = vmatpush1.msra.mxu0 0.0
    %2469 = vmatprep.subr.mxu0 0.0
    %2470 = vmatpush1.msra.mxu0 0.0
    %2471 = vmatprep.subr.mxu0 0.0
    %2472 = vmatpush1.msra.mxu0 0.0
    %2473 = vmatprep.subr.mxu0 0.0
    %2474 = vmatpush1.msra.mxu0 0.0
    %2475 = vmatprep.subr.mxu0 0.0
    %2476 = vmatpush1.msra.mxu0 0.0
    %2477 = vmatprep.subr.mxu0 0.0
    %2478 = vmatpush1.msra.mxu0 0.0
    %2479 = vmatprep.subr.mxu0 0.0
    %2480 = vmatpush1.msra.mxu0 0.0
    %2481 = vmatprep.subr.mxu0 0.0
    %2482 = vmatpush1.msra.mxu0 0.0
    %2483 = vmatprep.mubr.f32.mxu0 0.0
    %2484 = vmatmul.mubr.f32.gmra.mrb[0].mxu0 %v2414
    %v2485 = vpop.f32.mrb[0].mxu0
    %v2486 = vadd.f32 %v2410, %v2485
    %v2487 = vpop.f32.mrb[0].mxu0
    %2488 = vdwg.mxu0
    %v2490 = vsel %vm133, %v2326, 0
    %2492 = vmatprep.subr.mxu0 0.0
    %2493 = vmatpush1.msra.mxu0 %v2490
    %2494 = vmatprep.subr.mxu0 0.0
    %2495 = vmatpush1.msra.mxu0 0.0
    %2496 = vmatprep.subr.mxu0 0.0
    %2497 = vmatpush1.msra.mxu0 0.0
    %2498 = vmatprep.subr.mxu0 0.0
    %2499 = vmatpush1.msra.mxu0 0.0
    %2500 = vmatprep.subr.mxu0 0.0
    %2501 = vmatpush1.msra.mxu0 0.0
    %2502 = vmatprep.subr.mxu0 0.0
    %2503 = vmatpush1.msra.mxu0 0.0
    %2504 = vmatprep.subr.mxu0 0.0
    %2505 = vmatpush1.msra.mxu0 0.0
    %2506 = vmatprep.subr.mxu0 0.0
    %2507 = vmatpush1.msra.mxu0 0.0
    %2508 = vmatprep.subr.mxu0 0.0
    %2509 = vmatpush1.msra.mxu0 0.0
    %2510 = vmatprep.subr.mxu0 0.0
    %2511 = vmatpush1.msra.mxu0 0.0
    %2512 = vmatprep.subr.mxu0 0.0
    %2513 = vmatpush1.msra.mxu0 0.0
    %2514 = vmatprep.subr.mxu0 0.0
    %2515 = vmatpush1.msra.mxu0 0.0
    %2516 = vmatprep.subr.mxu0 0.0
    %2517 = vmatpush1.msra.mxu0 0.0
    %2518 = vmatprep.subr.mxu0 0.0
    %2519 = vmatpush1.msra.mxu0 0.0
    %2520 = vmatprep.subr.mxu0 0.0
    %2521 = vmatpush1.msra.mxu0 0.0
    %2522 = vmatprep.subr.mxu0 0.0
    %2523 = vmatpush1.msra.mxu0 0.0
    %2524 = vmatprep.subr.mxu0 0.0
    %2525 = vmatpush1.msra.mxu0 0.0
    %2526 = vmatprep.subr.mxu0 0.0
    %2527 = vmatpush1.msra.mxu0 0.0
    %2528 = vmatprep.subr.mxu0 0.0
    %2529 = vmatpush1.msra.mxu0 0.0
    %2530 = vmatprep.subr.mxu0 0.0
    %2531 = vmatpush1.msra.mxu0 0.0
    %2532 = vmatprep.subr.mxu0 0.0
    %2533 = vmatpush1.msra.mxu0 0.0
    %2534 = vmatprep.subr.mxu0 0.0
    %2535 = vmatpush1.msra.mxu0 0.0
    %2536 = vmatprep.subr.mxu0 0.0
    %2537 = vmatpush1.msra.mxu0 0.0
    %2538 = vmatprep.subr.mxu0 0.0
    %2539 = vmatpush1.msra.mxu0 0.0
    %2540 = vmatprep.subr.mxu0 0.0
    %2541 = vmatpush1.msra.mxu0 0.0
    %2542 = vmatprep.subr.mxu0 0.0
    %2543 = vmatpush1.msra.mxu0 0.0
    %2544 = vmatprep.subr.mxu0 0.0
    %2545 = vmatpush1.msra.mxu0 0.0
    %2546 = vmatprep.subr.mxu0 0.0
    %2547 = vmatpush1.msra.mxu0 0.0
    %2548 = vmatprep.subr.mxu0 0.0
    %2549 = vmatpush1.msra.mxu0 0.0
    %2550 = vmatprep.subr.mxu0 0.0
    %2551 = vmatpush1.msra.mxu0 0.0
    %2552 = vmatprep.subr.mxu0 0.0
    %2553 = vmatpush1.msra.mxu0 0.0
    %2554 = vmatprep.subr.mxu0 0.0
    %2555 = vmatpush1.msra.mxu0 0.0
    %2556 = vmatprep.mubr.f32.mxu0 0.0
    %2557 = vmatmul.mubr.f32.gmra.mrb[0].mxu0 %v2338
    %v2558 = vpop.f32.mrb[0].mxu0
    %v2559 = vadd.f32 0.0, %v2558
    %v2560 = vpop.f32.mrb[0].mxu0
    %2561 = vdwg.mxu0
    %v2563 = vsel %vm133, %v2324, 0
    %2565 = vmatprep.subr.mxu0 0.0
    %2566 = vmatpush1.msra.mxu0 %v2563
    %2567 = vmatprep.subr.mxu0 0.0
    %2568 = vmatpush1.msra.mxu0 0.0
    %2569 = vmatprep.subr.mxu0 0.0
    %2570 = vmatpush1.msra.mxu0 0.0
    %2571 = vmatprep.subr.mxu0 0.0
    %2572 = vmatpush1.msra.mxu0 0.0
    %2573 = vmatprep.subr.mxu0 0.0
    %2574 = vmatpush1.msra.mxu0 0.0
    %2575 = vmatprep.subr.mxu0 0.0
    %2576 = vmatpush1.msra.mxu0 0.0
    %2577 = vmatprep.subr.mxu0 0.0
    %2578 = vmatpush1.msra.mxu0 0.0
    %2579 = vmatprep.subr.mxu0 0.0
    %2580 = vmatpush1.msra.mxu0 0.0
    %2581 = vmatprep.subr.mxu0 0.0
    %2582 = vmatpush1.msra.mxu0 0.0
    %2583 = vmatprep.subr.mxu0 0.0
    %2584 = vmatpush1.msra.mxu0 0.0
    %2585 = vmatprep.subr.mxu0 0.0
    %2586 = vmatpush1.msra.mxu0 0.0
    %2587 = vmatprep.subr.mxu0 0.0
    %2588 = vmatpush1.msra.mxu0 0.0
    %2589 = vmatprep.subr.mxu0 0.0
    %2590 = vmatpush1.msra.mxu0 0.0
    %2591 = vmatprep.subr.mxu0 0.0
    %2592 = vmatpush1.msra.mxu0 0.0
    %2593 = vmatprep.subr.mxu0 0.0
    %2594 = vmatpush1.msra.mxu0 0.0
    %2595 = vmatprep.subr.mxu0 0.0
    %2596 = vmatpush1.msra.mxu0 0.0
    %2597 = vmatprep.subr.mxu0 0.0
    %2598 = vmatpush1.msra.mxu0 0.0
    %2599 = vmatprep.subr.mxu0 0.0
    %2600 = vmatpush1.msra.mxu0 0.0
    %2601 = vmatprep.subr.mxu0 0.0
    %2602 = vmatpush1.msra.mxu0 0.0
    %2603 = vmatprep.subr.mxu0 0.0
    %2604 = vmatpush1.msra.mxu0 0.0
    %2605 = vmatprep.subr.mxu0 0.0
    %2606 = vmatpush1.msra.mxu0 0.0
    %2607 = vmatprep.subr.mxu0 0.0
    %2608 = vmatpush1.msra.mxu0 0.0
    %2609 = vmatprep.subr.mxu0 0.0
    %2610 = vmatpush1.msra.mxu0 0.0
    %2611 = vmatprep.subr.mxu0 0.0
    %2612 = vmatpush1.msra.mxu0 0.0
    %2613 = vmatprep.subr.mxu0 0.0
    %2614 = vmatpush1.msra.mxu0 0.0
    %2615 = vmatprep.subr.mxu0 0.0
    %2616 = vmatpush1.msra.mxu0 0.0
    %2617 = vmatprep.subr.mxu0 0.0
    %2618 = vmatpush1.msra.mxu0 0.0
    %2619 = vmatprep.subr.mxu0 0.0
    %2620 = vmatpush1.msra.mxu0 0.0
    %2621 = vmatprep.subr.mxu0 0.0
    %2622 = vmatpush1.msra.mxu0 0.0
    %2623 = vmatprep.subr.mxu0 0.0
    %2624 = vmatpush1.msra.mxu0 0.0
    %2625 = vmatprep.subr.mxu0 0.0
    %2626 = vmatpush1.msra.mxu0 0.0
    %2627 = vmatprep.subr.mxu0 0.0
    %2628 = vmatpush1.msra.mxu0 0.0
    %2629 = vmatprep.mubr.f32.mxu0 0.0
    %2630 = vmatmul.mubr.f32.gmra.mrb[0].mxu0 %v2414
    %v2631 = vpop.f32.mrb[0].mxu0
    %v2632 = vadd.f32 %v2559, %v2631
    %v2633 = vpop.f32.mrb[0].mxu0
    %2634 = vdwg.mxu0
    %v2635 = vlaneseq
    %v2636 = vshrl.u32 %v2635, 7
    %v2637 = vsub.s32 0, %v2636
    %v2638 = vrot.slane %v2316, %v2637
    %v2640 = vsel %vm129, %v2632, 0
    %v2643 = vsel %vm133, %v2315, 0
    %2645 = vmatprep.subr.mxu0 0.0
    %2646 = vmatpush1.msra.mxu0 %v2643
    %2647 = vmatprep.subr.mxu0 0.0
    %2648 = vmatpush1.msra.mxu0 0.0
    %2649 = vmatprep.subr.mxu0 0.0
    %2650 = vmatpush1.msra.mxu0 0.0
    %2651 = vmatprep.subr.mxu0 0.0
    %2652 = vmatpush1.msra.mxu0 0.0
    %2653 = vmatprep.subr.mxu0 0.0
    %2654 = vmatpush1.msra.mxu0 0.0
    %2655 = vmatprep.subr.mxu0 0.0
    %2656 = vmatpush1.msra.mxu0 0.0
    %2657 = vmatprep.subr.mxu0 0.0
    %2658 = vmatpush1.msra.mxu0 0.0
    %2659 = vmatprep.subr.mxu0 0.0
    %2660 = vmatpush1.msra.mxu0 0.0
    %2661 = vmatprep.subr.mxu0 0.0
    %2662 = vmatpush1.msra.mxu0 0.0
    %2663 = vmatprep.subr.mxu0 0.0
    %2664 = vmatpush1.msra.mxu0 0.0
    %2665 = vmatprep.subr.mxu0 0.0
    %2666 = vmatpush1.msra.mxu0 0.0
    %2667 = vmatprep.subr.mxu0 0.0
    %2668 = vmatpush1.msra.mxu0 0.0
    %2669 = vmatprep.subr.mxu0 0.0
    %2670 = vmatpush1.msra.mxu0 0.0
    %2671 = vmatprep.subr.mxu0 0.0
    %2672 = vmatpush1.msra.mxu0 0.0
    %2673 = vmatprep.subr.mxu0 0.0
    %2674 = vmatpush1.msra.mxu0 0.0
    %2675 = vmatprep.subr.mxu0 0.0
    %2676 = vmatpush1.msra.mxu0 0.0
    %2677 = vmatprep.subr.mxu0 0.0
    %2678 = vmatpush1.msra.mxu0 0.0
    %2679 = vmatprep.subr.mxu0 0.0
    %2680 = vmatpush1.msra.mxu0 0.0
    %2681 = vmatprep.subr.mxu0 0.0
    %2682 = vmatpush1.msra.mxu0 0.0
    %2683 = vmatprep.subr.mxu0 0.0
    %2684 = vmatpush1.msra.mxu0 0.0
    %2685 = vmatprep.subr.mxu0 0.0
    %2686 = vmatpush1.msra.mxu0 0.0
    %2687 = vmatprep.subr.mxu0 0.0
    %2688 = vmatpush1.msra.mxu0 0.0
    %2689 = vmatprep.subr.mxu0 0.0
    %2690 = vmatpush1.msra.mxu0 0.0
    %2691 = vmatprep.subr.mxu0 0.0
    %2692 = vmatpush1.msra.mxu0 0.0
    %2693 = vmatprep.subr.mxu0 0.0
    %2694 = vmatpush1.msra.mxu0 0.0
    %2695 = vmatprep.subr.mxu0 0.0
    %2696 = vmatpush1.msra.mxu0 0.0
    %2697 = vmatprep.subr.mxu0 0.0
    %2698 = vmatpush1.msra.mxu0 0.0
    %2699 = vmatprep.subr.mxu0 0.0
    %2700 = vmatpush1.msra.mxu0 0.0
    %2701 = vmatprep.subr.mxu0 0.0
    %2702 = vmatpush1.msra.mxu0 0.0
    %2703 = vmatprep.subr.mxu0 0.0
    %2704 = vmatpush1.msra.mxu0 0.0
    %2705 = vmatprep.subr.mxu0 0.0
    %2706 = vmatpush1.msra.mxu0 0.0
    %2707 = vmatprep.subr.mxu0 0.0
    %2708 = vmatpush1.msra.mxu0 0.0
    %2709 = vmatprep.mubr.f32.mxu0 0.0
    %2710 = vmatmul.mubr.f32.gmra.mrb[0].mxu0 %v2640
    %v2711 = vpop.f32.mrb[0].mxu0
    %v2712 = vadd.f32 %v2638, %v2711
    %v2713 = vpop.f32.mrb[0].mxu0
    %2714 = vdwg.mxu0
    %vm2715 = vcmp.gt.f32.partialorder %v2712, 0.0
    %v2716 = vmul.f32 %v2712, 0.01
    %v2717 = vsel %vm2715, %v2712, %v2716
    %v2718 = vlaneseq
    %v2719 = vshrl.u32 %v2718, 7
    %v2720 = vsub.s32 0, %v2719
    %v2721 = vrot.slane %v2321, %v2720
    %v2723 = vsel %vm516, %v2717, 0
    %2725 = vmatprep.subr.mxu0 0.0
    %2726 = vmatpush1.msra.mxu0 %v2317
    %2727 = vmatprep.subr.mxu0 0.0
    %2728 = vmatpush1.msra.mxu0 %v2318
    %2729 = vmatprep.subr.mxu0 0.0
    %2730 = vmatpush1.msra.mxu0 %v2319
    %2731 = vmatprep.subr.mxu0 0.0
    %2732 = vmatpush1.msra.mxu0 %v2320
    %2733 = vmatprep.subr.mxu0 0.0
    %2734 = vmatpush1.msra.mxu0 0.0
    %2735 = vmatprep.subr.mxu0 0.0
    %2736 = vmatpush1.msra.mxu0 0.0
    %2737 = vmatprep.subr.mxu0 0.0
    %2738 = vmatpush1.msra.mxu0 0.0
    %2739 = vmatprep.subr.mxu0 0.0
    %2740 = vmatpush1.msra.mxu0 0.0
    %2741 = vmatprep.subr.mxu0 0.0
    %2742 = vmatpush1.msra.mxu0 0.0
    %2743 = vmatprep.subr.mxu0 0.0
    %2744 = vmatpush1.msra.mxu0 0.0
    %2745 = vmatprep.subr.mxu0 0.0
    %2746 = vmatpush1.msra.mxu0 0.0
    %2747 = vmatprep.subr.mxu0 0.0
    %2748 = vmatpush1.msra.mxu0 0.0
    %2749 = vmatprep.subr.mxu0 0.0
    %2750 = vmatpush1.msra.mxu0 0.0
    %2751 = vmatprep.subr.mxu0 0.0
    %2752 = vmatpush1.msra.mxu0 0.0
    %2753 = vmatprep.subr.mxu0 0.0
    %2754 = vmatpush1.msra.mxu0 0.0
    %2755 = vmatprep.subr.mxu0 0.0
    %2756 = vmatpush1.msra.mxu0 0.0
    %2757 = vmatprep.subr.mxu0 0.0
    %2758 = vmatpush1.msra.mxu0 0.0
    %2759 = vmatprep.subr.mxu0 0.0
    %2760 = vmatpush1.msra.mxu0 0.0
    %2761 = vmatprep.subr.mxu0 0.0
    %2762 = vmatpush1.msra.mxu0 0.0
    %2763 = vmatprep.subr.mxu0 0.0
    %2764 = vmatpush1.msra.mxu0 0.0
    %2765 = vmatprep.subr.mxu0 0.0
    %2766 = vmatpush1.msra.mxu0 0.0
    %2767 = vmatprep.subr.mxu0 0.0
    %2768 = vmatpush1.msra.mxu0 0.0
    %2769 = vmatprep.subr.mxu0 0.0
    %2770 = vmatpush1.msra.mxu0 0.0
    %2771 = vmatprep.subr.mxu0 0.0
    %2772 = vmatpush1.msra.mxu0 0.0
    %2773 = vmatprep.subr.mxu0 0.0
    %2774 = vmatpush1.msra.mxu0 0.0
    %2775 = vmatprep.subr.mxu0 0.0
    %2776 = vmatpush1.msra.mxu0 0.0
    %2777 = vmatprep.subr.mxu0 0.0
    %2778 = vmatpush1.msra.mxu0 0.0
    %2779 = vmatprep.subr.mxu0 0.0
    %2780 = vmatpush1.msra.mxu0 0.0
    %2781 = vmatprep.subr.mxu0 0.0
    %2782 = vmatpush1.msra.mxu0 0.0
    %2783 = vmatprep.subr.mxu0 0.0
    %2784 = vmatpush1.msra.mxu0 0.0
    %2785 = vmatprep.subr.mxu0 0.0
    %2786 = vmatpush1.msra.mxu0 0.0
    %2787 = vmatprep.subr.mxu0 0.0
    %2788 = vmatpush1.msra.mxu0 0.0
    %2789 = vmatprep.mubr.f32.mxu0 0.0
    %2790 = vmatmul.mubr.f32.gmra.mrb[0].mxu0 %v2723
    %v2791 = vpop.f32.mrb[0].mxu0
    %v2792 = vadd.f32 %v2721, %v2791
    %v2793 = vpop.f32.mrb[0].mxu0
    %2794 = vdwg.mxu0
    %vm2795 = vcmp.gt.f32.partialorder %v2792, 0.0
    %v2796 = vmul.f32 %v2792, 0.01
    %v2797 = vsel %vm2795, %v2792, %v2796
    %v2798 = vlaneseq
    %v2799 = vshrl.u32 %v2798, 7
    %v2800 = vsub.s32 0, %v2799
    %v2801 = vrot.slane %v2335, %v2800
    %v2803 = vsel %vm516, %v2797, 0
    %2805 = vmatprep.subr.mxu0 0.0
    %2806 = vmatpush1.msra.mxu0 %v2327
    %2807 = vmatprep.subr.mxu0 0.0
    %2808 = vmatpush1.msra.mxu0 %v2328
    %2809 = vmatprep.subr.mxu0 0.0
    %2810 = vmatpush1.msra.mxu0 %v2329
    %2811 = vmatprep.subr.mxu0 0.0
    %2812 = vmatpush1.msra.mxu0 %v2330
    %2813 = vmatprep.subr.mxu0 0.0
    %2814 = vmatpush1.msra.mxu0 0.0
    %2815 = vmatprep.subr.mxu0 0.0
    %2816 = vmatpush1.msra.mxu0 0.0
    %2817 = vmatprep.subr.mxu0 0.0
    %2818 = vmatpush1.msra.mxu0 0.0
    %2819 = vmatprep.subr.mxu0 0.0
    %2820 = vmatpush1.msra.mxu0 0.0
    %2821 = vmatprep.subr.mxu0 0.0
    %2822 = vmatpush1.msra.mxu0 0.0
    %2823 = vmatprep.subr.mxu0 0.0
    %2824 = vmatpush1.msra.mxu0 0.0
    %2825 = vmatprep.subr.mxu0 0.0
    %2826 = vmatpush1.msra.mxu0 0.0
    %2827 = vmatprep.subr.mxu0 0.0
    %2828 = vmatpush1.msra.mxu0 0.0
    %2829 = vmatprep.subr.mxu0 0.0
    %2830 = vmatpush1.msra.mxu0 0.0
    %2831 = vmatprep.subr.mxu0 0.0
    %2832 = vmatpush1.msra.mxu0 0.0
    %2833 = vmatprep.subr.mxu0 0.0
    %2834 = vmatpush1.msra.mxu0 0.0
    %2835 = vmatprep.subr.mxu0 0.0
    %2836 = vmatpush1.msra.mxu0 0.0
    %2837 = vmatprep.subr.mxu0 0.0
    %2838 = vmatpush1.msra.mxu0 0.0
    %2839 = vmatprep.subr.mxu0 0.0
    %2840 = vmatpush1.msra.mxu0 0.0
    %2841 = vmatprep.subr.mxu0 0.0
    %2842 = vmatpush1.msra.mxu0 0.0
    %2843 = vmatprep.subr.mxu0 0.0
    %2844 = vmatpush1.msra.mxu0 0.0
    %2845 = vmatprep.subr.mxu0 0.0
    %2846 = vmatpush1.msra.mxu0 0.0
    %2847 = vmatprep.subr.mxu0 0.0
    %2848 = vmatpush1.msra.mxu0 0.0
    %2849 = vmatprep.subr.mxu0 0.0
    %2850 = vmatpush1.msra.mxu0 0.0
    %2851 = vmatprep.subr.mxu0 0.0
    %2852 = vmatpush1.msra.mxu0 0.0
    %2853 = vmatprep.subr.mxu0 0.0
    %2854 = vmatpush1.msra.mxu0 0.0
    %2855 = vmatprep.subr.mxu0 0.0
    %2856 = vmatpush1.msra.mxu0 0.0
    %2857 = vmatprep.subr.mxu0 0.0
    %2858 = vmatpush1.msra.mxu0 0.0
    %2859 = vmatprep.subr.mxu0 0.0
    %2860 = vmatpush1.msra.mxu0 0.0
    %2861 = vmatprep.subr.mxu0 0.0
    %2862 = vmatpush1.msra.mxu0 0.0
    %2863 = vmatprep.subr.mxu0 0.0
    %2864 = vmatpush1.msra.mxu0 0.0
    %2865 = vmatprep.subr.mxu0 0.0
    %2866 = vmatpush1.msra.mxu0 0.0
    %2867 = vmatprep.subr.mxu0 0.0
    %2868 = vmatpush1.msra.mxu0 0.0
    %2869 = vmatprep.mubr.f32.mxu0 0.0
    %2870 = vmatmul.mubr.f32.gmra.mrb[0].mxu0 %v2803
    %v2871 = vpop.f32.mrb[0].mxu0
    %v2872 = vadd.f32 %v2801, %v2871
    %v2873 = vpop.f32.mrb[0].mxu0
    %2874 = vdwg.mxu0
    %v2875 = vlaneseq
    %v2876 = vshrl.u32 %v2875, 7
    %v2877 = vsub.s32 0, %v2876
    %v2878 = vrot.slane %v2336, %v2877
    %2879 = vmatprep.subr.mxu0 0.0
    %2880 = vmatpush1.msra.mxu0 %v2331
    %2881 = vmatprep.subr.mxu0 0.0
    %2882 = vmatpush1.msra.mxu0 %v2332
    %2883 = vmatprep.subr.mxu0 0.0
    %2884 = vmatpush1.msra.mxu0 %v2333
    %2885 = vmatprep.subr.mxu0 0.0
    %2886 = vmatpush1.msra.mxu0 %v2334
    %2887 = vmatprep.subr.mxu0 0.0
    %2888 = vmatpush1.msra.mxu0 0.0
    %2889 = vmatprep.subr.mxu0 0.0
    %2890 = vmatpush1.msra.mxu0 0.0
    %2891 = vmatprep.subr.mxu0 0.0
    %2892 = vmatpush1.msra.mxu0 0.0
    %2893 = vmatprep.subr.mxu0 0.0
    %2894 = vmatpush1.msra.mxu0 0.0
    %2895 = vmatprep.subr.mxu0 0.0
    %2896 = vmatpush1.msra.mxu0 0.0
    %2897 = vmatprep.subr.mxu0 0.0
    %2898 = vmatpush1.msra.mxu0 0.0
    %2899 = vmatprep.subr.mxu0 0.0
    %2900 = vmatpush1.msra.mxu0 0.0
    %2901 = vmatprep.subr.mxu0 0.0
    %2902 = vmatpush1.msra.mxu0 0.0
    %2903 = vmatprep.subr.mxu0 0.0
    %2904 = vmatpush1.msra.mxu0 0.0
    %2905 = vmatprep.subr.mxu0 0.0
    %2906 = vmatpush1.msra.mxu0 0.0
    %2907 = vmatprep.subr.mxu0 0.0
    %2908 = vmatpush1.msra.mxu0 0.0
    %2909 = vmatprep.subr.mxu0 0.0
    %2910 = vmatpush1.msra.mxu0 0.0
    %2911 = vmatprep.subr.mxu0 0.0
    %2912 = vmatpush1.msra.mxu0 0.0
    %2913 = vmatprep.subr.mxu0 0.0
    %2914 = vmatpush1.msra.mxu0 0.0
    %2915 = vmatprep.subr.mxu0 0.0
    %2916 = vmatpush1.msra.mxu0 0.0
    %2917 = vmatprep.subr.mxu0 0.0
    %2918 = vmatpush1.msra.mxu0 0.0
    %2919 = vmatprep.subr.mxu0 0.0
    %2920 = vmatpush1.msra.mxu0 0.0
    %2921 = vmatprep.subr.mxu0 0.0
    %2922 = vmatpush1.msra.mxu0 0.0
    %2923 = vmatprep.subr.mxu0 0.0
    %2924 = vmatpush1.msra.mxu0 0.0
    %2925 = vmatprep.subr.mxu0 0.0
    %2926 = vmatpush1.msra.mxu0 0.0
    %2927 = vmatprep.subr.mxu0 0.0
    %2928 = vmatpush1.msra.mxu0 0.0
    %2929 = vmatprep.subr.mxu0 0.0
    %2930 = vmatpush1.msra.mxu0 0.0
    %2931 = vmatprep.subr.mxu0 0.0
    %2932 = vmatpush1.msra.mxu0 0.0
    %2933 = vmatprep.subr.mxu0 0.0
    %2934 = vmatpush1.msra.mxu0 0.0
    %2935 = vmatprep.subr.mxu0 0.0
    %2936 = vmatpush1.msra.mxu0 0.0
    %2937 = vmatprep.subr.mxu0 0.0
    %2938 = vmatpush1.msra.mxu0 0.0
    %2939 = vmatprep.subr.mxu0 0.0
    %2940 = vmatpush1.msra.mxu0 0.0
    %2941 = vmatprep.subr.mxu0 0.0
    %2942 = vmatpush1.msra.mxu0 0.0
    %2943 = vmatprep.mubr.f32.mxu0 0.0
    %2944 = vmatmul.mubr.f32.gmra.mrb[0].mxu0 %v2803
    %v2945 = vpop.f32.mrb[0].mxu0
    %v2946 = vadd.f32 %v2878, %v2945
    %v2947 = vpop.f32.mrb[0].mxu0
    %2948 = vdwg.mxu0
    %v2949 = vadd.f32 %v2872, 2.0
    %v2950 = vmin.f32 %v2949, 0.0
    %v2951 = vand.u32 2147483647, %v2949
    %v2952 = vsub.f32 0.0, %v2951
    %v2953 = vmul.f32 %v2952, 1.442695
    %v2954 = vpow.pop %v2953
    %v2955 = vadd.f32 %v2954, 1.0
    %v2956 = vlog2.pop %v2955
    %v2957 = vmul.f32 %v2956, 0.6931472
    %v2958 = vsub.f32 %v2950, %v2957
    %v2959 = vmul.f32 %v2958, 1.442695
    %v2960 = vpow.pop %v2959
    %v2961 = vadd.f32 %v2486, %v2946
    %v2962 = vmul.f32 %v2961, %v2960
    %v2963 = vsel %vm24, %v2958, 0.0
    %2964 = vadd.xlane.f32.xlu0 %v2963
    %v2965 = vpop.xlane.xlu0 %2964
    %v2966 = vadd.f32 %v2231, %v2965
    %v2967 = vld [vmem:[%s3] sm:$0x1]
    %v2968 = vld [vmem:[%s3 + $0x1] sm:$0x1]
    %v2969 = vld [vmem:[%s3 + $0x2] sm:$0x1]
    %v2970 = vld [vmem:[%s3 + $0x3] sm:$0x1]
    %v2971 = vsub.f32 -0.9189385, %v2969
    %v2972 = vlaneseq
    %v2973 = vshrl.u32 %v2972, 7
    %v2974 = vsub.s32 0, %v2973
    %v2975 = vrot.slane %v2967, %v2974
    %v2976 = vsub.f32 %v2962, %v2975
    %v2977 = vmul.f32 %v2976, %v2976
    %v2978 = vmul.f32 %v2977, 0.5
    %v2979 = vmul.f32 %v2969, -2.0
    %v2980 = vmul.f32 %v2979, 1.442695
    %v2981 = vpow.pop %v2980
    %v2982 = vlaneseq
    %v2983 = vshrl.u32 %v2982, 7
    %v2984 = vsub.s32 0, %v2983
    %v2985 = vrot.slane %v2981, %v2984
    %v2986 = vmul.f32 %v2978, %v2985
    %v2987 = vlaneseq
    %v2988 = vshrl.u32 %v2987, 7
    %v2989 = vsub.s32 0, %v2988
    %v2990 = vrot.slane %v2971, %v2989
    %v2991 = vsub.f32 %v2990, %v2986
    %v2992 = vsub.f32 -0.9189385, %v2970
    %v2993 = vlaneseq
    %v2994 = vshrl.u32 %v2993, 7
    %v2995 = vsub.s32 0, %v2994
    %v2996 = vrot.slane %v2968, %v2995
    %v2997 = vsub.f32 %v2632, %v2996
    %v2998 = vmul.f32 %v2997, %v2997
    %v2999 = vmul.f32 %v2998, 0.5
    %v3000 = vmul.f32 %v2970, -2.0
    %v3001 = vmul.f32 %v3000, 1.442695
    %v3002 = vpow.pop %v3001
    %v3003 = vlaneseq
    %v3004 = vshrl.u32 %v3003, 7
    %v3005 = vsub.s32 0, %v3004
    %v3006 = vrot.slane %v3002, %v3005
    %v3007 = vmul.f32 %v2999, %v3006
    %v3008 = vlaneseq
    %v3009 = vshrl.u32 %v3008, 7
    %v3010 = vsub.s32 0, %v3009
    %v3011 = vrot.slane %v2992, %v3010
    %v3012 = vsub.f32 %v3011, %v3007
    %v3013 = vsel %vm24, %v2991, 0.0
    %3014 = vadd.xlane.f32.xlu0 %v3013
    %v3015 = vpop.xlane.xlu0 %3014
    %v3016 = vsel %vm24, %v3012, 0.0
    %3017 = vadd.xlane.f32.xlu0 %v3016
    %v3018 = vpop.xlane.xlu0 %3017
    %v3019 = vadd.f32 %v3015, %v3018
    %3020 = vst.msk [vmem:[#allocation2] sm:$0x3] %vm24, %v2962
    %s3021 = scalar_lea.vmem [#allocation2], 2
    %3022 = vst.msk [vmem:[%s3021] sm:$0x3] %vm24, %v2632
    %v3023 = vstv %s2313
    %v3024 = vadd.f32 %v2966, %v3023
    %vm3025 = vcmask 7168
    %v3026 = vsel %vm3025, %v3024, %v3019
    %3027 = vst.msk [vmem:[#allocation4] sm:$0x3] %vm24, %v3026
    // Predicated region
    $region18: #{tpu_custom_call.1} parent=1 // pred_check
      _
    $region19: #{tpu_custom_call.1} parent=1 // pred_check_branch
      %3029 = sbr.rel (0) target = $region21
    $region20: #{tpu_custom_call.1} parent=1 // pred_region
      %s3031 = ssub.s32 64, 64
      %3032 = vsyncadd [#allocation3], %s3031
      %s3033 = sshll.u32 [#allocation2], 4
      %s3034 = int_to_ptr.vmem [resolvable:$true] %s3033
      %3039 = dma.vmem_to_hbm [thread:$0]  %s3034, 64, %s4, [#allocation3], 32, 32, 2
    $region21: #{tpu_custom_call.1} parent=1 // pred_fallthru
      _
    // Predicated region
    $region22: #{tpu_custom_call.1} parent=1 // pred_check
      _
    $region23: #{tpu_custom_call.1} parent=1 // pred_check_branch
      %3041 = sbr.rel (0) target = $region25
    $region24: #{tpu_custom_call.1} parent=1 // pred_region
      %s3043 = ssub.s32 32, 32
      %3044 = vsyncadd [#allocation5], %s3043
      %s3046 = sshll.u32 [#allocation4], 4
      %s3047 = int_to_ptr.vmem [resolvable:$true] %s3046
      %3049 = dma.vmem_to_hbm [thread:$0]  %s3047, 32, %s5, [#allocation5]
    $region25: #{tpu_custom_call.1} parent=1 // pred_fallthru
      _
    // Predicated region
    $region26: #{tpu_custom_call.1} parent=1 // pred_check
      _
    $region27: #{tpu_custom_call.1} parent=1 // pred_check_branch
      %3051 = sbr.rel (0) target = $region29
    $region28: #{tpu_custom_call.1} parent=1 // pred_region
      %3052 = dma.done [#allocation3], 64
    $region29: #{tpu_custom_call.1} parent=1 // pred_fallthru
      _
    // Predicated region
    $region30: #{tpu_custom_call.1} parent=1 // pred_check
      _
    $region31: #{tpu_custom_call.1} parent=1 // pred_check_branch
      %3054 = sbr.rel (0) target = $region33
    $region32: #{tpu_custom_call.1} parent=1 // pred_region
      %3055 = dma.done [#allocation5], 32
    $region33: #{tpu_custom_call.1} parent=1 // pred_fallthru
      _
    %3056 = vsyncpa [#allocation3], 1
    %3057 = vsyncpa [#allocation5], 1

</llo_original>
